<compile_context>
chip_gen: v5e
topology: v5e:2x2
jax: 0.10.0
libtpu: 0.0.40
codegen_flags: <defaults>
</compile_context>

<pallas_src>
import math

import jax
import jax.numpy as jnp
from jax.experimental import pallas as pl
from jax.experimental.pallas import tpu as pltpu


# ---------------------------------------------------------------------------
# Kernel: fused (1x1 conv + BN + ReLU) x 3 on a (C0, tn) channels-major tile
# ---------------------------------------------------------------------------
def _mlp_kernel(x_ref, w1_ref, b1_ref, w2_ref, b2_ref, w3_ref, b3_ref, o_ref):
    # x_ref: (C0, tn) f32, w*: (C_out, C_in) bf16, b*: (C_out, 1) f32, o_ref: (32, tn) f32
    x = x_ref[...].astype(jnp.bfloat16)
    h = jnp.dot(w1_ref[...], x, preferred_element_type=jnp.float32)
    h = jnp.maximum(h + b1_ref[...], 0.0).astype(jnp.bfloat16)
    h = jnp.dot(w2_ref[...], h, preferred_element_type=jnp.float32)
    h = jnp.maximum(h + b2_ref[...], 0.0).astype(jnp.bfloat16)
    h = jnp.dot(w3_ref[...], h, preferred_element_type=jnp.float32)
    h = jnp.maximum(h + b3_ref[...], 0.0)
    o_ref[...] = h.astype(o_ref.dtype)


# ---------------------------------------------------------------------------
# Wrapper
# ---------------------------------------------------------------------------
def _round_up(x, m):
    return ((x + m - 1) // m) * m


def _fold_bn(conv_w, conv_b, gamma, beta, run_mean, run_var, eps=1e-5):
    """Fold eval-mode BatchNorm1d into a kernel-size-1 Conv1d.

    conv_w: (C_out, C_in).  Returns W (C_out, C_in) bf16 and b (C_out, 1) f32.
    """
    scale = gamma / jnp.sqrt(run_var + eps)                       # (C_out,)
    w_f = (conv_w * scale[:, None]).astype(jnp.bfloat16)          # (C_out, C_in) bf16
    b_f = (conv_b * scale + (beta - run_mean * scale)).astype(jnp.float32)
    return w_f, b_f.reshape(-1, 1)


def mlp1024_32_forward(params, x, *, tn=512):
    """x: (B, 1024, N) float32 -> (B, 32, N). Mirrors MLP1024_32.forward (eval-mode BN)."""
    B, C0, N = x.shape

    w1, b1 = _fold_bn(params["w2"], params["b2"], params["g2"], params["be2"],
                      params["rm2"], params["rv2"])
    w2, b2 = _fold_bn(params["w3"], params["b3"], params["g3"], params["be3"],
                      params["rm3"], params["rv3"])
    w3, b3 = _fold_bn(params["w4"], params["b4"], params["g4"], params["be4"],
                      params["rm4"], params["rv4"])
    C1, C2, C3 = w1.shape[0], w2.shape[0], w3.shape[0]

    # Lane (points) tile: multiple of 128, default 512; pad N up to a multiple of tn.
    tn = max(128, min(_round_up(tn, 128), _round_up(N, 128)))
    N_pad = _round_up(N, tn)
    if N_pad != N:
        x = jnp.pad(x, ((0, 0), (0, 0), (0, N_pad - N)))

    grid = (B, N_pad // tn)

    flops = 2 * B * N_pad * (C0 * C1 + C1 * C2 + C2 * C3)
    bytes_accessed = (B * C0 * N_pad * 4 + B * C3 * N_pad * 4
                      + 2 * (C0 * C1 + C1 * C2 + C2 * C3)
                      + 4 * (C1 + C2 + C3))

    out = pl.pallas_call(
        _mlp_kernel,
        out_shape=jax.ShapeDtypeStruct((B, C3, N_pad), jnp.float32),
        grid=grid,
        in_specs=[
            pl.BlockSpec((None, C0, tn), lambda b, j: (b, 0, j)),  # x tile (channels-major)
            pl.BlockSpec((C1, C0), lambda b, j: (0, 0)),           # folded W1 (bf16)
            pl.BlockSpec((C1, 1), lambda b, j: (0, 0)),            # folded b1
            pl.BlockSpec((C2, C1), lambda b, j: (0, 0)),           # folded W2 (bf16)
            pl.BlockSpec((C2, 1), lambda b, j: (0, 0)),            # folded b2
            pl.BlockSpec((C3, C2), lambda b, j: (0, 0)),           # folded W3 (bf16)
            pl.BlockSpec((C3, 1), lambda b, j: (0, 0)),            # folded b3
        ],
        out_specs=pl.BlockSpec((None, C3, tn), lambda b, j: (b, 0, j)),
        compiler_params=pltpu.CompilerParams(
            dimension_semantics=("parallel", "parallel"),
            vmem_limit_bytes=32 * 1024 * 1024,
        ),
        cost_estimate=pl.CostEstimate(
            flops=flops, transcendentals=0, bytes_accessed=bytes_accessed),
    )(x, w1, b1, w2, b2, w3, b3)

    return out[:, :, :N]                                          # (B, 32, N)


# ---------------------------------------------------------------------------
# Pure-JAX f32 reference (conv1d k=1 + eval-mode BN + relu, unfused)
# ---------------------------------------------------------------------------
def reference_forward(params, x, eps=1e-5):
    def layer(h, w, b, g, be, rm, rv):
        y = jnp.einsum("oc,bcn->bon", w, h) + b[None, :, None]
        y = (y - rm[None, :, None]) * (g / jnp.sqrt(rv + eps))[None, :, None] + be[None, :, None]
        return jnp.maximum(y, 0.0)

    h = layer(x, params["w2"], params["b2"], params["g2"], params["be2"], params["rm2"], params["rv2"])
    h = layer(h, params["w3"], params["b3"], params["g3"], params["be3"], params["rm3"], params["rv3"])
    h = layer(h, params["w4"], params["b4"], params["g4"], params["be4"], params["rm4"], params["rv4"])
    return h


# ---------------------------------------------------------------------------
# Main
# ---------------------------------------------------------------------------
if __name__ == "__main__":
    B, N = 2, 16                      # batch=2, 16 points per cloud
    channels = (1024, 512, 256, 32)   # conv2 -> conv3 -> conv4 (as used in forward)

    key0 = jax.random.PRNGKey(0)
    keys = iter(jax.random.split(key0, 32))

    def mk_conv(c_in, c_out):
        bound = 1.0 / math.sqrt(c_in)  # PyTorch Conv1d default init (fan_in * k=1)
        w = jax.random.uniform(next(keys), (c_out, c_in), jnp.float32, -bound, bound)
        b = jax.random.uniform(next(keys), (c_out,), jnp.float32, -bound, bound)
        return w, b

    def mk_bn(c):
        g = jax.random.uniform(next(keys), (c,), jnp.float32, 0.5, 1.5)
        be = 0.1 * jax.random.normal(next(keys), (c,), jnp.float32)
        rm = 0.1 * jax.random.normal(next(keys), (c,), jnp.float32)
        rv = jax.random.uniform(next(keys), (c,), jnp.float32, 0.5, 1.5)
        return g, be, rm, rv

    params = {}
    for idx, (c_in, c_out) in zip((2, 3, 4), zip(channels[:-1], channels[1:])):
        w, b = mk_conv(c_in, c_out)
        g, be, rm, rv = mk_bn(c_out)
        params[f"w{idx}"] = w
        params[f"b{idx}"] = b
        params[f"g{idx}"] = g
        params[f"be{idx}"] = be
        params[f"rm{idx}"] = rm
        params[f"rv{idx}"] = rv

    x = jax.random.normal(next(keys), (B, channels[0], N), jnp.float32)

    out = mlp1024_32_forward(params, x)
    out = jax.block_until_ready(out)

    ref = reference_forward(params, x)
    assert out.shape == (B, channels[-1], N), out.shape
    # bf16 MXU path: compare against the f32 reference with a bf16-appropriate tolerance.
    assert jnp.allclose(out, ref, atol=5e-2, rtol=5e-2), (
        "mismatch vs reference, max abs diff = %e" % float(jnp.max(jnp.abs(out - ref)))
    )

    print("KERNEL_OK")
</pallas_src>

<mosaic_0001>
module attributes {stable_mosaic.version = 11 : i64} {
  func.func @_mlp_kernel(%arg0: i32, %arg1: i32, %arg2: memref<1x1024x128xf32, #tpu.memory_space<vmem>>, %arg3: memref<512x1024xbf16, #tpu.memory_space<vmem>>, %arg4: memref<512x1xf32, #tpu.memory_space<vmem>>, %arg5: memref<256x512xbf16, #tpu.memory_space<vmem>>, %arg6: memref<256x1xf32, #tpu.memory_space<vmem>>, %arg7: memref<32x256xbf16, #tpu.memory_space<vmem>>, %arg8: memref<32x1xf32, #tpu.memory_space<vmem>>, %arg9: memref<1x32x128xf32, #tpu.memory_space<vmem>>) attributes {dimension_semantics = [#tpu.dimension_semantics<parallel>, #tpu.dimension_semantics<parallel>], iteration_bounds = array<i64: 2, 1>, scalar_prefetch = 0 : i64, scratch_operands = 0 : i64, tpu.core_type = #tpu.core_type<tc>, window_params = [{transform_indices = @transform_0, window_bounds = array<i64: 1, 1024, 128>}, {pipeline_mode = #tpu.pipeline_mode<synchronous>, transform_indices = @transform_1, window_bounds = array<i64: 512, 1024>}, {pipeline_mode = #tpu.pipeline_mode<synchronous>, transform_indices = @transform_2, window_bounds = array<i64: 512, 1>}, {pipeline_mode = #tpu.pipeline_mode<synchronous>, transform_indices = @transform_3, window_bounds = array<i64: 256, 512>}, {pipeline_mode = #tpu.pipeline_mode<synchronous>, transform_indices = @transform_4, window_bounds = array<i64: 256, 1>}, {pipeline_mode = #tpu.pipeline_mode<synchronous>, transform_indices = @transform_5, window_bounds = array<i64: 32, 256>}, {pipeline_mode = #tpu.pipeline_mode<synchronous>, transform_indices = @transform_6, window_bounds = array<i64: 32, 1>}, {transform_indices = @transform_7, window_bounds = array<i64: 1, 32, 128>}]} {
    %c0 = arith.constant 0 : index
    %c0_0 = arith.constant 0 : index
    %c0_1 = arith.constant 0 : index
    %0 = vector.load %arg2[%c0, %c0_0, %c0_1] : memref<1x1024x128xf32, #tpu.memory_space<vmem>>, vector<1x1024x128xf32>
    %1 = vector.shape_cast %0 : vector<1x1024x128xf32> to vector<1024x128xf32>
    %2 = arith.truncf %1 : vector<1024x128xf32> to vector<1024x128xbf16>
    %c0_2 = arith.constant 0 : index
    %c0_3 = arith.constant 0 : index
    %3 = vector.load %arg3[%c0_2, %c0_3] : memref<512x1024xbf16, #tpu.memory_space<vmem>>, vector<512x1024xbf16>
    %cst = arith.constant dense<0.000000e+00> : vector<512x128xf32>
    %4 = tpu.matmul %3, %2, %cst {dimension_numbers = #tpu.dot_dimension_numbers<[1], [0], [0], [1], [0, 0, 1, 1], [], []>} : vector<512x1024xbf16>, vector<1024x128xbf16>, vector<512x128xf32> -> vector<512x128xf32>
    %c0_4 = arith.constant 0 : index
    %c0_5 = arith.constant 0 : index
    %5 = vector.load %arg4[%c0_4, %c0_5] : memref<512x1xf32, #tpu.memory_space<vmem>>, vector<512x1xf32>
    %6 = vector.broadcast %5 : vector<512x1xf32> to vector<512x128xf32>
    %7 = arith.addf %4, %6 : vector<512x128xf32>
    %cst_6 = arith.constant 0.000000e+00 : f32
    %8 = vector.broadcast %cst_6 : f32 to vector<512x128xf32>
    %9 = arith.maximumf %7, %8 : vector<512x128xf32>
    %10 = arith.truncf %9 : vector<512x128xf32> to vector<512x128xbf16>
    %c0_7 = arith.constant 0 : index
    %c0_8 = arith.constant 0 : index
    %11 = vector.load %arg5[%c0_7, %c0_8] : memref<256x512xbf16, #tpu.memory_space<vmem>>, vector<256x512xbf16>
    %cst_9 = arith.constant dense<0.000000e+00> : vector<256x128xf32>
    %12 = tpu.matmul %11, %10, %cst_9 {dimension_numbers = #tpu.dot_dimension_numbers<[1], [0], [0], [1], [0, 0, 1, 1], [], []>} : vector<256x512xbf16>, vector<512x128xbf16>, vector<256x128xf32> -> vector<256x128xf32>
    %c0_10 = arith.constant 0 : index
    %c0_11 = arith.constant 0 : index
    %13 = vector.load %arg6[%c0_10, %c0_11] : memref<256x1xf32, #tpu.memory_space<vmem>>, vector<256x1xf32>
    %14 = vector.broadcast %13 : vector<256x1xf32> to vector<256x128xf32>
    %15 = arith.addf %12, %14 : vector<256x128xf32>
    %cst_12 = arith.constant 0.000000e+00 : f32
    %16 = vector.broadcast %cst_12 : f32 to vector<256x128xf32>
    %17 = arith.maximumf %15, %16 : vector<256x128xf32>
    %18 = arith.truncf %17 : vector<256x128xf32> to vector<256x128xbf16>
    %c0_13 = arith.constant 0 : index
    %c0_14 = arith.constant 0 : index
    %19 = vector.load %arg7[%c0_13, %c0_14] : memref<32x256xbf16, #tpu.memory_space<vmem>>, vector<32x256xbf16>
    %cst_15 = arith.constant dense<0.000000e+00> : vector<32x128xf32>
    %20 = tpu.matmul %19, %18, %cst_15 {dimension_numbers = #tpu.dot_dimension_numbers<[1], [0], [0], [1], [0, 0, 1, 1], [], []>} : vector<32x256xbf16>, vector<256x128xbf16>, vector<32x128xf32> -> vector<32x128xf32>
    %c0_16 = arith.constant 0 : index
    %c0_17 = arith.constant 0 : index
    %21 = vector.load %arg8[%c0_16, %c0_17] : memref<32x1xf32, #tpu.memory_space<vmem>>, vector<32x1xf32>
    %22 = vector.broadcast %21 : vector<32x1xf32> to vector<32x128xf32>
    %23 = arith.addf %20, %22 : vector<32x128xf32>
    %cst_18 = arith.constant 0.000000e+00 : f32
    %24 = vector.broadcast %cst_18 : f32 to vector<32x128xf32>
    %25 = arith.maximumf %23, %24 : vector<32x128xf32>
    %c0_19 = arith.constant 0 : index
    %c0_20 = arith.constant 0 : index
    %c0_21 = arith.constant 0 : index
    %26 = vector.load %arg9[%c0_19, %c0_20, %c0_21] : memref<1x32x128xf32, #tpu.memory_space<vmem>>, vector<1x32x128xf32>
    %27 = vector.shape_cast %26 : vector<1x32x128xf32> to vector<32x128xf32>
    %28 = vector.shape_cast %25 : vector<32x128xf32> to vector<1x32x128xf32>
    tpu.vector_store %arg9[%c0_19, %c0_20, %c0_21], %28 {strides = array<i32>} : memref<1x32x128xf32, #tpu.memory_space<vmem>>, vector<1x32x128xf32>,
    return
  }
  func.func @transform_0(%arg0: i32, %arg1: i32) -> (i32, i32, i32) {
    %c0_i32 = arith.constant 0 : i32
    %c0_i32_0 = arith.constant 0 : i32
    return %arg0, %c0_i32, %arg1 : i32, i32, i32
  }
  func.func @transform_1(%arg0: i32, %arg1: i32) -> (i32, i32) {
    %c0_i32 = arith.constant 0 : i32
    %c0_i32_0 = arith.constant 0 : i32
    %c0_i32_1 = arith.constant 0 : i32
    return %c0_i32, %c0_i32_0 : i32, i32
  }
  func.func @transform_2(%arg0: i32, %arg1: i32) -> (i32, i32) {
    %c0_i32 = arith.constant 0 : i32
    %c0_i32_0 = arith.constant 0 : i32
    %c0_i32_1 = arith.constant 0 : i32
    return %c0_i32, %c0_i32_0 : i32, i32
  }
  func.func @transform_3(%arg0: i32, %arg1: i32) -> (i32, i32) {
    %c0_i32 = arith.constant 0 : i32
    %c0_i32_0 = arith.constant 0 : i32
    %c0_i32_1 = arith.constant 0 : i32
    return %c0_i32, %c0_i32_0 : i32, i32
  }
  func.func @transform_4(%arg0: i32, %arg1: i32) -> (i32, i32) {
    %c0_i32 = arith.constant 0 : i32
    %c0_i32_0 = arith.constant 0 : i32
    %c0_i32_1 = arith.constant 0 : i32
    return %c0_i32, %c0_i32_0 : i32, i32
  }
  func.func @transform_5(%arg0: i32, %arg1: i32) -> (i32, i32) {
    %c0_i32 = arith.constant 0 : i32
    %c0_i32_0 = arith.constant 0 : i32
    %c0_i32_1 = arith.constant 0 : i32
    return %c0_i32, %c0_i32_0 : i32, i32
  }
  func.func @transform_6(%arg0: i32, %arg1: i32) -> (i32, i32) {
    %c0_i32 = arith.constant 0 : i32
    %c0_i32_0 = arith.constant 0 : i32
    %c0_i32_1 = arith.constant 0 : i32
    return %c0_i32, %c0_i32_0 : i32, i32
  }
  func.func @transform_7(%arg0: i32, %arg1: i32) -> (i32, i32, i32) {
    %c0_i32 = arith.constant 0 : i32
    %c0_i32_0 = arith.constant 0 : i32
    return %arg0, %c0_i32, %arg1 : i32, i32, i32
  }
}

</mosaic_0001>

<llo_original>
// kernel: tpu_custom_call.1
$region0: #{tpu_custom_call.1}
  #allocation0 [shape = 'u32[]', space=smem, size = 0x4, offset = 0x4, fixed_abs, tag = 'smem constant byte address 0x4 - core index']
  #allocation1 [shape = 'u32[72,128]{1,0:T(1,128)}', space=vmem, size = 0x9000, scoped, tag = 'internal scratch']
  %s0 = inlined_call_operand.hbm [shape: f32[2,1024,128], index: 0, kind: input, shape index: {}]
  %s1 = inlined_call_operand.hbm [shape: bf16[512,1024], index: 1, kind: input, shape index: {}]
  %s2 = inlined_call_operand.vmem [shape: f32[512,1], index: 2, kind: input, shape index: {}]
  %s3 = inlined_call_operand.vmem [shape: bf16[256,512], index: 3, kind: input, shape index: {}]
  %s4 = inlined_call_operand.vmem [shape: f32[256,1], index: 4, kind: input, shape index: {}]
  %s5 = inlined_call_operand.vmem [shape: bf16[32,256], index: 5, kind: input, shape index: {}]
  %s6 = inlined_call_operand.vmem [shape: f32[32,1], index: 6, kind: input, shape index: {}]
  %s7 = inlined_call_operand.hbm [shape: f32[2,32,128], index: 7, kind: output, shape index: {}]
  %s8 = sld [smem:[#allocation0]]
  $region69: #{tpu_custom_call.1} parent=0
    _
  %s10 = ssub.s32 1, %s8
  %s11 = scalar_select 0, %s10, %s8
  $region1: #{tpu_custom_call.1} parent=0
    #allocation2 [shape = 'u8[1048576]{0}', space=vmem, size = 0x100000, scoped, tag = 'input window, operand 0']
    #allocation3 [shape = 's32[2]{0}', space=sflag, size = 0x8, scoped, tag = 'scoped memory for tpu_custom_call.1']
    #allocation4 [shape = 's32[2]{0}', space=sflag, size = 0x8, scoped, tag = 'scoped memory for tpu_custom_call.1']
    #allocation5 [shape = 'u8[1048576]{0}', space=vmem, size = 0x100000, scoped, tag = 'input window, operand 1, single buffered']
    #allocation6 [shape = 's32[1]{0}', space=sflag, size = 0x4, scoped, tag = 'scoped memory for tpu_custom_call.1']
    #allocation7 [shape = 'u8[32768]{0}', space=vmem, size = 0x8000, scoped, tag = 'output window, operand 0']
    %12 = vsyncpa [#allocation3], 0
    %s13 = scalar_lea.sflag [#allocation3], 1
    %14 = vsyncpa %s13, 0
    %15 = vsyncpa [#allocation6], 0
    %16 = vsyncpa [#allocation4], 0
    %s17 = scalar_lea.sflag [#allocation4], 1
    %18 = vsyncpa %s17, 0
    loop: start=0, step=1, limit=4
    $region2: #{tpu_custom_call.1} parent=1 // loop_pre_header
      _
    $region3: #{tpu_custom_call.1} parent=1 // loop_header
      %s20 = sphi 0, %s24
      %p21 = scmp.ge.s32.totalorder %s20, 4
      %s27 = sphi 0, %s39
      %s28 = sphi 0, %s35
      %s29 = sphi 0, %s27
      %s30 = sphi 0, %s28
      %s31 = sphi 0, %s29
      %s32 = sphi 0, %s30
      %s44 = sphi 0, %s46
      %s47 = sphi 0, %s44
      %s48 = sphi 0, %s47
      %s64 = sphi 0, %s48
      %s68 = sphi 0, %s68
      %s70 = sphi 0, %s68
      %s71 = sphi 0, %s70
      %s85 = sphi 0, %s71
      %s89 = sphi 0, %s89
      %s91 = sphi 0, %s89
      %s92 = sphi 0, %s91
      %s106 = sphi 0, %s92
      %s110 = sphi 0, %s110
      %s112 = sphi 0, %s110
      %s113 = sphi 0, %s112
      %s127 = sphi 0, %s113
      %s131 = sphi 0, %s131
      %s133 = sphi 0, %s131
      %s134 = sphi 0, %s133
      %s148 = sphi 0, %s134
      %s152 = sphi 0, %s152
      %s154 = sphi 0, %s152
      %s155 = sphi 0, %s154
      %s169 = sphi 0, %s155
      %s173 = sphi 0, %s173
      %s175 = sphi 0, %s173
      %s176 = sphi 0, %s175
      %s190 = sphi 0, %s176
      %s198 = sphi 0, %s200
      %s201 = sphi 0, %s198
      %s202 = sphi 0, %s201
      %s218 = sphi 0, %s202
    $region4: #{tpu_custom_call.1} parent=1 // loop_header_branch
      %23 = sbr.rel (%p21) target = $region8
    $region5: #{tpu_custom_call.1} parent=1 // loop_body
      %s25 = ssub.s32 %s20, 1
      %s26 = ssub.s32 %s20, 2
      %s33 = sadd.s32 1, %s28
      %p34 = scmp.ge.s32.totalorder %s33, 1
      %s35 = scalar_select %p34, 0, %s33
      %s36 = sadd.s32 1, %s27
      %s37 = scalar_select %p34, %s36, %s27
      %p38 = scmp.ge.s32.totalorder %s37, 2
      %s39 = scalar_select %p38, 0, %s37
      %s40 = ssub.s32 %s27, %s39
      %s41 = ssub.s32 %s28, %s35
      %s42 = sor.u32 %s40, %s41
      %p43 = scmp.eq.s32.totalorder %s42, 0
      %s45 = sadd.s32 %s44, 1
      %s46 = scalar_select %p43, %s44, %s45
      %p49 = pneg %p43
      %p50 = scmp.eq.s32.totalorder %s20, 1
      %p51 = por %p49, %p50
      %p52 = scmp.ne.s32.totalorder %s44, %s47
      %p53 = scmp.eq.s32.totalorder %s20, 0
      %p54 = por %p52, %p53
      %p55 = scmp.ne.s32.totalorder %s44, %s47
      %p56 = scmp.eq.s32.totalorder %s25, 1
      %p57 = por %p55, %p56
      %p58 = scmp.ne.s32.totalorder %s47, %s48
      %p59 = scmp.eq.s32.totalorder %s25, 0
      %p60 = por %p58, %p59
      %p61 = scmp.ne.s32.totalorder %s47, %s48
      %p62 = scmp.eq.s32.totalorder %s26, 1
      %p63 = por %p61, %p62
      %p65 = scmp.ne.s32.totalorder %s48, %s64
      %p66 = scmp.eq.s32.totalorder %s26, 0
      %p67 = por %p65, %p66
      %s69 = sadd.s32 %s68, 1
      %p72 = scmp.eq.s32.totalorder %s20, 1
      %p73 = scmp.ne.s32.totalorder %s68, %s70
      %p74 = scmp.eq.s32.totalorder %s20, 0
      %p75 = por %p73, %p74
      %p76 = scmp.ne.s32.totalorder %s68, %s70
      %p77 = scmp.eq.s32.totalorder %s25, 1
      %p78 = por %p76, %p77
      %p79 = scmp.ne.s32.totalorder %s70, %s71
      %p80 = scmp.eq.s32.totalorder %s25, 0
      %p81 = por %p79, %p80
      %p82 = scmp.ne.s32.totalorder %s70, %s71
      %p83 = scmp.eq.s32.totalorder %s26, 1
      %p84 = por %p82, %p83
      %p86 = scmp.ne.s32.totalorder %s71, %s85
      %p87 = scmp.eq.s32.totalorder %s26, 0
      %p88 = por %p86, %p87
      %s90 = sadd.s32 %s89, 1
      %p93 = scmp.eq.s32.totalorder %s20, 1
      %p94 = scmp.ne.s32.totalorder %s89, %s91
      %p95 = scmp.eq.s32.totalorder %s20, 0
      %p96 = por %p94, %p95
      %p97 = scmp.ne.s32.totalorder %s89, %s91
      %p98 = scmp.eq.s32.totalorder %s25, 1
      %p99 = por %p97, %p98
      %p100 = scmp.ne.s32.totalorder %s91, %s92
      %p101 = scmp.eq.s32.totalorder %s25, 0
      %p102 = por %p100, %p101
      %p103 = scmp.ne.s32.totalorder %s91, %s92
      %p104 = scmp.eq.s32.totalorder %s26, 1
      %p105 = por %p103, %p104
      %p107 = scmp.ne.s32.totalorder %s92, %s106
      %p108 = scmp.eq.s32.totalorder %s26, 0
      %p109 = por %p107, %p108
      %s111 = sadd.s32 %s110, 1
      %p114 = scmp.eq.s32.totalorder %s20, 1
      %p115 = scmp.ne.s32.totalorder %s110, %s112
      %p116 = scmp.eq.s32.totalorder %s20, 0
      %p117 = por %p115, %p116
      %p118 = scmp.ne.s32.totalorder %s110, %s112
      %p119 = scmp.eq.s32.totalorder %s25, 1
      %p120 = por %p118, %p119
      %p121 = scmp.ne.s32.totalorder %s112, %s113
      %p122 = scmp.eq.s32.totalorder %s25, 0
      %p123 = por %p121, %p122
      %p124 = scmp.ne.s32.totalorder %s112, %s113
      %p125 = scmp.eq.s32.totalorder %s26, 1
      %p126 = por %p124, %p125
      %p128 = scmp.ne.s32.totalorder %s113, %s127
      %p129 = scmp.eq.s32.totalorder %s26, 0
      %p130 = por %p128, %p129
      %s132 = sadd.s32 %s131, 1
      %p135 = scmp.eq.s32.totalorder %s20, 1
      %p136 = scmp.ne.s32.totalorder %s131, %s133
      %p137 = scmp.eq.s32.totalorder %s20, 0
      %p138 = por %p136, %p137
      %p139 = scmp.ne.s32.totalorder %s131, %s133
      %p140 = scmp.eq.s32.totalorder %s25, 1
      %p141 = por %p139, %p140
      %p142 = scmp.ne.s32.totalorder %s133, %s134
      %p143 = scmp.eq.s32.totalorder %s25, 0
      %p144 = por %p142, %p143
      %p145 = scmp.ne.s32.totalorder %s133, %s134
      %p146 = scmp.eq.s32.totalorder %s26, 1
      %p147 = por %p145, %p146
      %p149 = scmp.ne.s32.totalorder %s134, %s148
      %p150 = scmp.eq.s32.totalorder %s26, 0
      %p151 = por %p149, %p150
      %s153 = sadd.s32 %s152, 1
      %p156 = scmp.eq.s32.totalorder %s20, 1
      %p157 = scmp.ne.s32.totalorder %s152, %s154
      %p158 = scmp.eq.s32.totalorder %s20, 0
      %p159 = por %p157, %p158
      %p160 = scmp.ne.s32.totalorder %s152, %s154
      %p161 = scmp.eq.s32.totalorder %s25, 1
      %p162 = por %p160, %p161
      %p163 = scmp.ne.s32.totalorder %s154, %s155
      %p164 = scmp.eq.s32.totalorder %s25, 0
      %p165 = por %p163, %p164
      %p166 = scmp.ne.s32.totalorder %s154, %s155
      %p167 = scmp.eq.s32.totalorder %s26, 1
      %p168 = por %p166, %p167
      %p170 = scmp.ne.s32.totalorder %s155, %s169
      %p171 = scmp.eq.s32.totalorder %s26, 0
      %p172 = por %p170, %p171
      %s174 = sadd.s32 %s173, 1
      %p177 = scmp.eq.s32.totalorder %s20, 1
      %p178 = scmp.ne.s32.totalorder %s173, %s175
      %p179 = scmp.eq.s32.totalorder %s20, 0
      %p180 = por %p178, %p179
      %p181 = scmp.ne.s32.totalorder %s173, %s175
      %p182 = scmp.eq.s32.totalorder %s25, 1
      %p183 = por %p181, %p182
      %p184 = scmp.ne.s32.totalorder %s175, %s176
      %p185 = scmp.eq.s32.totalorder %s25, 0
      %p186 = por %p184, %p185
      %p187 = scmp.ne.s32.totalorder %s175, %s176
      %p188 = scmp.eq.s32.totalorder %s26, 1
      %p189 = por %p187, %p188
      %p191 = scmp.ne.s32.totalorder %s176, %s190
      %p192 = scmp.eq.s32.totalorder %s26, 0
      %p193 = por %p191, %p192
      %s194 = ssub.s32 %s27, %s39
      %s195 = ssub.s32 %s28, %s35
      %s196 = sor.u32 %s194, %s195
      %p197 = scmp.eq.s32.totalorder %s196, 0
      %s199 = sadd.s32 %s198, 1
      %s200 = scalar_select %p197, %s198, %s199
      %p203 = pneg %p197
      %p204 = scmp.eq.s32.totalorder %s20, 1
      %p205 = por %p203, %p204
      %p206 = scmp.ne.s32.totalorder %s198, %s201
      %p207 = scmp.eq.s32.totalorder %s20, 0
      %p208 = por %p206, %p207
      %p209 = scmp.ne.s32.totalorder %s198, %s201
      %p210 = scmp.eq.s32.totalorder %s25, 1
      %p211 = por %p209, %p210
      %p212 = scmp.ne.s32.totalorder %s201, %s202
      %p213 = scmp.eq.s32.totalorder %s25, 0
      %p214 = por %p212, %p213
      %p215 = scmp.ne.s32.totalorder %s201, %s202
      %p216 = scmp.eq.s32.totalorder %s26, 1
      %p217 = por %p215, %p216
      %p219 = scmp.ne.s32.totalorder %s202, %s218
      %p220 = scmp.eq.s32.totalorder %s26, 0
      %p221 = por %p219, %p220
      %p222 = scmp.le.s32.totalorder 1, %s20
      %p223 = scmp.lt.s32.totalorder %s20, 3
      %p224 = pnand %p222, %p223
      %p225 = pneg %p224
      // Predicated region
      $region9: #{tpu_custom_call.1} parent=5 // pred_check
        _
      $region10: #{tpu_custom_call.1} parent=5 // pred_check_branch
        %227 = sbr.rel (%p224) target = $region12
      $region11: #{tpu_custom_call.1} parent=5 // pred_region
        %s228 = ssub.s32 %s20, 1
        // Predicated region
        $region13: #{tpu_custom_call.1} parent=11 // pred_check
          %p229 = pneg %p81
        $region14: #{tpu_custom_call.1} parent=11 // pred_check_branch
          %231 = sbr.rel (%p229) target = $region16
        $region15: #{tpu_custom_call.1} parent=11 // pred_region
          %233 = vsyncadd [#allocation6], 0
          %s234 = sshll.u32 %s1, 4
          %s235 = int_to_ptr.hbm [resolvable:$true] %s234
          %s236 = sshll.u32 [#allocation5], 4
          %s237 = int_to_ptr.vmem [resolvable:$true] %s236
          %242 = dma.hbm_to_vmem [thread:$0]  %s235, 32768, %s237, [#allocation6], 512, 512, 32
        $region16: #{tpu_custom_call.1} parent=11 // pred_fallthru
          _
        // Predicated region
        $region17: #{tpu_custom_call.1} parent=11 // pred_check
          %p243 = pneg %p102
        $region18: #{tpu_custom_call.1} parent=11 // pred_check_branch
          %245 = sbr.rel (%p243) target = $region20
        $region19: #{tpu_custom_call.1} parent=11 // pred_region
          _
        $region20: #{tpu_custom_call.1} parent=11 // pred_fallthru
          _
        // Predicated region
        $region21: #{tpu_custom_call.1} parent=11 // pred_check
          %p246 = pneg %p123
        $region22: #{tpu_custom_call.1} parent=11 // pred_check_branch
          %248 = sbr.rel (%p246) target = $region24
        $region23: #{tpu_custom_call.1} parent=11 // pred_region
          _
        $region24: #{tpu_custom_call.1} parent=11 // pred_fallthru
          _
        // Predicated region
        $region25: #{tpu_custom_call.1} parent=11 // pred_check
          %p249 = pneg %p144
        $region26: #{tpu_custom_call.1} parent=11 // pred_check_branch
          %251 = sbr.rel (%p249) target = $region28
        $region27: #{tpu_custom_call.1} parent=11 // pred_region
          _
        $region28: #{tpu_custom_call.1} parent=11 // pred_fallthru
          _
        // Predicated region
        $region29: #{tpu_custom_call.1} parent=11 // pred_check
          %p252 = pneg %p165
        $region30: #{tpu_custom_call.1} parent=11 // pred_check_branch
          %254 = sbr.rel (%p252) target = $region32
        $region31: #{tpu_custom_call.1} parent=11 // pred_region
          _
        $region32: #{tpu_custom_call.1} parent=11 // pred_fallthru
          _
        // Predicated region
        $region33: #{tpu_custom_call.1} parent=11 // pred_check
          %p255 = pneg %p186
        $region34: #{tpu_custom_call.1} parent=11 // pred_check_branch
          %257 = sbr.rel (%p255) target = $region36
        $region35: #{tpu_custom_call.1} parent=11 // pred_region
          _
        $region36: #{tpu_custom_call.1} parent=11 // pred_fallthru
          _
      $region12: #{tpu_custom_call.1} parent=5 // pred_fallthru
        _
      %p258 = scmp.lt.s32.totalorder %s20, 2
      // Predicated region
      $region37: #{tpu_custom_call.1} parent=5 // pred_check
        %p259 = pneg %p258
      $region38: #{tpu_custom_call.1} parent=5 // pred_check_branch
        %261 = sbr.rel (%p259) target = $region40
      $region39: #{tpu_custom_call.1} parent=5 // pred_region
        // Predicated region
        $region41: #{tpu_custom_call.1} parent=39 // pred_check
          %p262 = pneg %p54
        $region42: #{tpu_custom_call.1} parent=39 // pred_check_branch
          %264 = sbr.rel (%p262) target = $region44
        $region43: #{tpu_custom_call.1} parent=39 // pred_region
          %s265 = sand.u32 %s44, 1
          %s266 = scalar_lea.sflag [#allocation3], %s265
          %s267 = sand.u32 %s44, 1
          %s268 = smul.addr %s267, 1024
          %s269 = scalar_lea.vmem [#allocation2], %s268
          %271 = vsyncadd %s266, 0
          %s272 = smul.addr %s27, 128
          %s273 = sadd.s32 %s28, %s272
          %s274 = smul.addr %s273, 8
          %s275 = scalar_lea.hbm %s0, %s274
          %s276 = sshll.u32 %s275, 4
          %s277 = int_to_ptr.hbm [resolvable:$true] %s276
          %s278 = sshll.u32 %s269, 4
          %s279 = int_to_ptr.vmem [resolvable:$true] %s278
          %284 = dma.hbm_to_vmem [thread:$0]  %s277, 16384, %s279, %s266, 128, 128, 8
        $region44: #{tpu_custom_call.1} parent=39 // pred_fallthru
          _
      $region40: #{tpu_custom_call.1} parent=5 // pred_fallthru
        _
      %p285 = scmp.le.s32.totalorder 1, %s20
      %p286 = scmp.lt.s32.totalorder %s20, 3
      %p287 = pnand %p285, %p286
      %p288 = pneg %p287
      // Predicated region
      $region45: #{tpu_custom_call.1} parent=5 // pred_check
        _
      $region46: #{tpu_custom_call.1} parent=5 // pred_check_branch
        %290 = sbr.rel (%p287) target = $region48
      $region47: #{tpu_custom_call.1} parent=5 // pred_region
        %s291 = ssub.s32 %s20, 1
        %s292 = sand.u32 %s47, 1
        %s293 = scalar_lea.sflag [#allocation3], %s292
        %s294 = sand.u32 %s47, 1
        %s295 = smul.addr %s294, 1024
        %s296 = scalar_lea.vmem [#allocation2], %s295
        // Predicated region
        $region49: #{tpu_custom_call.1} parent=47 // pred_check
          %p297 = pneg %p60
        $region50: #{tpu_custom_call.1} parent=47 // pred_check_branch
          %299 = sbr.rel (%p297) target = $region52
        $region51: #{tpu_custom_call.1} parent=47 // pred_region
          %301 = dma.done %s293, 16384
        $region52: #{tpu_custom_call.1} parent=47 // pred_fallthru
          _
        // Predicated region
        $region53: #{tpu_custom_call.1} parent=47 // pred_check
          %p302 = pneg %p81
        $region54: #{tpu_custom_call.1} parent=47 // pred_check_branch
          %304 = sbr.rel (%p302) target = $region56
        $region55: #{tpu_custom_call.1} parent=47 // pred_region
          %306 = dma.done [#allocation6], 32768
        $region56: #{tpu_custom_call.1} parent=47 // pred_fallthru
          _
        %s307 = sand.u32 %s47, 1
        %s308 = scalar_lea.sflag [#allocation3], %s307
        %s309 = sand.u32 %s47, 1
        %s310 = smul.addr %s309, 1024
        %s311 = scalar_lea.vmem [#allocation2], %s310
        %p312 = pneg %p60
        %p313 = pneg %p57
        %p314 = pneg %p81
        %p315 = pneg %p78
        %p316 = pneg %p102
        %p317 = pneg %p99
        %p318 = pneg %p123
        %p319 = pneg %p120
        %p320 = pneg %p144
        %p321 = pneg %p141
        %p322 = pneg %p165
        %p323 = pneg %p162
        %p324 = pneg %p186
        %p325 = pneg %p183
        %p326 = pneg %p214
        %p327 = pneg %p211
        %s328 = sand.u32 %s201, 1
        %s329 = scalar_lea.sflag [#allocation4], %s328
        %s330 = sand.u32 %s201, 1
        %s331 = smul.addr %s330, 32
        %s332 = scalar_lea.vmem [#allocation7], %s331
        %v333 = vld [vmem:[%s296] sm:$0xff]
        %v334 = vld [vmem:[%s296 + $0x8] sm:$0xff]
        %v335 = vld [vmem:[%s296 + $0x10] sm:$0xff]
        %v336 = vld [vmem:[%s296 + $0x18] sm:$0xff]
        %v337 = vld [vmem:[%s296 + $0x20] sm:$0xff]
        %v338 = vld [vmem:[%s296 + $0x28] sm:$0xff]
        %v339 = vld [vmem:[%s296 + $0x30] sm:$0xff]
        %v340 = vld [vmem:[%s296 + $0x38] sm:$0xff]
        %v341 = vld [vmem:[%s296 + $0x40] sm:$0xff]
        %v342 = vld [vmem:[%s296 + $0x48] sm:$0xff]
        %v343 = vld [vmem:[%s296 + $0x50] sm:$0xff]
        %v344 = vld [vmem:[%s296 + $0x58] sm:$0xff]
        %v345 = vld [vmem:[%s296 + $0x60] sm:$0xff]
        %v346 = vld [vmem:[%s296 + $0x68] sm:$0xff]
        %v347 = vld [vmem:[%s296 + $0x70] sm:$0xff]
        %v348 = vld [vmem:[%s296 + $0x78] sm:$0xff]
        %v349 = vld [vmem:[%s296 + $0x80] sm:$0xff]
        %v350 = vld [vmem:[%s296 + $0x88] sm:$0xff]
        %v351 = vld [vmem:[%s296 + $0x90] sm:$0xff]
        %v352 = vld [vmem:[%s296 + $0x98] sm:$0xff]
        %v353 = vld [vmem:[%s296 + $0xa0] sm:$0xff]
        %v354 = vld [vmem:[%s296 + $0xa8] sm:$0xff]
        %v355 = vld [vmem:[%s296 + $0xb0] sm:$0xff]
        %v356 = vld [vmem:[%s296 + $0xb8] sm:$0xff]
        %v357 = vld [vmem:[%s296 + $0xc0] sm:$0xff]
        %v358 = vld [vmem:[%s296 + $0xc8] sm:$0xff]
        %v359 = vld [vmem:[%s296 + $0xd0] sm:$0xff]
        %v360 = vld [vmem:[%s296 + $0xd8] sm:$0xff]
        %v361 = vld [vmem:[%s296 + $0xe0] sm:$0xff]
        %v362 = vld [vmem:[%s296 + $0xe8] sm:$0xff]
        %v363 = vld [vmem:[%s296 + $0xf0] sm:$0xff]
        %v364 = vld [vmem:[%s296 + $0xf8] sm:$0xff]
        %v365 = vld [vmem:[%s296 + $0x100] sm:$0xff]
        %v366 = vld [vmem:[%s296 + $0x108] sm:$0xff]
        %v367 = vld [vmem:[%s296 + $0x110] sm:$0xff]
        %v368 = vld [vmem:[%s296 + $0x118] sm:$0xff]
        %v369 = vld [vmem:[%s296 + $0x120] sm:$0xff]
        %v370 = vld [vmem:[%s296 + $0x128] sm:$0xff]
        %v371 = vld [vmem:[%s296 + $0x130] sm:$0xff]
        %v372 = vld [vmem:[%s296 + $0x138] sm:$0xff]
        %v373 = vld [vmem:[%s296 + $0x140] sm:$0xff]
        %v374 = vld [vmem:[%s296 + $0x148] sm:$0xff]
        %v375 = vld [vmem:[%s296 + $0x150] sm:$0xff]
        %v376 = vld [vmem:[%s296 + $0x158] sm:$0xff]
        %v377 = vld [vmem:[%s296 + $0x160] sm:$0xff]
        %v378 = vld [vmem:[%s296 + $0x168] sm:$0xff]
        %v379 = vld [vmem:[%s296 + $0x170] sm:$0xff]
        %v380 = vld [vmem:[%s296 + $0x178] sm:$0xff]
        %v381 = vld [vmem:[%s296 + $0x180] sm:$0xff]
        %v382 = vld [vmem:[%s296 + $0x188] sm:$0xff]
        %v383 = vld [vmem:[%s296 + $0x190] sm:$0xff]
        %v384 = vld [vmem:[%s296 + $0x198] sm:$0xff]
        %v385 = vld [vmem:[%s296 + $0x1a0] sm:$0xff]
        %v386 = vld [vmem:[%s296 + $0x1a8] sm:$0xff]
        %v387 = vld [vmem:[%s296 + $0x1b0] sm:$0xff]
        %v388 = vld [vmem:[%s296 + $0x1b8] sm:$0xff]
        %v389 = vld [vmem:[%s296 + $0x1c0] sm:$0xff]
        %v390 = vld [vmem:[%s296 + $0x1c8] sm:$0xff]
        %v391 = vld [vmem:[%s296 + $0x1d0] sm:$0xff]
        %v392 = vld [vmem:[%s296 + $0x1d8] sm:$0xff]
        %v393 = vld [vmem:[%s296 + $0x1e0] sm:$0xff]
        %v394 = vld [vmem:[%s296 + $0x1e8] sm:$0xff]
        %v395 = vld [vmem:[%s296 + $0x1f0] sm:$0xff]
        %v396 = vld [vmem:[%s296 + $0x1f8] sm:$0xff]
        %v397 = vld [vmem:[%s296 + $0x200] sm:$0xff]
        %v398 = vld [vmem:[%s296 + $0x208] sm:$0xff]
        %v399 = vld [vmem:[%s296 + $0x210] sm:$0xff]
        %v400 = vld [vmem:[%s296 + $0x218] sm:$0xff]
        %v401 = vld [vmem:[%s296 + $0x220] sm:$0xff]
        %v402 = vld [vmem:[%s296 + $0x228] sm:$0xff]
        %v403 = vld [vmem:[%s296 + $0x230] sm:$0xff]
        %v404 = vld [vmem:[%s296 + $0x238] sm:$0xff]
        %v405 = vld [vmem:[%s296 + $0x240] sm:$0xff]
        %v406 = vld [vmem:[%s296 + $0x248] sm:$0xff]
        %v407 = vld [vmem:[%s296 + $0x250] sm:$0xff]
        %v408 = vld [vmem:[%s296 + $0x258] sm:$0xff]
        %v409 = vld [vmem:[%s296 + $0x260] sm:$0xff]
        %v410 = vld [vmem:[%s296 + $0x268] sm:$0xff]
        %v411 = vld [vmem:[%s296 + $0x270] sm:$0xff]
        %v412 = vld [vmem:[%s296 + $0x278] sm:$0xff]
        %v413 = vld [vmem:[%s296 + $0x280] sm:$0xff]
        %v414 = vld [vmem:[%s296 + $0x288] sm:$0xff]
        %v415 = vld [vmem:[%s296 + $0x290] sm:$0xff]
        %v416 = vld [vmem:[%s296 + $0x298] sm:$0xff]
        %v417 = vld [vmem:[%s296 + $0x2a0] sm:$0xff]
        %v418 = vld [vmem:[%s296 + $0x2a8] sm:$0xff]
        %v419 = vld [vmem:[%s296 + $0x2b0] sm:$0xff]
        %v420 = vld [vmem:[%s296 + $0x2b8] sm:$0xff]
        %v421 = vld [vmem:[%s296 + $0x2c0] sm:$0xff]
        %v422 = vld [vmem:[%s296 + $0x2c8] sm:$0xff]
        %v423 = vld [vmem:[%s296 + $0x2d0] sm:$0xff]
        %v424 = vld [vmem:[%s296 + $0x2d8] sm:$0xff]
        %v425 = vld [vmem:[%s296 + $0x2e0] sm:$0xff]
        %v426 = vld [vmem:[%s296 + $0x2e8] sm:$0xff]
        %v427 = vld [vmem:[%s296 + $0x2f0] sm:$0xff]
        %v428 = vld [vmem:[%s296 + $0x2f8] sm:$0xff]
        %v429 = vld [vmem:[%s296 + $0x300] sm:$0xff]
        %v430 = vld [vmem:[%s296 + $0x308] sm:$0xff]
        %v431 = vld [vmem:[%s296 + $0x310] sm:$0xff]
        %v432 = vld [vmem:[%s296 + $0x318] sm:$0xff]
        %v433 = vld [vmem:[%s296 + $0x320] sm:$0xff]
        %v434 = vld [vmem:[%s296 + $0x328] sm:$0xff]
        %v435 = vld [vmem:[%s296 + $0x330] sm:$0xff]
        %v436 = vld [vmem:[%s296 + $0x338] sm:$0xff]
        %v437 = vld [vmem:[%s296 + $0x340] sm:$0xff]
        %v438 = vld [vmem:[%s296 + $0x348] sm:$0xff]
        %v439 = vld [vmem:[%s296 + $0x350] sm:$0xff]
        %v440 = vld [vmem:[%s296 + $0x358] sm:$0xff]
        %v441 = vld [vmem:[%s296 + $0x360] sm:$0xff]
        %v442 = vld [vmem:[%s296 + $0x368] sm:$0xff]
        %v443 = vld [vmem:[%s296 + $0x370] sm:$0xff]
        %v444 = vld [vmem:[%s296 + $0x378] sm:$0xff]
        %v445 = vld [vmem:[%s296 + $0x380] sm:$0xff]
        %v446 = vld [vmem:[%s296 + $0x388] sm:$0xff]
        %v447 = vld [vmem:[%s296 + $0x390] sm:$0xff]
        %v448 = vld [vmem:[%s296 + $0x398] sm:$0xff]
        %v449 = vld [vmem:[%s296 + $0x3a0] sm:$0xff]
        %v450 = vld [vmem:[%s296 + $0x3a8] sm:$0xff]
        %v451 = vld [vmem:[%s296 + $0x3b0] sm:$0xff]
        %v452 = vld [vmem:[%s296 + $0x3b8] sm:$0xff]
        %v453 = vld [vmem:[%s296 + $0x3c0] sm:$0xff]
        %v454 = vld [vmem:[%s296 + $0x3c8] sm:$0xff]
        %v455 = vld [vmem:[%s296 + $0x3d0] sm:$0xff]
        %v456 = vld [vmem:[%s296 + $0x3d8] sm:$0xff]
        %v457 = vld [vmem:[%s296 + $0x3e0] sm:$0xff]
        %v458 = vld [vmem:[%s296 + $0x3e8] sm:$0xff]
        %v459 = vld [vmem:[%s296 + $0x3f0] sm:$0xff]
        %v460 = vld [vmem:[%s296 + $0x3f8] sm:$0xff]
        %v461 = vpack.c.bf16 %v334, %v333
        %v462 = vpack.c.bf16 %v336, %v335
        %v463 = vpack.c.bf16 %v338, %v337
        %v464 = vpack.c.bf16 %v340, %v339
        %v465 = vpack.c.bf16 %v342, %v341
        %v466 = vpack.c.bf16 %v344, %v343
        %v467 = vpack.c.bf16 %v346, %v345
        %v468 = vpack.c.bf16 %v348, %v347
        %v469 = vpack.c.bf16 %v350, %v349
        %v470 = vpack.c.bf16 %v352, %v351
        %v471 = vpack.c.bf16 %v354, %v353
        %v472 = vpack.c.bf16 %v356, %v355
        %v473 = vpack.c.bf16 %v358, %v357
        %v474 = vpack.c.bf16 %v360, %v359
        %v475 = vpack.c.bf16 %v362, %v361
        %v476 = vpack.c.bf16 %v364, %v363
        %v477 = vpack.c.bf16 %v366, %v365
        %v478 = vpack.c.bf16 %v368, %v367
        %v479 = vpack.c.bf16 %v370, %v369
        %v480 = vpack.c.bf16 %v372, %v371
        %v481 = vpack.c.bf16 %v374, %v373
        %v482 = vpack.c.bf16 %v376, %v375
        %v483 = vpack.c.bf16 %v378, %v377
        %v484 = vpack.c.bf16 %v380, %v379
        %v485 = vpack.c.bf16 %v382, %v381
        %v486 = vpack.c.bf16 %v384, %v383
        %v487 = vpack.c.bf16 %v386, %v385
        %v488 = vpack.c.bf16 %v388, %v387
        %v489 = vpack.c.bf16 %v390, %v389
        %v490 = vpack.c.bf16 %v392, %v391
        %v491 = vpack.c.bf16 %v394, %v393
        %v492 = vpack.c.bf16 %v396, %v395
        %v493 = vpack.c.bf16 %v398, %v397
        %v494 = vpack.c.bf16 %v400, %v399
        %v495 = vpack.c.bf16 %v402, %v401
        %v496 = vpack.c.bf16 %v404, %v403
        %v497 = vpack.c.bf16 %v406, %v405
        %v498 = vpack.c.bf16 %v408, %v407
        %v499 = vpack.c.bf16 %v410, %v409
        %v500 = vpack.c.bf16 %v412, %v411
        %v501 = vpack.c.bf16 %v414, %v413
        %v502 = vpack.c.bf16 %v416, %v415
        %v503 = vpack.c.bf16 %v418, %v417
        %v504 = vpack.c.bf16 %v420, %v419
        %v505 = vpack.c.bf16 %v422, %v421
        %v506 = vpack.c.bf16 %v424, %v423
        %v507 = vpack.c.bf16 %v426, %v425
        %v508 = vpack.c.bf16 %v428, %v427
        %v509 = vpack.c.bf16 %v430, %v429
        %v510 = vpack.c.bf16 %v432, %v431
        %v511 = vpack.c.bf16 %v434, %v433
        %v512 = vpack.c.bf16 %v436, %v435
        %v513 = vpack.c.bf16 %v438, %v437
        %v514 = vpack.c.bf16 %v440, %v439
        %v515 = vpack.c.bf16 %v442, %v441
        %v516 = vpack.c.bf16 %v444, %v443
        %v517 = vpack.c.bf16 %v446, %v445
        %v518 = vpack.c.bf16 %v448, %v447
        %v519 = vpack.c.bf16 %v450, %v449
        %v520 = vpack.c.bf16 %v452, %v451
        %v521 = vpack.c.bf16 %v454, %v453
        %v522 = vpack.c.bf16 %v456, %v455
        %v523 = vpack.c.bf16 %v458, %v457
        %v524 = vpack.c.bf16 %v460, %v459
        %v525 = vld [vmem:[#allocation5] sm:$0xff]
        %v526 = vld [vmem:[#allocation5 + $0x8] sm:$0xff]
        %v527 = vld [vmem:[#allocation5 + $0x10] sm:$0xff]
        %v528 = vld [vmem:[#allocation5 + $0x18] sm:$0xff]
        %v529 = vld [vmem:[#allocation5 + $0x20] sm:$0xff]
        %v530 = vld [vmem:[#allocation5 + $0x28] sm:$0xff]
        %v531 = vld [vmem:[#allocation5 + $0x30] sm:$0xff]
        %v532 = vld [vmem:[#allocation5 + $0x38] sm:$0xff]
        %v533 = vld [vmem:[#allocation5 + $0x40] sm:$0xff]
        %v534 = vld [vmem:[#allocation5 + $0x48] sm:$0xff]
        %v535 = vld [vmem:[#allocation5 + $0x50] sm:$0xff]
        %v536 = vld [vmem:[#allocation5 + $0x58] sm:$0xff]
        %v537 = vld [vmem:[#allocation5 + $0x60] sm:$0xff]
        %v538 = vld [vmem:[#allocation5 + $0x68] sm:$0xff]
        %v539 = vld [vmem:[#allocation5 + $0x70] sm:$0xff]
        %v540 = vld [vmem:[#allocation5 + $0x78] sm:$0xff]
        %v541 = vld [vmem:[#allocation5 + $0x80] sm:$0xff]
        %v542 = vld [vmem:[#allocation5 + $0x88] sm:$0xff]
        %v543 = vld [vmem:[#allocation5 + $0x90] sm:$0xff]
        %v544 = vld [vmem:[#allocation5 + $0x98] sm:$0xff]
        %v545 = vld [vmem:[#allocation5 + $0xa0] sm:$0xff]
        %v546 = vld [vmem:[#allocation5 + $0xa8] sm:$0xff]
        %v547 = vld [vmem:[#allocation5 + $0xb0] sm:$0xff]
        %v548 = vld [vmem:[#allocation5 + $0xb8] sm:$0xff]
        %v549 = vld [vmem:[#allocation5 + $0xc0] sm:$0xff]
        %v550 = vld [vmem:[#allocation5 + $0xc8] sm:$0xff]
        %v551 = vld [vmem:[#allocation5 + $0xd0] sm:$0xff]
        %v552 = vld [vmem:[#allocation5 + $0xd8] sm:$0xff]
        %v553 = vld [vmem:[#allocation5 + $0xe0] sm:$0xff]
        %v554 = vld [vmem:[#allocation5 + $0xe8] sm:$0xff]
        %v555 = vld [vmem:[#allocation5 + $0xf0] sm:$0xff]
        %v556 = vld [vmem:[#allocation5 + $0xf8] sm:$0xff]
        %v557 = vld [vmem:[#allocation5 + $0x100] sm:$0xff]
        %v558 = vld [vmem:[#allocation5 + $0x108] sm:$0xff]
        %v559 = vld [vmem:[#allocation5 + $0x110] sm:$0xff]
        %v560 = vld [vmem:[#allocation5 + $0x118] sm:$0xff]
        %v561 = vld [vmem:[#allocation5 + $0x120] sm:$0xff]
        %v562 = vld [vmem:[#allocation5 + $0x128] sm:$0xff]
        %v563 = vld [vmem:[#allocation5 + $0x130] sm:$0xff]
        %v564 = vld [vmem:[#allocation5 + $0x138] sm:$0xff]
        %v565 = vld [vmem:[#allocation5 + $0x140] sm:$0xff]
        %v566 = vld [vmem:[#allocation5 + $0x148] sm:$0xff]
        %v567 = vld [vmem:[#allocation5 + $0x150] sm:$0xff]
        %v568 = vld [vmem:[#allocation5 + $0x158] sm:$0xff]
        %v569 = vld [vmem:[#allocation5 + $0x160] sm:$0xff]
        %v570 = vld [vmem:[#allocation5 + $0x168] sm:$0xff]
        %v571 = vld [vmem:[#allocation5 + $0x170] sm:$0xff]
        %v572 = vld [vmem:[#allocation5 + $0x178] sm:$0xff]
        %v573 = vld [vmem:[#allocation5 + $0x180] sm:$0xff]
        %v574 = vld [vmem:[#allocation5 + $0x188] sm:$0xff]
        %v575 = vld [vmem:[#allocation5 + $0x190] sm:$0xff]
        %v576 = vld [vmem:[#allocation5 + $0x198] sm:$0xff]
        %v577 = vld [vmem:[#allocation5 + $0x1a0] sm:$0xff]
        %v578 = vld [vmem:[#allocation5 + $0x1a8] sm:$0xff]
        %v579 = vld [vmem:[#allocation5 + $0x1b0] sm:$0xff]
        %v580 = vld [vmem:[#allocation5 + $0x1b8] sm:$0xff]
        %v581 = vld [vmem:[#allocation5 + $0x1c0] sm:$0xff]
        %v582 = vld [vmem:[#allocation5 + $0x1c8] sm:$0xff]
        %v583 = vld [vmem:[#allocation5 + $0x1d0] sm:$0xff]
        %v584 = vld [vmem:[#allocation5 + $0x1d8] sm:$0xff]
        %v585 = vld [vmem:[#allocation5 + $0x1e0] sm:$0xff]
        %v586 = vld [vmem:[#allocation5 + $0x1e8] sm:$0xff]
        %v587 = vld [vmem:[#allocation5 + $0x1f0] sm:$0xff]
        %v588 = vld [vmem:[#allocation5 + $0x1f8] sm:$0xff]
        %v589 = vld [vmem:[#allocation5 + $0x200] sm:$0xff]
        %v590 = vld [vmem:[#allocation5 + $0x208] sm:$0xff]
        %v591 = vld [vmem:[#allocation5 + $0x210] sm:$0xff]
        %v592 = vld [vmem:[#allocation5 + $0x218] sm:$0xff]
        %v593 = vld [vmem:[#allocation5 + $0x220] sm:$0xff]
        %v594 = vld [vmem:[#allocation5 + $0x228] sm:$0xff]
        %v595 = vld [vmem:[#allocation5 + $0x230] sm:$0xff]
        %v596 = vld [vmem:[#allocation5 + $0x238] sm:$0xff]
        %v597 = vld [vmem:[#allocation5 + $0x240] sm:$0xff]
        %v598 = vld [vmem:[#allocation5 + $0x248] sm:$0xff]
        %v599 = vld [vmem:[#allocation5 + $0x250] sm:$0xff]
        %v600 = vld [vmem:[#allocation5 + $0x258] sm:$0xff]
        %v601 = vld [vmem:[#allocation5 + $0x260] sm:$0xff]
        %v602 = vld [vmem:[#allocation5 + $0x268] sm:$0xff]
        %v603 = vld [vmem:[#allocation5 + $0x270] sm:$0xff]
        %v604 = vld [vmem:[#allocation5 + $0x278] sm:$0xff]
        %v605 = vld [vmem:[#allocation5 + $0x280] sm:$0xff]
        %v606 = vld [vmem:[#allocation5 + $0x288] sm:$0xff]
        %v607 = vld [vmem:[#allocation5 + $0x290] sm:$0xff]
        %v608 = vld [vmem:[#allocation5 + $0x298] sm:$0xff]
        %v609 = vld [vmem:[#allocation5 + $0x2a0] sm:$0xff]
        %v610 = vld [vmem:[#allocation5 + $0x2a8] sm:$0xff]
        %v611 = vld [vmem:[#allocation5 + $0x2b0] sm:$0xff]
        %v612 = vld [vmem:[#allocation5 + $0x2b8] sm:$0xff]
        %v613 = vld [vmem:[#allocation5 + $0x2c0] sm:$0xff]
        %v614 = vld [vmem:[#allocation5 + $0x2c8] sm:$0xff]
        %v615 = vld [vmem:[#allocation5 + $0x2d0] sm:$0xff]
        %v616 = vld [vmem:[#allocation5 + $0x2d8] sm:$0xff]
        %v617 = vld [vmem:[#allocation5 + $0x2e0] sm:$0xff]
        %v618 = vld [vmem:[#allocation5 + $0x2e8] sm:$0xff]
        %v619 = vld [vmem:[#allocation5 + $0x2f0] sm:$0xff]
        %v620 = vld [vmem:[#allocation5 + $0x2f8] sm:$0xff]
        %v621 = vld [vmem:[#allocation5 + $0x300] sm:$0xff]
        %v622 = vld [vmem:[#allocation5 + $0x308] sm:$0xff]
        %v623 = vld [vmem:[#allocation5 + $0x310] sm:$0xff]
        %v624 = vld [vmem:[#allocation5 + $0x318] sm:$0xff]
        %v625 = vld [vmem:[#allocation5 + $0x320] sm:$0xff]
        %v626 = vld [vmem:[#allocation5 + $0x328] sm:$0xff]
        %v627 = vld [vmem:[#allocation5 + $0x330] sm:$0xff]
        %v628 = vld [vmem:[#allocation5 + $0x338] sm:$0xff]
        %v629 = vld [vmem:[#allocation5 + $0x340] sm:$0xff]
        %v630 = vld [vmem:[#allocation5 + $0x348] sm:$0xff]
        %v631 = vld [vmem:[#allocation5 + $0x350] sm:$0xff]
        %v632 = vld [vmem:[#allocation5 + $0x358] sm:$0xff]
        %v633 = vld [vmem:[#allocation5 + $0x360] sm:$0xff]
        %v634 = vld [vmem:[#allocation5 + $0x368] sm:$0xff]
        %v635 = vld [vmem:[#allocation5 + $0x370] sm:$0xff]
        %v636 = vld [vmem:[#allocation5 + $0x378] sm:$0xff]
        %v637 = vld [vmem:[#allocation5 + $0x380] sm:$0xff]
        %v638 = vld [vmem:[#allocation5 + $0x388] sm:$0xff]
        %v639 = vld [vmem:[#allocation5 + $0x390] sm:$0xff]
        %v640 = vld [vmem:[#allocation5 + $0x398] sm:$0xff]
        %v641 = vld [vmem:[#allocation5 + $0x3a0] sm:$0xff]
        %v642 = vld [vmem:[#allocation5 + $0x3a8] sm:$0xff]
        %v643 = vld [vmem:[#allocation5 + $0x3b0] sm:$0xff]
        %v644 = vld [vmem:[#allocation5 + $0x3b8] sm:$0xff]
        %v645 = vld [vmem:[#allocation5 + $0x3c0] sm:$0xff]
        %v646 = vld [vmem:[#allocation5 + $0x3c8] sm:$0xff]
        %v647 = vld [vmem:[#allocation5 + $0x3d0] sm:$0xff]
        %v648 = vld [vmem:[#allocation5 + $0x3d8] sm:$0xff]
        %v649 = vld [vmem:[#allocation5 + $0x3e0] sm:$0xff]
        %v650 = vld [vmem:[#allocation5 + $0x3e8] sm:$0xff]
        %v651 = vld [vmem:[#allocation5 + $0x3f0] sm:$0xff]
        %v652 = vld [vmem:[#allocation5 + $0x3f8] sm:$0xff]
        %v653 = vld [vmem:[#allocation5 + $0x400] sm:$0xff]
        %v654 = vld [vmem:[#allocation5 + $0x408] sm:$0xff]
        %v655 = vld [vmem:[#allocation5 + $0x410] sm:$0xff]
        %v656 = vld [vmem:[#allocation5 + $0x418] sm:$0xff]
        %v657 = vld [vmem:[#allocation5 + $0x420] sm:$0xff]
        %v658 = vld [vmem:[#allocation5 + $0x428] sm:$0xff]
        %v659 = vld [vmem:[#allocation5 + $0x430] sm:$0xff]
        %v660 = vld [vmem:[#allocation5 + $0x438] sm:$0xff]
        %v661 = vld [vmem:[#allocation5 + $0x440] sm:$0xff]
        %v662 = vld [vmem:[#allocation5 + $0x448] sm:$0xff]
        %v663 = vld [vmem:[#allocation5 + $0x450] sm:$0xff]
        %v664 = vld [vmem:[#allocation5 + $0x458] sm:$0xff]
        %v665 = vld [vmem:[#allocation5 + $0x460] sm:$0xff]
        %v666 = vld [vmem:[#allocation5 + $0x468] sm:$0xff]
        %v667 = vld [vmem:[#allocation5 + $0x470] sm:$0xff]
        %v668 = vld [vmem:[#allocation5 + $0x478] sm:$0xff]
        %v669 = vld [vmem:[#allocation5 + $0x480] sm:$0xff]
        %v670 = vld [vmem:[#allocation5 + $0x488] sm:$0xff]
        %v671 = vld [vmem:[#allocation5 + $0x490] sm:$0xff]
        %v672 = vld [vmem:[#allocation5 + $0x498] sm:$0xff]
        %v673 = vld [vmem:[#allocation5 + $0x4a0] sm:$0xff]
        %v674 = vld [vmem:[#allocation5 + $0x4a8] sm:$0xff]
        %v675 = vld [vmem:[#allocation5 + $0x4b0] sm:$0xff]
        %v676 = vld [vmem:[#allocation5 + $0x4b8] sm:$0xff]
        %v677 = vld [vmem:[#allocation5 + $0x4c0] sm:$0xff]
        %v678 = vld [vmem:[#allocation5 + $0x4c8] sm:$0xff]
        %v679 = vld [vmem:[#allocation5 + $0x4d0] sm:$0xff]
        %v680 = vld [vmem:[#allocation5 + $0x4d8] sm:$0xff]
        %v681 = vld [vmem:[#allocation5 + $0x4e0] sm:$0xff]
        %v682 = vld [vmem:[#allocation5 + $0x4e8] sm:$0xff]
        %v683 = vld [vmem:[#allocation5 + $0x4f0] sm:$0xff]
        %v684 = vld [vmem:[#allocation5 + $0x4f8] sm:$0xff]
        %v685 = vld [vmem:[#allocation5 + $0x500] sm:$0xff]
        %v686 = vld [vmem:[#allocation5 + $0x508] sm:$0xff]
        %v687 = vld [vmem:[#allocation5 + $0x510] sm:$0xff]
        %v688 = vld [vmem:[#allocation5 + $0x518] sm:$0xff]
        %v689 = vld [vmem:[#allocation5 + $0x520] sm:$0xff]
        %v690 = vld [vmem:[#allocation5 + $0x528] sm:$0xff]
        %v691 = vld [vmem:[#allocation5 + $0x530] sm:$0xff]
        %v692 = vld [vmem:[#allocation5 + $0x538] sm:$0xff]
        %v693 = vld [vmem:[#allocation5 + $0x540] sm:$0xff]
        %v694 = vld [vmem:[#allocation5 + $0x548] sm:$0xff]
        %v695 = vld [vmem:[#allocation5 + $0x550] sm:$0xff]
        %v696 = vld [vmem:[#allocation5 + $0x558] sm:$0xff]
        %v697 = vld [vmem:[#allocation5 + $0x560] sm:$0xff]
        %v698 = vld [vmem:[#allocation5 + $0x568] sm:$0xff]
        %v699 = vld [vmem:[#allocation5 + $0x570] sm:$0xff]
        %v700 = vld [vmem:[#allocation5 + $0x578] sm:$0xff]
        %v701 = vld [vmem:[#allocation5 + $0x580] sm:$0xff]
        %v702 = vld [vmem:[#allocation5 + $0x588] sm:$0xff]
        %v703 = vld [vmem:[#allocation5 + $0x590] sm:$0xff]
        %v704 = vld [vmem:[#allocation5 + $0x598] sm:$0xff]
        %v705 = vld [vmem:[#allocation5 + $0x5a0] sm:$0xff]
        %v706 = vld [vmem:[#allocation5 + $0x5a8] sm:$0xff]
        %v707 = vld [vmem:[#allocation5 + $0x5b0] sm:$0xff]
        %v708 = vld [vmem:[#allocation5 + $0x5b8] sm:$0xff]
        %v709 = vld [vmem:[#allocation5 + $0x5c0] sm:$0xff]
        %v710 = vld [vmem:[#allocation5 + $0x5c8] sm:$0xff]
        %v711 = vld [vmem:[#allocation5 + $0x5d0] sm:$0xff]
        %v712 = vld [vmem:[#allocation5 + $0x5d8] sm:$0xff]
        %v713 = vld [vmem:[#allocation5 + $0x5e0] sm:$0xff]
        %v714 = vld [vmem:[#allocation5 + $0x5e8] sm:$0xff]
        %v715 = vld [vmem:[#allocation5 + $0x5f0] sm:$0xff]
        %v716 = vld [vmem:[#allocation5 + $0x5f8] sm:$0xff]
        %v717 = vld [vmem:[#allocation5 + $0x600] sm:$0xff]
        %v718 = vld [vmem:[#allocation5 + $0x608] sm:$0xff]
        %v719 = vld [vmem:[#allocation5 + $0x610] sm:$0xff]
        %v720 = vld [vmem:[#allocation5 + $0x618] sm:$0xff]
        %v721 = vld [vmem:[#allocation5 + $0x620] sm:$0xff]
        %v722 = vld [vmem:[#allocation5 + $0x628] sm:$0xff]
        %v723 = vld [vmem:[#allocation5 + $0x630] sm:$0xff]
        %v724 = vld [vmem:[#allocation5 + $0x638] sm:$0xff]
        %v725 = vld [vmem:[#allocation5 + $0x640] sm:$0xff]
        %v726 = vld [vmem:[#allocation5 + $0x648] sm:$0xff]
        %v727 = vld [vmem:[#allocation5 + $0x650] sm:$0xff]
        %v728 = vld [vmem:[#allocation5 + $0x658] sm:$0xff]
        %v729 = vld [vmem:[#allocation5 + $0x660] sm:$0xff]
        %v730 = vld [vmem:[#allocation5 + $0x668] sm:$0xff]
        %v731 = vld [vmem:[#allocation5 + $0x670] sm:$0xff]
        %v732 = vld [vmem:[#allocation5 + $0x678] sm:$0xff]
        %v733 = vld [vmem:[#allocation5 + $0x680] sm:$0xff]
        %v734 = vld [vmem:[#allocation5 + $0x688] sm:$0xff]
        %v735 = vld [vmem:[#allocation5 + $0x690] sm:$0xff]
        %v736 = vld [vmem:[#allocation5 + $0x698] sm:$0xff]
        %v737 = vld [vmem:[#allocation5 + $0x6a0] sm:$0xff]
        %v738 = vld [vmem:[#allocation5 + $0x6a8] sm:$0xff]
        %v739 = vld [vmem:[#allocation5 + $0x6b0] sm:$0xff]
        %v740 = vld [vmem:[#allocation5 + $0x6b8] sm:$0xff]
        %v741 = vld [vmem:[#allocation5 + $0x6c0] sm:$0xff]
        %v742 = vld [vmem:[#allocation5 + $0x6c8] sm:$0xff]
        %v743 = vld [vmem:[#allocation5 + $0x6d0] sm:$0xff]
        %v744 = vld [vmem:[#allocation5 + $0x6d8] sm:$0xff]
        %v745 = vld [vmem:[#allocation5 + $0x6e0] sm:$0xff]
        %v746 = vld [vmem:[#allocation5 + $0x6e8] sm:$0xff]
        %v747 = vld [vmem:[#allocation5 + $0x6f0] sm:$0xff]
        %v748 = vld [vmem:[#allocation5 + $0x6f8] sm:$0xff]
        %v749 = vld [vmem:[#allocation5 + $0x700] sm:$0xff]
        %v750 = vld [vmem:[#allocation5 + $0x708] sm:$0xff]
        %v751 = vld [vmem:[#allocation5 + $0x710] sm:$0xff]
        %v752 = vld [vmem:[#allocation5 + $0x718] sm:$0xff]
        %v753 = vld [vmem:[#allocation5 + $0x720] sm:$0xff]
        %v754 = vld [vmem:[#allocation5 + $0x728] sm:$0xff]
        %v755 = vld [vmem:[#allocation5 + $0x730] sm:$0xff]
        %v756 = vld [vmem:[#allocation5 + $0x738] sm:$0xff]
        %v757 = vld [vmem:[#allocation5 + $0x740] sm:$0xff]
        %v758 = vld [vmem:[#allocation5 + $0x748] sm:$0xff]
        %v759 = vld [vmem:[#allocation5 + $0x750] sm:$0xff]
        %v760 = vld [vmem:[#allocation5 + $0x758] sm:$0xff]
        %v761 = vld [vmem:[#allocation5 + $0x760] sm:$0xff]
        %v762 = vld [vmem:[#allocation5 + $0x768] sm:$0xff]
        %v763 = vld [vmem:[#allocation5 + $0x770] sm:$0xff]
        %v764 = vld [vmem:[#allocation5 + $0x778] sm:$0xff]
        %v765 = vld [vmem:[#allocation5 + $0x780] sm:$0xff]
        %v766 = vld [vmem:[#allocation5 + $0x788] sm:$0xff]
        %v767 = vld [vmem:[#allocation5 + $0x790] sm:$0xff]
        %v768 = vld [vmem:[#allocation5 + $0x798] sm:$0xff]
        %v769 = vld [vmem:[#allocation5 + $0x7a0] sm:$0xff]
        %v770 = vld [vmem:[#allocation5 + $0x7a8] sm:$0xff]
        %v771 = vld [vmem:[#allocation5 + $0x7b0] sm:$0xff]
        %v772 = vld [vmem:[#allocation5 + $0x7b8] sm:$0xff]
        %v773 = vld [vmem:[#allocation5 + $0x7c0] sm:$0xff]
        %v774 = vld [vmem:[#allocation5 + $0x7c8] sm:$0xff]
        %v775 = vld [vmem:[#allocation5 + $0x7d0] sm:$0xff]
        %v776 = vld [vmem:[#allocation5 + $0x7d8] sm:$0xff]
        %v777 = vld [vmem:[#allocation5 + $0x7e0] sm:$0xff]
        %v778 = vld [vmem:[#allocation5 + $0x7e8] sm:$0xff]
        %v779 = vld [vmem:[#allocation5 + $0x7f0] sm:$0xff]
        %v780 = vld [vmem:[#allocation5 + $0x7f8] sm:$0xff]
        %v781 = vld [vmem:[%s2] sm:$0xff]
        %v782 = vld [vmem:[%s2 + $0x8] sm:$0xff]
        %v783 = vld [vmem:[%s2 + $0x10] sm:$0xff]
        %v784 = vld [vmem:[%s2 + $0x18] sm:$0xff]
        %v785 = vld [vmem:[%s2 + $0x20] sm:$0xff]
        %v786 = vld [vmem:[%s2 + $0x28] sm:$0xff]
        %v787 = vld [vmem:[%s2 + $0x30] sm:$0xff]
        %v788 = vld [vmem:[%s2 + $0x38] sm:$0xff]
        %v789 = vld [vmem:[%s2 + $0x40] sm:$0xff]
        %v790 = vld [vmem:[%s2 + $0x48] sm:$0xff]
        %v791 = vld [vmem:[%s2 + $0x50] sm:$0xff]
        %v792 = vld [vmem:[%s2 + $0x58] sm:$0xff]
        %v793 = vld [vmem:[%s2 + $0x60] sm:$0xff]
        %v794 = vld [vmem:[%s2 + $0x68] sm:$0xff]
        %v795 = vld [vmem:[%s2 + $0x70] sm:$0xff]
        %v796 = vld [vmem:[%s2 + $0x78] sm:$0xff]
        %v797 = vld [vmem:[%s2 + $0x80] sm:$0xff]
        %v798 = vld [vmem:[%s2 + $0x88] sm:$0xff]
        %v799 = vld [vmem:[%s2 + $0x90] sm:$0xff]
        %v800 = vld [vmem:[%s2 + $0x98] sm:$0xff]
        %v801 = vld [vmem:[%s2 + $0xa0] sm:$0xff]
        %v802 = vld [vmem:[%s2 + $0xa8] sm:$0xff]
        %v803 = vld [vmem:[%s2 + $0xb0] sm:$0xff]
        %v804 = vld [vmem:[%s2 + $0xb8] sm:$0xff]
        %v805 = vld [vmem:[%s2 + $0xc0] sm:$0xff]
        %v806 = vld [vmem:[%s2 + $0xc8] sm:$0xff]
        %v807 = vld [vmem:[%s2 + $0xd0] sm:$0xff]
        %v808 = vld [vmem:[%s2 + $0xd8] sm:$0xff]
        %v809 = vld [vmem:[%s2 + $0xe0] sm:$0xff]
        %v810 = vld [vmem:[%s2 + $0xe8] sm:$0xff]
        %v811 = vld [vmem:[%s2 + $0xf0] sm:$0xff]
        %v812 = vld [vmem:[%s2 + $0xf8] sm:$0xff]
        %v813 = vld [vmem:[%s2 + $0x100] sm:$0xff]
        %v814 = vld [vmem:[%s2 + $0x108] sm:$0xff]
        %v815 = vld [vmem:[%s2 + $0x110] sm:$0xff]
        %v816 = vld [vmem:[%s2 + $0x118] sm:$0xff]
        %v817 = vld [vmem:[%s2 + $0x120] sm:$0xff]
        %v818 = vld [vmem:[%s2 + $0x128] sm:$0xff]
        %v819 = vld [vmem:[%s2 + $0x130] sm:$0xff]
        %v820 = vld [vmem:[%s2 + $0x138] sm:$0xff]
        %v821 = vld [vmem:[%s2 + $0x140] sm:$0xff]
        %v822 = vld [vmem:[%s2 + $0x148] sm:$0xff]
        %v823 = vld [vmem:[%s2 + $0x150] sm:$0xff]
        %v824 = vld [vmem:[%s2 + $0x158] sm:$0xff]
        %v825 = vld [vmem:[%s2 + $0x160] sm:$0xff]
        %v826 = vld [vmem:[%s2 + $0x168] sm:$0xff]
        %v827 = vld [vmem:[%s2 + $0x170] sm:$0xff]
        %v828 = vld [vmem:[%s2 + $0x178] sm:$0xff]
        %v829 = vld [vmem:[%s2 + $0x180] sm:$0xff]
        %v830 = vld [vmem:[%s2 + $0x188] sm:$0xff]
        %v831 = vld [vmem:[%s2 + $0x190] sm:$0xff]
        %v832 = vld [vmem:[%s2 + $0x198] sm:$0xff]
        %v833 = vld [vmem:[%s2 + $0x1a0] sm:$0xff]
        %v834 = vld [vmem:[%s2 + $0x1a8] sm:$0xff]
        %v835 = vld [vmem:[%s2 + $0x1b0] sm:$0xff]
        %v836 = vld [vmem:[%s2 + $0x1b8] sm:$0xff]
        %v837 = vld [vmem:[%s2 + $0x1c0] sm:$0xff]
        %v838 = vld [vmem:[%s2 + $0x1c8] sm:$0xff]
        %v839 = vld [vmem:[%s2 + $0x1d0] sm:$0xff]
        %v840 = vld [vmem:[%s2 + $0x1d8] sm:$0xff]
        %v841 = vld [vmem:[%s2 + $0x1e0] sm:$0xff]
        %v842 = vld [vmem:[%s2 + $0x1e8] sm:$0xff]
        %v843 = vld [vmem:[%s2 + $0x1f0] sm:$0xff]
        %v844 = vld [vmem:[%s2 + $0x1f8] sm:$0xff]
        %846 = vset.pattern.permute.xlu0 0
        %847 = vperm.xlu0 %846, %v781
        %v848 = vpop.permute.xlu0 %847
        %851 = vset.pattern.permute.xlu0 0
        %852 = vperm.xlu0 %851, %v782
        %v853 = vpop.permute.xlu0 %852
        %856 = vset.pattern.permute.xlu0 0
        %857 = vperm.xlu0 %856, %v783
        %v858 = vpop.permute.xlu0 %857
        %861 = vset.pattern.permute.xlu0 0
        %862 = vperm.xlu0 %861, %v784
        %v863 = vpop.permute.xlu0 %862
        %866 = vset.pattern.permute.xlu0 0
        %867 = vperm.xlu0 %866, %v785
        %v868 = vpop.permute.xlu0 %867
        %871 = vset.pattern.permute.xlu0 0
        %872 = vperm.xlu0 %871, %v786
        %v873 = vpop.permute.xlu0 %872
        %876 = vset.pattern.permute.xlu0 0
        %877 = vperm.xlu0 %876, %v787
        %v878 = vpop.permute.xlu0 %877
        %881 = vset.pattern.permute.xlu0 0
        %882 = vperm.xlu0 %881, %v788
        %v883 = vpop.permute.xlu0 %882
        %886 = vset.pattern.permute.xlu0 0
        %887 = vperm.xlu0 %886, %v789
        %v888 = vpop.permute.xlu0 %887
        %891 = vset.pattern.permute.xlu0 0
        %892 = vperm.xlu0 %891, %v790
        %v893 = vpop.permute.xlu0 %892
        %896 = vset.pattern.permute.xlu0 0
        %897 = vperm.xlu0 %896, %v791
        %v898 = vpop.permute.xlu0 %897
        %901 = vset.pattern.permute.xlu0 0
        %902 = vperm.xlu0 %901, %v792
        %v903 = vpop.permute.xlu0 %902
        %906 = vset.pattern.permute.xlu0 0
        %907 = vperm.xlu0 %906, %v793
        %v908 = vpop.permute.xlu0 %907
        %911 = vset.pattern.permute.xlu0 0
        %912 = vperm.xlu0 %911, %v794
        %v913 = vpop.permute.xlu0 %912
        %916 = vset.pattern.permute.xlu0 0
        %917 = vperm.xlu0 %916, %v795
        %v918 = vpop.permute.xlu0 %917
        %921 = vset.pattern.permute.xlu0 0
        %922 = vperm.xlu0 %921, %v796
        %v923 = vpop.permute.xlu0 %922
        %926 = vset.pattern.permute.xlu0 0
        %927 = vperm.xlu0 %926, %v797
        %v928 = vpop.permute.xlu0 %927
        %931 = vset.pattern.permute.xlu0 0
        %932 = vperm.xlu0 %931, %v798
        %v933 = vpop.permute.xlu0 %932
        %936 = vset.pattern.permute.xlu0 0
        %937 = vperm.xlu0 %936, %v799
        %v938 = vpop.permute.xlu0 %937
        %941 = vset.pattern.permute.xlu0 0
        %942 = vperm.xlu0 %941, %v800
        %v943 = vpop.permute.xlu0 %942
        %946 = vset.pattern.permute.xlu0 0
        %947 = vperm.xlu0 %946, %v801
        %v948 = vpop.permute.xlu0 %947
        %951 = vset.pattern.permute.xlu0 0
        %952 = vperm.xlu0 %951, %v802
        %v953 = vpop.permute.xlu0 %952
        %956 = vset.pattern.permute.xlu0 0
        %957 = vperm.xlu0 %956, %v803
        %v958 = vpop.permute.xlu0 %957
        %961 = vset.pattern.permute.xlu0 0
        %962 = vperm.xlu0 %961, %v804
        %v963 = vpop.permute.xlu0 %962
        %966 = vset.pattern.permute.xlu0 0
        %967 = vperm.xlu0 %966, %v805
        %v968 = vpop.permute.xlu0 %967
        %971 = vset.pattern.permute.xlu0 0
        %972 = vperm.xlu0 %971, %v806
        %v973 = vpop.permute.xlu0 %972
        %976 = vset.pattern.permute.xlu0 0
        %977 = vperm.xlu0 %976, %v807
        %v978 = vpop.permute.xlu0 %977
        %981 = vset.pattern.permute.xlu0 0
        %982 = vperm.xlu0 %981, %v808
        %v983 = vpop.permute.xlu0 %982
        %986 = vset.pattern.permute.xlu0 0
        %987 = vperm.xlu0 %986, %v809
        %v988 = vpop.permute.xlu0 %987
        %991 = vset.pattern.permute.xlu0 0
        %992 = vperm.xlu0 %991, %v810
        %v993 = vpop.permute.xlu0 %992
        %996 = vset.pattern.permute.xlu0 0
        %997 = vperm.xlu0 %996, %v811
        %v998 = vpop.permute.xlu0 %997
        %1001 = vset.pattern.permute.xlu0 0
        %1002 = vperm.xlu0 %1001, %v812
        %v1003 = vpop.permute.xlu0 %1002
        %1006 = vset.pattern.permute.xlu0 0
        %1007 = vperm.xlu0 %1006, %v813
        %v1008 = vpop.permute.xlu0 %1007
        %1011 = vset.pattern.permute.xlu0 0
        %1012 = vperm.xlu0 %1011, %v814
        %v1013 = vpop.permute.xlu0 %1012
        %1016 = vset.pattern.permute.xlu0 0
        %1017 = vperm.xlu0 %1016, %v815
        %v1018 = vpop.permute.xlu0 %1017
        %1021 = vset.pattern.permute.xlu0 0
        %1022 = vperm.xlu0 %1021, %v816
        %v1023 = vpop.permute.xlu0 %1022
        %1026 = vset.pattern.permute.xlu0 0
        %1027 = vperm.xlu0 %1026, %v817
        %v1028 = vpop.permute.xlu0 %1027
        %1031 = vset.pattern.permute.xlu0 0
        %1032 = vperm.xlu0 %1031, %v818
        %v1033 = vpop.permute.xlu0 %1032
        %1036 = vset.pattern.permute.xlu0 0
        %1037 = vperm.xlu0 %1036, %v819
        %v1038 = vpop.permute.xlu0 %1037
        %1041 = vset.pattern.permute.xlu0 0
        %1042 = vperm.xlu0 %1041, %v820
        %v1043 = vpop.permute.xlu0 %1042
        %1046 = vset.pattern.permute.xlu0 0
        %1047 = vperm.xlu0 %1046, %v821
        %v1048 = vpop.permute.xlu0 %1047
        %1051 = vset.pattern.permute.xlu0 0
        %1052 = vperm.xlu0 %1051, %v822
        %v1053 = vpop.permute.xlu0 %1052
        %1056 = vset.pattern.permute.xlu0 0
        %1057 = vperm.xlu0 %1056, %v823
        %v1058 = vpop.permute.xlu0 %1057
        %1061 = vset.pattern.permute.xlu0 0
        %1062 = vperm.xlu0 %1061, %v824
        %v1063 = vpop.permute.xlu0 %1062
        %1066 = vset.pattern.permute.xlu0 0
        %1067 = vperm.xlu0 %1066, %v825
        %v1068 = vpop.permute.xlu0 %1067
        %1071 = vset.pattern.permute.xlu0 0
        %1072 = vperm.xlu0 %1071, %v826
        %v1073 = vpop.permute.xlu0 %1072
        %1076 = vset.pattern.permute.xlu0 0
        %1077 = vperm.xlu0 %1076, %v827
        %v1078 = vpop.permute.xlu0 %1077
        %1081 = vset.pattern.permute.xlu0 0
        %1082 = vperm.xlu0 %1081, %v828
        %v1083 = vpop.permute.xlu0 %1082
        %1086 = vset.pattern.permute.xlu0 0
        %1087 = vperm.xlu0 %1086, %v829
        %v1088 = vpop.permute.xlu0 %1087
        %1091 = vset.pattern.permute.xlu0 0
        %1092 = vperm.xlu0 %1091, %v830
        %v1093 = vpop.permute.xlu0 %1092
        %1096 = vset.pattern.permute.xlu0 0
        %1097 = vperm.xlu0 %1096, %v831
        %v1098 = vpop.permute.xlu0 %1097
        %1101 = vset.pattern.permute.xlu0 0
        %1102 = vperm.xlu0 %1101, %v832
        %v1103 = vpop.permute.xlu0 %1102
        %1106 = vset.pattern.permute.xlu0 0
        %1107 = vperm.xlu0 %1106, %v833
        %v1108 = vpop.permute.xlu0 %1107
        %1111 = vset.pattern.permute.xlu0 0
        %1112 = vperm.xlu0 %1111, %v834
        %v1113 = vpop.permute.xlu0 %1112
        %1116 = vset.pattern.permute.xlu0 0
        %1117 = vperm.xlu0 %1116, %v835
        %v1118 = vpop.permute.xlu0 %1117
        %1121 = vset.pattern.permute.xlu0 0
        %1122 = vperm.xlu0 %1121, %v836
        %v1123 = vpop.permute.xlu0 %1122
        %1126 = vset.pattern.permute.xlu0 0
        %1127 = vperm.xlu0 %1126, %v837
        %v1128 = vpop.permute.xlu0 %1127
        %1131 = vset.pattern.permute.xlu0 0
        %1132 = vperm.xlu0 %1131, %v838
        %v1133 = vpop.permute.xlu0 %1132
        %1136 = vset.pattern.permute.xlu0 0
        %1137 = vperm.xlu0 %1136, %v839
        %v1138 = vpop.permute.xlu0 %1137
        %1141 = vset.pattern.permute.xlu0 0
        %1142 = vperm.xlu0 %1141, %v840
        %v1143 = vpop.permute.xlu0 %1142
        %1146 = vset.pattern.permute.xlu0 0
        %1147 = vperm.xlu0 %1146, %v841
        %v1148 = vpop.permute.xlu0 %1147
        %1151 = vset.pattern.permute.xlu0 0
        %1152 = vperm.xlu0 %1151, %v842
        %v1153 = vpop.permute.xlu0 %1152
        %1156 = vset.pattern.permute.xlu0 0
        %1157 = vperm.xlu0 %1156, %v843
        %v1158 = vpop.permute.xlu0 %1157
        %1161 = vset.pattern.permute.xlu0 0
        %1162 = vperm.xlu0 %1161, %v844
        %v1163 = vpop.permute.xlu0 %1162
        %v1421 = vunpack.c.l.b16 %v525
        %v1422 = vunpack.c.h.b16 %v525
        %v1423 = vunpack.c.l.b16 %v526
        %v1424 = vunpack.c.h.b16 %v526
        %v1425 = vunpack.c.l.b16 %v527
        %v1426 = vunpack.c.h.b16 %v527
        %v1427 = vunpack.c.l.b16 %v528
        %v1428 = vunpack.c.h.b16 %v528
        %v1429 = vunpack.c.l.b16 %v529
        %v1430 = vunpack.c.h.b16 %v529
        %v1431 = vunpack.c.l.b16 %v530
        %v1432 = vunpack.c.h.b16 %v530
        %v1433 = vunpack.c.l.b16 %v531
        %v1434 = vunpack.c.h.b16 %v531
        %v1435 = vunpack.c.l.b16 %v532
        %v1436 = vunpack.c.h.b16 %v532
        %v1437 = vunpack.c.l.b16 %v533
        %v1438 = vunpack.c.h.b16 %v533
        %v1439 = vunpack.c.l.b16 %v534
        %v1440 = vunpack.c.h.b16 %v534
        %v1441 = vunpack.c.l.b16 %v535
        %v1442 = vunpack.c.h.b16 %v535
        %v1443 = vunpack.c.l.b16 %v536
        %v1444 = vunpack.c.h.b16 %v536
        %v1445 = vunpack.c.l.b16 %v537
        %v1446 = vunpack.c.h.b16 %v537
        %v1447 = vunpack.c.l.b16 %v538
        %v1448 = vunpack.c.h.b16 %v538
        %v1449 = vunpack.c.l.b16 %v539
        %v1450 = vunpack.c.h.b16 %v539
        %v1451 = vunpack.c.l.b16 %v540
        %v1452 = vunpack.c.h.b16 %v540
        %v1453 = vunpack.c.l.b16 %v541
        %v1454 = vunpack.c.h.b16 %v541
        %v1455 = vunpack.c.l.b16 %v542
        %v1456 = vunpack.c.h.b16 %v542
        %v1457 = vunpack.c.l.b16 %v543
        %v1458 = vunpack.c.h.b16 %v543
        %v1459 = vunpack.c.l.b16 %v544
        %v1460 = vunpack.c.h.b16 %v544
        %v1461 = vunpack.c.l.b16 %v545
        %v1462 = vunpack.c.h.b16 %v545
        %v1463 = vunpack.c.l.b16 %v546
        %v1464 = vunpack.c.h.b16 %v546
        %v1465 = vunpack.c.l.b16 %v547
        %v1466 = vunpack.c.h.b16 %v547
        %v1467 = vunpack.c.l.b16 %v548
        %v1468 = vunpack.c.h.b16 %v548
        %v1469 = vunpack.c.l.b16 %v549
        %v1470 = vunpack.c.h.b16 %v549
        %v1471 = vunpack.c.l.b16 %v550
        %v1472 = vunpack.c.h.b16 %v550
        %v1473 = vunpack.c.l.b16 %v551
        %v1474 = vunpack.c.h.b16 %v551
        %v1475 = vunpack.c.l.b16 %v552
        %v1476 = vunpack.c.h.b16 %v552
        %v1477 = vunpack.c.l.b16 %v553
        %v1478 = vunpack.c.h.b16 %v553
        %v1479 = vunpack.c.l.b16 %v554
        %v1480 = vunpack.c.h.b16 %v554
        %v1481 = vunpack.c.l.b16 %v555
        %v1482 = vunpack.c.h.b16 %v555
        %v1483 = vunpack.c.l.b16 %v556
        %v1484 = vunpack.c.h.b16 %v556
        %v1485 = vunpack.c.l.b16 %v557
        %v1486 = vunpack.c.h.b16 %v557
        %v1487 = vunpack.c.l.b16 %v558
        %v1488 = vunpack.c.h.b16 %v558
        %v1489 = vunpack.c.l.b16 %v559
        %v1490 = vunpack.c.h.b16 %v559
        %v1491 = vunpack.c.l.b16 %v560
        %v1492 = vunpack.c.h.b16 %v560
        %v1493 = vunpack.c.l.b16 %v561
        %v1494 = vunpack.c.h.b16 %v561
        %v1495 = vunpack.c.l.b16 %v562
        %v1496 = vunpack.c.h.b16 %v562
        %v1497 = vunpack.c.l.b16 %v563
        %v1498 = vunpack.c.h.b16 %v563
        %v1499 = vunpack.c.l.b16 %v564
        %v1500 = vunpack.c.h.b16 %v564
        %v1501 = vunpack.c.l.b16 %v565
        %v1502 = vunpack.c.h.b16 %v565
        %v1503 = vunpack.c.l.b16 %v566
        %v1504 = vunpack.c.h.b16 %v566
        %v1505 = vunpack.c.l.b16 %v567
        %v1506 = vunpack.c.h.b16 %v567
        %v1507 = vunpack.c.l.b16 %v568
        %v1508 = vunpack.c.h.b16 %v568
        %v1509 = vunpack.c.l.b16 %v569
        %v1510 = vunpack.c.h.b16 %v569
        %v1511 = vunpack.c.l.b16 %v570
        %v1512 = vunpack.c.h.b16 %v570
        %v1513 = vunpack.c.l.b16 %v571
        %v1514 = vunpack.c.h.b16 %v571
        %v1515 = vunpack.c.l.b16 %v572
        %v1516 = vunpack.c.h.b16 %v572
        %v1517 = vunpack.c.l.b16 %v573
        %v1518 = vunpack.c.h.b16 %v573
        %v1519 = vunpack.c.l.b16 %v574
        %v1520 = vunpack.c.h.b16 %v574
        %v1521 = vunpack.c.l.b16 %v575
        %v1522 = vunpack.c.h.b16 %v575
        %v1523 = vunpack.c.l.b16 %v576
        %v1524 = vunpack.c.h.b16 %v576
        %v1525 = vunpack.c.l.b16 %v577
        %v1526 = vunpack.c.h.b16 %v577
        %v1527 = vunpack.c.l.b16 %v578
        %v1528 = vunpack.c.h.b16 %v578
        %v1529 = vunpack.c.l.b16 %v579
        %v1530 = vunpack.c.h.b16 %v579
        %v1531 = vunpack.c.l.b16 %v580
        %v1532 = vunpack.c.h.b16 %v580
        %v1533 = vunpack.c.l.b16 %v581
        %v1534 = vunpack.c.h.b16 %v581
        %v1535 = vunpack.c.l.b16 %v582
        %v1536 = vunpack.c.h.b16 %v582
        %v1537 = vunpack.c.l.b16 %v583
        %v1538 = vunpack.c.h.b16 %v583
        %v1539 = vunpack.c.l.b16 %v584
        %v1540 = vunpack.c.h.b16 %v584
        %v1541 = vunpack.c.l.b16 %v585
        %v1542 = vunpack.c.h.b16 %v585
        %v1543 = vunpack.c.l.b16 %v586
        %v1544 = vunpack.c.h.b16 %v586
        %v1545 = vunpack.c.l.b16 %v587
        %v1546 = vunpack.c.h.b16 %v587
        %v1547 = vunpack.c.l.b16 %v588
        %v1548 = vunpack.c.h.b16 %v588
        %v1549 = vunpack.c.l.b16 %v589
        %v1550 = vunpack.c.h.b16 %v589
        %v1551 = vunpack.c.l.b16 %v590
        %v1552 = vunpack.c.h.b16 %v590
        %v1553 = vunpack.c.l.b16 %v591
        %v1554 = vunpack.c.h.b16 %v591
        %v1555 = vunpack.c.l.b16 %v592
        %v1556 = vunpack.c.h.b16 %v592
        %v1557 = vunpack.c.l.b16 %v593
        %v1558 = vunpack.c.h.b16 %v593
        %v1559 = vunpack.c.l.b16 %v594
        %v1560 = vunpack.c.h.b16 %v594
        %v1561 = vunpack.c.l.b16 %v595
        %v1562 = vunpack.c.h.b16 %v595
        %v1563 = vunpack.c.l.b16 %v596
        %v1564 = vunpack.c.h.b16 %v596
        %v1565 = vunpack.c.l.b16 %v597
        %v1566 = vunpack.c.h.b16 %v597
        %v1567 = vunpack.c.l.b16 %v598
        %v1568 = vunpack.c.h.b16 %v598
        %v1569 = vunpack.c.l.b16 %v599
        %v1570 = vunpack.c.h.b16 %v599
        %v1571 = vunpack.c.l.b16 %v600
        %v1572 = vunpack.c.h.b16 %v600
        %v1573 = vunpack.c.l.b16 %v601
        %v1574 = vunpack.c.h.b16 %v601
        %v1575 = vunpack.c.l.b16 %v602
        %v1576 = vunpack.c.h.b16 %v602
        %v1577 = vunpack.c.l.b16 %v603
        %v1578 = vunpack.c.h.b16 %v603
        %v1579 = vunpack.c.l.b16 %v604
        %v1580 = vunpack.c.h.b16 %v604
        %v1581 = vunpack.c.l.b16 %v605
        %v1582 = vunpack.c.h.b16 %v605
        %v1583 = vunpack.c.l.b16 %v606
        %v1584 = vunpack.c.h.b16 %v606
        %v1585 = vunpack.c.l.b16 %v607
        %v1586 = vunpack.c.h.b16 %v607
        %v1587 = vunpack.c.l.b16 %v608
        %v1588 = vunpack.c.h.b16 %v608
        %v1589 = vunpack.c.l.b16 %v609
        %v1590 = vunpack.c.h.b16 %v609
        %v1591 = vunpack.c.l.b16 %v610
        %v1592 = vunpack.c.h.b16 %v610
        %v1593 = vunpack.c.l.b16 %v611
        %v1594 = vunpack.c.h.b16 %v611
        %v1595 = vunpack.c.l.b16 %v612
        %v1596 = vunpack.c.h.b16 %v612
        %v1597 = vunpack.c.l.b16 %v613
        %v1598 = vunpack.c.h.b16 %v613
        %v1599 = vunpack.c.l.b16 %v614
        %v1600 = vunpack.c.h.b16 %v614
        %v1601 = vunpack.c.l.b16 %v615
        %v1602 = vunpack.c.h.b16 %v615
        %v1603 = vunpack.c.l.b16 %v616
        %v1604 = vunpack.c.h.b16 %v616
        %v1605 = vunpack.c.l.b16 %v617
        %v1606 = vunpack.c.h.b16 %v617
        %v1607 = vunpack.c.l.b16 %v618
        %v1608 = vunpack.c.h.b16 %v618
        %v1609 = vunpack.c.l.b16 %v619
        %v1610 = vunpack.c.h.b16 %v619
        %v1611 = vunpack.c.l.b16 %v620
        %v1612 = vunpack.c.h.b16 %v620
        %v1613 = vunpack.c.l.b16 %v621
        %v1614 = vunpack.c.h.b16 %v621
        %v1615 = vunpack.c.l.b16 %v622
        %v1616 = vunpack.c.h.b16 %v622
        %v1617 = vunpack.c.l.b16 %v623
        %v1618 = vunpack.c.h.b16 %v623
        %v1619 = vunpack.c.l.b16 %v624
        %v1620 = vunpack.c.h.b16 %v624
        %v1621 = vunpack.c.l.b16 %v625
        %v1622 = vunpack.c.h.b16 %v625
        %v1623 = vunpack.c.l.b16 %v626
        %v1624 = vunpack.c.h.b16 %v626
        %v1625 = vunpack.c.l.b16 %v627
        %v1626 = vunpack.c.h.b16 %v627
        %v1627 = vunpack.c.l.b16 %v628
        %v1628 = vunpack.c.h.b16 %v628
        %v1629 = vunpack.c.l.b16 %v629
        %v1630 = vunpack.c.h.b16 %v629
        %v1631 = vunpack.c.l.b16 %v630
        %v1632 = vunpack.c.h.b16 %v630
        %v1633 = vunpack.c.l.b16 %v631
        %v1634 = vunpack.c.h.b16 %v631
        %v1635 = vunpack.c.l.b16 %v632
        %v1636 = vunpack.c.h.b16 %v632
        %v1637 = vunpack.c.l.b16 %v633
        %v1638 = vunpack.c.h.b16 %v633
        %v1639 = vunpack.c.l.b16 %v634
        %v1640 = vunpack.c.h.b16 %v634
        %v1641 = vunpack.c.l.b16 %v635
        %v1642 = vunpack.c.h.b16 %v635
        %v1643 = vunpack.c.l.b16 %v636
        %v1644 = vunpack.c.h.b16 %v636
        %v1645 = vunpack.c.l.b16 %v637
        %v1646 = vunpack.c.h.b16 %v637
        %v1647 = vunpack.c.l.b16 %v638
        %v1648 = vunpack.c.h.b16 %v638
        %v1649 = vunpack.c.l.b16 %v639
        %v1650 = vunpack.c.h.b16 %v639
        %v1651 = vunpack.c.l.b16 %v640
        %v1652 = vunpack.c.h.b16 %v640
        %v1653 = vunpack.c.l.b16 %v641
        %v1654 = vunpack.c.h.b16 %v641
        %v1655 = vunpack.c.l.b16 %v642
        %v1656 = vunpack.c.h.b16 %v642
        %v1657 = vunpack.c.l.b16 %v643
        %v1658 = vunpack.c.h.b16 %v643
        %v1659 = vunpack.c.l.b16 %v644
        %v1660 = vunpack.c.h.b16 %v644
        %v1661 = vunpack.c.l.b16 %v645
        %v1662 = vunpack.c.h.b16 %v645
        %v1663 = vunpack.c.l.b16 %v646
        %v1664 = vunpack.c.h.b16 %v646
        %v1665 = vunpack.c.l.b16 %v647
        %v1666 = vunpack.c.h.b16 %v647
        %v1667 = vunpack.c.l.b16 %v648
        %v1668 = vunpack.c.h.b16 %v648
        %v1669 = vunpack.c.l.b16 %v649
        %v1670 = vunpack.c.h.b16 %v649
        %v1671 = vunpack.c.l.b16 %v650
        %v1672 = vunpack.c.h.b16 %v650
        %v1673 = vunpack.c.l.b16 %v651
        %v1674 = vunpack.c.h.b16 %v651
        %v1675 = vunpack.c.l.b16 %v652
        %v1676 = vunpack.c.h.b16 %v652
        %v1677 = vunpack.c.l.b16 %v653
        %v1678 = vunpack.c.h.b16 %v653
        %v1679 = vunpack.c.l.b16 %v654
        %v1680 = vunpack.c.h.b16 %v654
        %v1681 = vunpack.c.l.b16 %v655
        %v1682 = vunpack.c.h.b16 %v655
        %v1683 = vunpack.c.l.b16 %v656
        %v1684 = vunpack.c.h.b16 %v656
        %v1685 = vunpack.c.l.b16 %v657
        %v1686 = vunpack.c.h.b16 %v657
        %v1687 = vunpack.c.l.b16 %v658
        %v1688 = vunpack.c.h.b16 %v658
        %v1689 = vunpack.c.l.b16 %v659
        %v1690 = vunpack.c.h.b16 %v659
        %v1691 = vunpack.c.l.b16 %v660
        %v1692 = vunpack.c.h.b16 %v660
        %v1693 = vunpack.c.l.b16 %v661
        %v1694 = vunpack.c.h.b16 %v661
        %v1695 = vunpack.c.l.b16 %v662
        %v1696 = vunpack.c.h.b16 %v662
        %v1697 = vunpack.c.l.b16 %v663
        %v1698 = vunpack.c.h.b16 %v663
        %v1699 = vunpack.c.l.b16 %v664
        %v1700 = vunpack.c.h.b16 %v664
        %v1701 = vunpack.c.l.b16 %v665
        %v1702 = vunpack.c.h.b16 %v665
        %v1703 = vunpack.c.l.b16 %v666
        %v1704 = vunpack.c.h.b16 %v666
        %v1705 = vunpack.c.l.b16 %v667
        %v1706 = vunpack.c.h.b16 %v667
        %v1707 = vunpack.c.l.b16 %v668
        %v1708 = vunpack.c.h.b16 %v668
        %v1709 = vunpack.c.l.b16 %v669
        %v1710 = vunpack.c.h.b16 %v669
        %v1711 = vunpack.c.l.b16 %v670
        %v1712 = vunpack.c.h.b16 %v670
        %v1713 = vunpack.c.l.b16 %v671
        %v1714 = vunpack.c.h.b16 %v671
        %v1715 = vunpack.c.l.b16 %v672
        %v1716 = vunpack.c.h.b16 %v672
        %v1717 = vunpack.c.l.b16 %v673
        %v1718 = vunpack.c.h.b16 %v673
        %v1719 = vunpack.c.l.b16 %v674
        %v1720 = vunpack.c.h.b16 %v674
        %v1721 = vunpack.c.l.b16 %v675
        %v1722 = vunpack.c.h.b16 %v675
        %v1723 = vunpack.c.l.b16 %v676
        %v1724 = vunpack.c.h.b16 %v676
        %v1725 = vunpack.c.l.b16 %v677
        %v1726 = vunpack.c.h.b16 %v677
        %v1727 = vunpack.c.l.b16 %v678
        %v1728 = vunpack.c.h.b16 %v678
        %v1729 = vunpack.c.l.b16 %v679
        %v1730 = vunpack.c.h.b16 %v679
        %v1731 = vunpack.c.l.b16 %v680
        %v1732 = vunpack.c.h.b16 %v680
        %v1733 = vunpack.c.l.b16 %v681
        %v1734 = vunpack.c.h.b16 %v681
        %v1735 = vunpack.c.l.b16 %v682
        %v1736 = vunpack.c.h.b16 %v682
        %v1737 = vunpack.c.l.b16 %v683
        %v1738 = vunpack.c.h.b16 %v683
        %v1739 = vunpack.c.l.b16 %v684
        %v1740 = vunpack.c.h.b16 %v684
        %v1741 = vunpack.c.l.b16 %v685
        %v1742 = vunpack.c.h.b16 %v685
        %v1743 = vunpack.c.l.b16 %v686
        %v1744 = vunpack.c.h.b16 %v686
        %v1745 = vunpack.c.l.b16 %v687
        %v1746 = vunpack.c.h.b16 %v687
        %v1747 = vunpack.c.l.b16 %v688
        %v1748 = vunpack.c.h.b16 %v688
        %v1749 = vunpack.c.l.b16 %v689
        %v1750 = vunpack.c.h.b16 %v689
        %v1751 = vunpack.c.l.b16 %v690
        %v1752 = vunpack.c.h.b16 %v690
        %v1753 = vunpack.c.l.b16 %v691
        %v1754 = vunpack.c.h.b16 %v691
        %v1755 = vunpack.c.l.b16 %v692
        %v1756 = vunpack.c.h.b16 %v692
        %v1757 = vunpack.c.l.b16 %v693
        %v1758 = vunpack.c.h.b16 %v693
        %v1759 = vunpack.c.l.b16 %v694
        %v1760 = vunpack.c.h.b16 %v694
        %v1761 = vunpack.c.l.b16 %v695
        %v1762 = vunpack.c.h.b16 %v695
        %v1763 = vunpack.c.l.b16 %v696
        %v1764 = vunpack.c.h.b16 %v696
        %v1765 = vunpack.c.l.b16 %v697
        %v1766 = vunpack.c.h.b16 %v697
        %v1767 = vunpack.c.l.b16 %v698
        %v1768 = vunpack.c.h.b16 %v698
        %v1769 = vunpack.c.l.b16 %v699
        %v1770 = vunpack.c.h.b16 %v699
        %v1771 = vunpack.c.l.b16 %v700
        %v1772 = vunpack.c.h.b16 %v700
        %v1773 = vunpack.c.l.b16 %v701
        %v1774 = vunpack.c.h.b16 %v701
        %v1775 = vunpack.c.l.b16 %v702
        %v1776 = vunpack.c.h.b16 %v702
        %v1777 = vunpack.c.l.b16 %v703
        %v1778 = vunpack.c.h.b16 %v703
        %v1779 = vunpack.c.l.b16 %v704
        %v1780 = vunpack.c.h.b16 %v704
        %v1781 = vunpack.c.l.b16 %v705
        %v1782 = vunpack.c.h.b16 %v705
        %v1783 = vunpack.c.l.b16 %v706
        %v1784 = vunpack.c.h.b16 %v706
        %v1785 = vunpack.c.l.b16 %v707
        %v1786 = vunpack.c.h.b16 %v707
        %v1787 = vunpack.c.l.b16 %v708
        %v1788 = vunpack.c.h.b16 %v708
        %v1789 = vunpack.c.l.b16 %v709
        %v1790 = vunpack.c.h.b16 %v709
        %v1791 = vunpack.c.l.b16 %v710
        %v1792 = vunpack.c.h.b16 %v710
        %v1793 = vunpack.c.l.b16 %v711
        %v1794 = vunpack.c.h.b16 %v711
        %v1795 = vunpack.c.l.b16 %v712
        %v1796 = vunpack.c.h.b16 %v712
        %v1797 = vunpack.c.l.b16 %v713
        %v1798 = vunpack.c.h.b16 %v713
        %v1799 = vunpack.c.l.b16 %v714
        %v1800 = vunpack.c.h.b16 %v714
        %v1801 = vunpack.c.l.b16 %v715
        %v1802 = vunpack.c.h.b16 %v715
        %v1803 = vunpack.c.l.b16 %v716
        %v1804 = vunpack.c.h.b16 %v716
        %v1805 = vunpack.c.l.b16 %v717
        %v1806 = vunpack.c.h.b16 %v717
        %v1807 = vunpack.c.l.b16 %v718
        %v1808 = vunpack.c.h.b16 %v718
        %v1809 = vunpack.c.l.b16 %v719
        %v1810 = vunpack.c.h.b16 %v719
        %v1811 = vunpack.c.l.b16 %v720
        %v1812 = vunpack.c.h.b16 %v720
        %v1813 = vunpack.c.l.b16 %v721
        %v1814 = vunpack.c.h.b16 %v721
        %v1815 = vunpack.c.l.b16 %v722
        %v1816 = vunpack.c.h.b16 %v722
        %v1817 = vunpack.c.l.b16 %v723
        %v1818 = vunpack.c.h.b16 %v723
        %v1819 = vunpack.c.l.b16 %v724
        %v1820 = vunpack.c.h.b16 %v724
        %v1821 = vunpack.c.l.b16 %v725
        %v1822 = vunpack.c.h.b16 %v725
        %v1823 = vunpack.c.l.b16 %v726
        %v1824 = vunpack.c.h.b16 %v726
        %v1825 = vunpack.c.l.b16 %v727
        %v1826 = vunpack.c.h.b16 %v727
        %v1827 = vunpack.c.l.b16 %v728
        %v1828 = vunpack.c.h.b16 %v728
        %v1829 = vunpack.c.l.b16 %v729
        %v1830 = vunpack.c.h.b16 %v729
        %v1831 = vunpack.c.l.b16 %v730
        %v1832 = vunpack.c.h.b16 %v730
        %v1833 = vunpack.c.l.b16 %v731
        %v1834 = vunpack.c.h.b16 %v731
        %v1835 = vunpack.c.l.b16 %v732
        %v1836 = vunpack.c.h.b16 %v732
        %v1837 = vunpack.c.l.b16 %v733
        %v1838 = vunpack.c.h.b16 %v733
        %v1839 = vunpack.c.l.b16 %v734
        %v1840 = vunpack.c.h.b16 %v734
        %v1841 = vunpack.c.l.b16 %v735
        %v1842 = vunpack.c.h.b16 %v735
        %v1843 = vunpack.c.l.b16 %v736
        %v1844 = vunpack.c.h.b16 %v736
        %v1845 = vunpack.c.l.b16 %v737
        %v1846 = vunpack.c.h.b16 %v737
        %v1847 = vunpack.c.l.b16 %v738
        %v1848 = vunpack.c.h.b16 %v738
        %v1849 = vunpack.c.l.b16 %v739
        %v1850 = vunpack.c.h.b16 %v739
        %v1851 = vunpack.c.l.b16 %v740
        %v1852 = vunpack.c.h.b16 %v740
        %v1853 = vunpack.c.l.b16 %v741
        %v1854 = vunpack.c.h.b16 %v741
        %v1855 = vunpack.c.l.b16 %v742
        %v1856 = vunpack.c.h.b16 %v742
        %v1857 = vunpack.c.l.b16 %v743
        %v1858 = vunpack.c.h.b16 %v743
        %v1859 = vunpack.c.l.b16 %v744
        %v1860 = vunpack.c.h.b16 %v744
        %v1861 = vunpack.c.l.b16 %v745
        %v1862 = vunpack.c.h.b16 %v745
        %v1863 = vunpack.c.l.b16 %v746
        %v1864 = vunpack.c.h.b16 %v746
        %v1865 = vunpack.c.l.b16 %v747
        %v1866 = vunpack.c.h.b16 %v747
        %v1867 = vunpack.c.l.b16 %v748
        %v1868 = vunpack.c.h.b16 %v748
        %v1869 = vunpack.c.l.b16 %v749
        %v1870 = vunpack.c.h.b16 %v749
        %v1871 = vunpack.c.l.b16 %v750
        %v1872 = vunpack.c.h.b16 %v750
        %v1873 = vunpack.c.l.b16 %v751
        %v1874 = vunpack.c.h.b16 %v751
        %v1875 = vunpack.c.l.b16 %v752
        %v1876 = vunpack.c.h.b16 %v752
        %v1877 = vunpack.c.l.b16 %v753
        %v1878 = vunpack.c.h.b16 %v753
        %v1879 = vunpack.c.l.b16 %v754
        %v1880 = vunpack.c.h.b16 %v754
        %v1881 = vunpack.c.l.b16 %v755
        %v1882 = vunpack.c.h.b16 %v755
        %v1883 = vunpack.c.l.b16 %v756
        %v1884 = vunpack.c.h.b16 %v756
        %v1885 = vunpack.c.l.b16 %v757
        %v1886 = vunpack.c.h.b16 %v757
        %v1887 = vunpack.c.l.b16 %v758
        %v1888 = vunpack.c.h.b16 %v758
        %v1889 = vunpack.c.l.b16 %v759
        %v1890 = vunpack.c.h.b16 %v759
        %v1891 = vunpack.c.l.b16 %v760
        %v1892 = vunpack.c.h.b16 %v760
        %v1893 = vunpack.c.l.b16 %v761
        %v1894 = vunpack.c.h.b16 %v761
        %v1895 = vunpack.c.l.b16 %v762
        %v1896 = vunpack.c.h.b16 %v762
        %v1897 = vunpack.c.l.b16 %v763
        %v1898 = vunpack.c.h.b16 %v763
        %v1899 = vunpack.c.l.b16 %v764
        %v1900 = vunpack.c.h.b16 %v764
        %v1901 = vunpack.c.l.b16 %v765
        %v1902 = vunpack.c.h.b16 %v765
        %v1903 = vunpack.c.l.b16 %v766
        %v1904 = vunpack.c.h.b16 %v766
        %v1905 = vunpack.c.l.b16 %v767
        %v1906 = vunpack.c.h.b16 %v767
        %v1907 = vunpack.c.l.b16 %v768
        %v1908 = vunpack.c.h.b16 %v768
        %v1909 = vunpack.c.l.b16 %v769
        %v1910 = vunpack.c.h.b16 %v769
        %v1911 = vunpack.c.l.b16 %v770
        %v1912 = vunpack.c.h.b16 %v770
        %v1913 = vunpack.c.l.b16 %v771
        %v1914 = vunpack.c.h.b16 %v771
        %v1915 = vunpack.c.l.b16 %v772
        %v1916 = vunpack.c.h.b16 %v772
        %v1917 = vunpack.c.l.b16 %v773
        %v1918 = vunpack.c.h.b16 %v773
        %v1919 = vunpack.c.l.b16 %v774
        %v1920 = vunpack.c.h.b16 %v774
        %v1921 = vunpack.c.l.b16 %v775
        %v1922 = vunpack.c.h.b16 %v775
        %v1923 = vunpack.c.l.b16 %v776
        %v1924 = vunpack.c.h.b16 %v776
        %v1925 = vunpack.c.l.b16 %v777
        %v1926 = vunpack.c.h.b16 %v777
        %v1927 = vunpack.c.l.b16 %v778
        %v1928 = vunpack.c.h.b16 %v778
        %v1929 = vunpack.c.l.b16 %v779
        %v1930 = vunpack.c.h.b16 %v779
        %v1931 = vunpack.c.l.b16 %v780
        %v1932 = vunpack.c.h.b16 %v780
        %v1933 = vpack.c.b16 %v1429, %v1421
        %v1934 = vpack.c.b16 %v1430, %v1422
        %v1935 = vpack.c.b16 %v1431, %v1423
        %v1936 = vpack.c.b16 %v1432, %v1424
        %v1937 = vpack.c.b16 %v1433, %v1425
        %v1938 = vpack.c.b16 %v1434, %v1426
        %v1939 = vpack.c.b16 %v1435, %v1427
        %v1940 = vpack.c.b16 %v1436, %v1428
        %v1941 = vpack.c.b16 %v1445, %v1437
        %v1942 = vpack.c.b16 %v1446, %v1438
        %v1943 = vpack.c.b16 %v1447, %v1439
        %v1944 = vpack.c.b16 %v1448, %v1440
        %v1945 = vpack.c.b16 %v1449, %v1441
        %v1946 = vpack.c.b16 %v1450, %v1442
        %v1947 = vpack.c.b16 %v1451, %v1443
        %v1948 = vpack.c.b16 %v1452, %v1444
        %v1949 = vpack.c.b16 %v1461, %v1453
        %v1950 = vpack.c.b16 %v1462, %v1454
        %v1951 = vpack.c.b16 %v1463, %v1455
        %v1952 = vpack.c.b16 %v1464, %v1456
        %v1953 = vpack.c.b16 %v1465, %v1457
        %v1954 = vpack.c.b16 %v1466, %v1458
        %v1955 = vpack.c.b16 %v1467, %v1459
        %v1956 = vpack.c.b16 %v1468, %v1460
        %v1957 = vpack.c.b16 %v1477, %v1469
        %v1958 = vpack.c.b16 %v1478, %v1470
        %v1959 = vpack.c.b16 %v1479, %v1471
        %v1960 = vpack.c.b16 %v1480, %v1472
        %v1961 = vpack.c.b16 %v1481, %v1473
        %v1962 = vpack.c.b16 %v1482, %v1474
        %v1963 = vpack.c.b16 %v1483, %v1475
        %v1964 = vpack.c.b16 %v1484, %v1476
        %v1965 = vpack.c.b16 %v1493, %v1485
        %v1966 = vpack.c.b16 %v1494, %v1486
        %v1967 = vpack.c.b16 %v1495, %v1487
        %v1968 = vpack.c.b16 %v1496, %v1488
        %v1969 = vpack.c.b16 %v1497, %v1489
        %v1970 = vpack.c.b16 %v1498, %v1490
        %v1971 = vpack.c.b16 %v1499, %v1491
        %v1972 = vpack.c.b16 %v1500, %v1492
        %v1973 = vpack.c.b16 %v1509, %v1501
        %v1974 = vpack.c.b16 %v1510, %v1502
        %v1975 = vpack.c.b16 %v1511, %v1503
        %v1976 = vpack.c.b16 %v1512, %v1504
        %v1977 = vpack.c.b16 %v1513, %v1505
        %v1978 = vpack.c.b16 %v1514, %v1506
        %v1979 = vpack.c.b16 %v1515, %v1507
        %v1980 = vpack.c.b16 %v1516, %v1508
        %v1981 = vpack.c.b16 %v1525, %v1517
        %v1982 = vpack.c.b16 %v1526, %v1518
        %v1983 = vpack.c.b16 %v1527, %v1519
        %v1984 = vpack.c.b16 %v1528, %v1520
        %v1985 = vpack.c.b16 %v1529, %v1521
        %v1986 = vpack.c.b16 %v1530, %v1522
        %v1987 = vpack.c.b16 %v1531, %v1523
        %v1988 = vpack.c.b16 %v1532, %v1524
        %v1989 = vpack.c.b16 %v1541, %v1533
        %v1990 = vpack.c.b16 %v1542, %v1534
        %v1991 = vpack.c.b16 %v1543, %v1535
        %v1992 = vpack.c.b16 %v1544, %v1536
        %v1993 = vpack.c.b16 %v1545, %v1537
        %v1994 = vpack.c.b16 %v1546, %v1538
        %v1995 = vpack.c.b16 %v1547, %v1539
        %v1996 = vpack.c.b16 %v1548, %v1540
        %v1997 = vpack.c.b16 %v1557, %v1549
        %v1998 = vpack.c.b16 %v1558, %v1550
        %v1999 = vpack.c.b16 %v1559, %v1551
        %v2000 = vpack.c.b16 %v1560, %v1552
        %v2001 = vpack.c.b16 %v1561, %v1553
        %v2002 = vpack.c.b16 %v1562, %v1554
        %v2003 = vpack.c.b16 %v1563, %v1555
        %v2004 = vpack.c.b16 %v1564, %v1556
        %v2005 = vpack.c.b16 %v1573, %v1565
        %v2006 = vpack.c.b16 %v1574, %v1566
        %v2007 = vpack.c.b16 %v1575, %v1567
        %v2008 = vpack.c.b16 %v1576, %v1568
        %v2009 = vpack.c.b16 %v1577, %v1569
        %v2010 = vpack.c.b16 %v1578, %v1570
        %v2011 = vpack.c.b16 %v1579, %v1571
        %v2012 = vpack.c.b16 %v1580, %v1572
        %v2013 = vpack.c.b16 %v1589, %v1581
        %v2014 = vpack.c.b16 %v1590, %v1582
        %v2015 = vpack.c.b16 %v1591, %v1583
        %v2016 = vpack.c.b16 %v1592, %v1584
        %v2017 = vpack.c.b16 %v1593, %v1585
        %v2018 = vpack.c.b16 %v1594, %v1586
        %v2019 = vpack.c.b16 %v1595, %v1587
        %v2020 = vpack.c.b16 %v1596, %v1588
        %v2021 = vpack.c.b16 %v1605, %v1597
        %v2022 = vpack.c.b16 %v1606, %v1598
        %v2023 = vpack.c.b16 %v1607, %v1599
        %v2024 = vpack.c.b16 %v1608, %v1600
        %v2025 = vpack.c.b16 %v1609, %v1601
        %v2026 = vpack.c.b16 %v1610, %v1602
        %v2027 = vpack.c.b16 %v1611, %v1603
        %v2028 = vpack.c.b16 %v1612, %v1604
        %v2029 = vpack.c.b16 %v1621, %v1613
        %v2030 = vpack.c.b16 %v1622, %v1614
        %v2031 = vpack.c.b16 %v1623, %v1615
        %v2032 = vpack.c.b16 %v1624, %v1616
        %v2033 = vpack.c.b16 %v1625, %v1617
        %v2034 = vpack.c.b16 %v1626, %v1618
        %v2035 = vpack.c.b16 %v1627, %v1619
        %v2036 = vpack.c.b16 %v1628, %v1620
        %v2037 = vpack.c.b16 %v1637, %v1629
        %v2038 = vpack.c.b16 %v1638, %v1630
        %v2039 = vpack.c.b16 %v1639, %v1631
        %v2040 = vpack.c.b16 %v1640, %v1632
        %v2041 = vpack.c.b16 %v1641, %v1633
        %v2042 = vpack.c.b16 %v1642, %v1634
        %v2043 = vpack.c.b16 %v1643, %v1635
        %v2044 = vpack.c.b16 %v1644, %v1636
        %v2045 = vpack.c.b16 %v1653, %v1645
        %v2046 = vpack.c.b16 %v1654, %v1646
        %v2047 = vpack.c.b16 %v1655, %v1647
        %v2048 = vpack.c.b16 %v1656, %v1648
        %v2049 = vpack.c.b16 %v1657, %v1649
        %v2050 = vpack.c.b16 %v1658, %v1650
        %v2051 = vpack.c.b16 %v1659, %v1651
        %v2052 = vpack.c.b16 %v1660, %v1652
        %v2053 = vpack.c.b16 %v1669, %v1661
        %v2054 = vpack.c.b16 %v1670, %v1662
        %v2055 = vpack.c.b16 %v1671, %v1663
        %v2056 = vpack.c.b16 %v1672, %v1664
        %v2057 = vpack.c.b16 %v1673, %v1665
        %v2058 = vpack.c.b16 %v1674, %v1666
        %v2059 = vpack.c.b16 %v1675, %v1667
        %v2060 = vpack.c.b16 %v1676, %v1668
        %v2061 = vpack.c.b16 %v1685, %v1677
        %v2062 = vpack.c.b16 %v1686, %v1678
        %v2063 = vpack.c.b16 %v1687, %v1679
        %v2064 = vpack.c.b16 %v1688, %v1680
        %v2065 = vpack.c.b16 %v1689, %v1681
        %v2066 = vpack.c.b16 %v1690, %v1682
        %v2067 = vpack.c.b16 %v1691, %v1683
        %v2068 = vpack.c.b16 %v1692, %v1684
        %v2069 = vpack.c.b16 %v1701, %v1693
        %v2070 = vpack.c.b16 %v1702, %v1694
        %v2071 = vpack.c.b16 %v1703, %v1695
        %v2072 = vpack.c.b16 %v1704, %v1696
        %v2073 = vpack.c.b16 %v1705, %v1697
        %v2074 = vpack.c.b16 %v1706, %v1698
        %v2075 = vpack.c.b16 %v1707, %v1699
        %v2076 = vpack.c.b16 %v1708, %v1700
        %v2077 = vpack.c.b16 %v1717, %v1709
        %v2078 = vpack.c.b16 %v1718, %v1710
        %v2079 = vpack.c.b16 %v1719, %v1711
        %v2080 = vpack.c.b16 %v1720, %v1712
        %v2081 = vpack.c.b16 %v1721, %v1713
        %v2082 = vpack.c.b16 %v1722, %v1714
        %v2083 = vpack.c.b16 %v1723, %v1715
        %v2084 = vpack.c.b16 %v1724, %v1716
        %v2085 = vpack.c.b16 %v1733, %v1725
        %v2086 = vpack.c.b16 %v1734, %v1726
        %v2087 = vpack.c.b16 %v1735, %v1727
        %v2088 = vpack.c.b16 %v1736, %v1728
        %v2089 = vpack.c.b16 %v1737, %v1729
        %v2090 = vpack.c.b16 %v1738, %v1730
        %v2091 = vpack.c.b16 %v1739, %v1731
        %v2092 = vpack.c.b16 %v1740, %v1732
        %v2093 = vpack.c.b16 %v1749, %v1741
        %v2094 = vpack.c.b16 %v1750, %v1742
        %v2095 = vpack.c.b16 %v1751, %v1743
        %v2096 = vpack.c.b16 %v1752, %v1744
        %v2097 = vpack.c.b16 %v1753, %v1745
        %v2098 = vpack.c.b16 %v1754, %v1746
        %v2099 = vpack.c.b16 %v1755, %v1747
        %v2100 = vpack.c.b16 %v1756, %v1748
        %v2101 = vpack.c.b16 %v1765, %v1757
        %v2102 = vpack.c.b16 %v1766, %v1758
        %v2103 = vpack.c.b16 %v1767, %v1759
        %v2104 = vpack.c.b16 %v1768, %v1760
        %v2105 = vpack.c.b16 %v1769, %v1761
        %v2106 = vpack.c.b16 %v1770, %v1762
        %v2107 = vpack.c.b16 %v1771, %v1763
        %v2108 = vpack.c.b16 %v1772, %v1764
        %v2109 = vpack.c.b16 %v1781, %v1773
        %v2110 = vpack.c.b16 %v1782, %v1774
        %v2111 = vpack.c.b16 %v1783, %v1775
        %v2112 = vpack.c.b16 %v1784, %v1776
        %v2113 = vpack.c.b16 %v1785, %v1777
        %v2114 = vpack.c.b16 %v1786, %v1778
        %v2115 = vpack.c.b16 %v1787, %v1779
        %v2116 = vpack.c.b16 %v1788, %v1780
        %v2117 = vpack.c.b16 %v1797, %v1789
        %v2118 = vpack.c.b16 %v1798, %v1790
        %v2119 = vpack.c.b16 %v1799, %v1791
        %v2120 = vpack.c.b16 %v1800, %v1792
        %v2121 = vpack.c.b16 %v1801, %v1793
        %v2122 = vpack.c.b16 %v1802, %v1794
        %v2123 = vpack.c.b16 %v1803, %v1795
        %v2124 = vpack.c.b16 %v1804, %v1796
        %v2125 = vpack.c.b16 %v1813, %v1805
        %v2126 = vpack.c.b16 %v1814, %v1806
        %v2127 = vpack.c.b16 %v1815, %v1807
        %v2128 = vpack.c.b16 %v1816, %v1808
        %v2129 = vpack.c.b16 %v1817, %v1809
        %v2130 = vpack.c.b16 %v1818, %v1810
        %v2131 = vpack.c.b16 %v1819, %v1811
        %v2132 = vpack.c.b16 %v1820, %v1812
        %v2133 = vpack.c.b16 %v1829, %v1821
        %v2134 = vpack.c.b16 %v1830, %v1822
        %v2135 = vpack.c.b16 %v1831, %v1823
        %v2136 = vpack.c.b16 %v1832, %v1824
        %v2137 = vpack.c.b16 %v1833, %v1825
        %v2138 = vpack.c.b16 %v1834, %v1826
        %v2139 = vpack.c.b16 %v1835, %v1827
        %v2140 = vpack.c.b16 %v1836, %v1828
        %v2141 = vpack.c.b16 %v1845, %v1837
        %v2142 = vpack.c.b16 %v1846, %v1838
        %v2143 = vpack.c.b16 %v1847, %v1839
        %v2144 = vpack.c.b16 %v1848, %v1840
        %v2145 = vpack.c.b16 %v1849, %v1841
        %v2146 = vpack.c.b16 %v1850, %v1842
        %v2147 = vpack.c.b16 %v1851, %v1843
        %v2148 = vpack.c.b16 %v1852, %v1844
        %v2149 = vpack.c.b16 %v1861, %v1853
        %v2150 = vpack.c.b16 %v1862, %v1854
        %v2151 = vpack.c.b16 %v1863, %v1855
        %v2152 = vpack.c.b16 %v1864, %v1856
        %v2153 = vpack.c.b16 %v1865, %v1857
        %v2154 = vpack.c.b16 %v1866, %v1858
        %v2155 = vpack.c.b16 %v1867, %v1859
        %v2156 = vpack.c.b16 %v1868, %v1860
        %v2157 = vpack.c.b16 %v1877, %v1869
        %v2158 = vpack.c.b16 %v1878, %v1870
        %v2159 = vpack.c.b16 %v1879, %v1871
        %v2160 = vpack.c.b16 %v1880, %v1872
        %v2161 = vpack.c.b16 %v1881, %v1873
        %v2162 = vpack.c.b16 %v1882, %v1874
        %v2163 = vpack.c.b16 %v1883, %v1875
        %v2164 = vpack.c.b16 %v1884, %v1876
        %v2165 = vpack.c.b16 %v1893, %v1885
        %v2166 = vpack.c.b16 %v1894, %v1886
        %v2167 = vpack.c.b16 %v1895, %v1887
        %v2168 = vpack.c.b16 %v1896, %v1888
        %v2169 = vpack.c.b16 %v1897, %v1889
        %v2170 = vpack.c.b16 %v1898, %v1890
        %v2171 = vpack.c.b16 %v1899, %v1891
        %v2172 = vpack.c.b16 %v1900, %v1892
        %v2173 = vpack.c.b16 %v1909, %v1901
        %v2174 = vpack.c.b16 %v1910, %v1902
        %v2175 = vpack.c.b16 %v1911, %v1903
        %v2176 = vpack.c.b16 %v1912, %v1904
        %v2177 = vpack.c.b16 %v1913, %v1905
        %v2178 = vpack.c.b16 %v1914, %v1906
        %v2179 = vpack.c.b16 %v1915, %v1907
        %v2180 = vpack.c.b16 %v1916, %v1908
        %v2181 = vpack.c.b16 %v1925, %v1917
        %v2182 = vpack.c.b16 %v1926, %v1918
        %v2183 = vpack.c.b16 %v1927, %v1919
        %v2184 = vpack.c.b16 %v1928, %v1920
        %v2185 = vpack.c.b16 %v1929, %v1921
        %v2186 = vpack.c.b16 %v1930, %v1922
        %v2187 = vpack.c.b16 %v1931, %v1923
        %v2188 = vpack.c.b16 %v1932, %v1924
        %2445 = vmatpush.bf16.msra.mxu0 %v468
        %2446 = vmatpush.bf16.msra.mxu0 %v467
        %2447 = vmatpush.bf16.msra.mxu0 %v466
        %2448 = vmatpush.bf16.msra.mxu0 %v465
        %2449 = vmatpush.bf16.msra.mxu0 %v464
        %2450 = vmatpush.bf16.msra.mxu0 %v463
        %2451 = vmatpush.bf16.msra.mxu0 %v462
        %2452 = vmatpush.bf16.msra.mxu0 %v461
        %2453 = vmatmul.bf16.gmra.mxu0 %v1933
        %v2454 = vpop.f32.mrf.mxu0
        %v2455 = vadd.f32 %v848, %v2454
        %v2456 = vpop.f32.mrf.mxu0
        %v2457 = vadd.f32 %v853, %v2456
        %2458 = vmatmul.bf16.gmra.mxu0 %v1941
        %v2459 = vpop.f32.mrf.mxu0
        %v2460 = vadd.f32 %v858, %v2459
        %v2461 = vpop.f32.mrf.mxu0
        %v2462 = vadd.f32 %v863, %v2461
        %2463 = vmatmul.bf16.gmra.mxu0 %v1949
        %v2464 = vpop.f32.mrf.mxu0
        %v2465 = vadd.f32 %v868, %v2464
        %v2466 = vpop.f32.mrf.mxu0
        %v2467 = vadd.f32 %v873, %v2466
        %2468 = vmatmul.bf16.gmra.mxu0 %v1957
        %v2469 = vpop.f32.mrf.mxu0
        %v2470 = vadd.f32 %v878, %v2469
        %v2471 = vpop.f32.mrf.mxu0
        %v2472 = vadd.f32 %v883, %v2471
        %2473 = vmatmul.bf16.gmra.mxu0 %v1965
        %v2474 = vpop.f32.mrf.mxu0
        %v2475 = vadd.f32 %v888, %v2474
        %v2476 = vpop.f32.mrf.mxu0
        %v2477 = vadd.f32 %v893, %v2476
        %2478 = vmatmul.bf16.gmra.mxu0 %v1973
        %v2479 = vpop.f32.mrf.mxu0
        %v2480 = vadd.f32 %v898, %v2479
        %v2481 = vpop.f32.mrf.mxu0
        %v2482 = vadd.f32 %v903, %v2481
        %2483 = vmatmul.bf16.gmra.mxu0 %v1981
        %v2484 = vpop.f32.mrf.mxu0
        %v2485 = vadd.f32 %v908, %v2484
        %v2486 = vpop.f32.mrf.mxu0
        %v2487 = vadd.f32 %v913, %v2486
        %2488 = vmatmul.bf16.gmra.mxu0 %v1989
        %v2489 = vpop.f32.mrf.mxu0
        %v2490 = vadd.f32 %v918, %v2489
        %v2491 = vpop.f32.mrf.mxu0
        %v2492 = vadd.f32 %v923, %v2491
        %2493 = vmatmul.bf16.gmra.mxu0 %v1997
        %v2494 = vpop.f32.mrf.mxu0
        %v2495 = vadd.f32 %v928, %v2494
        %v2496 = vpop.f32.mrf.mxu0
        %v2497 = vadd.f32 %v933, %v2496
        %2498 = vmatmul.bf16.gmra.mxu0 %v2005
        %v2499 = vpop.f32.mrf.mxu0
        %v2500 = vadd.f32 %v938, %v2499
        %v2501 = vpop.f32.mrf.mxu0
        %v2502 = vadd.f32 %v943, %v2501
        %2503 = vmatmul.bf16.gmra.mxu0 %v2013
        %v2504 = vpop.f32.mrf.mxu0
        %v2505 = vadd.f32 %v948, %v2504
        %v2506 = vpop.f32.mrf.mxu0
        %v2507 = vadd.f32 %v953, %v2506
        %2508 = vmatmul.bf16.gmra.mxu0 %v2021
        %v2509 = vpop.f32.mrf.mxu0
        %v2510 = vadd.f32 %v958, %v2509
        %v2511 = vpop.f32.mrf.mxu0
        %v2512 = vadd.f32 %v963, %v2511
        %2513 = vmatmul.bf16.gmra.mxu0 %v2029
        %v2514 = vpop.f32.mrf.mxu0
        %v2515 = vadd.f32 %v968, %v2514
        %v2516 = vpop.f32.mrf.mxu0
        %v2517 = vadd.f32 %v973, %v2516
        %2518 = vmatmul.bf16.gmra.mxu0 %v2037
        %v2519 = vpop.f32.mrf.mxu0
        %v2520 = vadd.f32 %v978, %v2519
        %v2521 = vpop.f32.mrf.mxu0
        %v2522 = vadd.f32 %v983, %v2521
        %2523 = vmatmul.bf16.gmra.mxu0 %v2045
        %v2524 = vpop.f32.mrf.mxu0
        %v2525 = vadd.f32 %v988, %v2524
        %v2526 = vpop.f32.mrf.mxu0
        %v2527 = vadd.f32 %v993, %v2526
        %2528 = vmatmul.bf16.gmra.mxu0 %v2053
        %v2529 = vpop.f32.mrf.mxu0
        %v2530 = vadd.f32 %v998, %v2529
        %v2531 = vpop.f32.mrf.mxu0
        %v2532 = vadd.f32 %v1003, %v2531
        %2533 = vmatmul.bf16.gmra.mxu0 %v2061
        %v2534 = vpop.f32.mrf.mxu0
        %v2535 = vadd.f32 %v1008, %v2534
        %v2536 = vpop.f32.mrf.mxu0
        %v2537 = vadd.f32 %v1013, %v2536
        %2538 = vmatmul.bf16.gmra.mxu0 %v2069
        %v2539 = vpop.f32.mrf.mxu0
        %v2540 = vadd.f32 %v1018, %v2539
        %v2541 = vpop.f32.mrf.mxu0
        %v2542 = vadd.f32 %v1023, %v2541
        %2543 = vmatmul.bf16.gmra.mxu0 %v2077
        %v2544 = vpop.f32.mrf.mxu0
        %v2545 = vadd.f32 %v1028, %v2544
        %v2546 = vpop.f32.mrf.mxu0
        %v2547 = vadd.f32 %v1033, %v2546
        %2548 = vmatmul.bf16.gmra.mxu0 %v2085
        %v2549 = vpop.f32.mrf.mxu0
        %v2550 = vadd.f32 %v1038, %v2549
        %v2551 = vpop.f32.mrf.mxu0
        %v2552 = vadd.f32 %v1043, %v2551
        %2553 = vmatmul.bf16.gmra.mxu0 %v2093
        %v2554 = vpop.f32.mrf.mxu0
        %v2555 = vadd.f32 %v1048, %v2554
        %v2556 = vpop.f32.mrf.mxu0
        %v2557 = vadd.f32 %v1053, %v2556
        %2558 = vmatmul.bf16.gmra.mxu0 %v2101
        %v2559 = vpop.f32.mrf.mxu0
        %v2560 = vadd.f32 %v1058, %v2559
        %v2561 = vpop.f32.mrf.mxu0
        %v2562 = vadd.f32 %v1063, %v2561
        %2563 = vmatmul.bf16.gmra.mxu0 %v2109
        %v2564 = vpop.f32.mrf.mxu0
        %v2565 = vadd.f32 %v1068, %v2564
        %v2566 = vpop.f32.mrf.mxu0
        %v2567 = vadd.f32 %v1073, %v2566
        %2568 = vmatmul.bf16.gmra.mxu0 %v2117
        %v2569 = vpop.f32.mrf.mxu0
        %v2570 = vadd.f32 %v1078, %v2569
        %v2571 = vpop.f32.mrf.mxu0
        %v2572 = vadd.f32 %v1083, %v2571
        %2573 = vmatmul.bf16.gmra.mxu0 %v2125
        %v2574 = vpop.f32.mrf.mxu0
        %v2575 = vadd.f32 %v1088, %v2574
        %v2576 = vpop.f32.mrf.mxu0
        %v2577 = vadd.f32 %v1093, %v2576
        %2578 = vmatmul.bf16.gmra.mxu0 %v2133
        %v2579 = vpop.f32.mrf.mxu0
        %v2580 = vadd.f32 %v1098, %v2579
        %v2581 = vpop.f32.mrf.mxu0
        %v2582 = vadd.f32 %v1103, %v2581
        %2583 = vmatmul.bf16.gmra.mxu0 %v2141
        %v2584 = vpop.f32.mrf.mxu0
        %v2585 = vadd.f32 %v1108, %v2584
        %v2586 = vpop.f32.mrf.mxu0
        %v2587 = vadd.f32 %v1113, %v2586
        %2588 = vmatmul.bf16.gmra.mxu0 %v2149
        %v2589 = vpop.f32.mrf.mxu0
        %v2590 = vadd.f32 %v1118, %v2589
        %v2591 = vpop.f32.mrf.mxu0
        %v2592 = vadd.f32 %v1123, %v2591
        %2593 = vmatmul.bf16.gmra.mxu0 %v2157
        %v2594 = vpop.f32.mrf.mxu0
        %v2595 = vadd.f32 %v1128, %v2594
        %v2596 = vpop.f32.mrf.mxu0
        %v2597 = vadd.f32 %v1133, %v2596
        %2598 = vmatmul.bf16.gmra.mxu0 %v2165
        %v2599 = vpop.f32.mrf.mxu0
        %v2600 = vadd.f32 %v1138, %v2599
        %v2601 = vpop.f32.mrf.mxu0
        %v2602 = vadd.f32 %v1143, %v2601
        %2603 = vmatmul.bf16.gmra.mxu0 %v2173
        %v2604 = vpop.f32.mrf.mxu0
        %v2605 = vadd.f32 %v1148, %v2604
        %v2606 = vpop.f32.mrf.mxu0
        %v2607 = vadd.f32 %v1153, %v2606
        %2608 = vmatmul.bf16.gmra.mxu0 %v2181
        %v2609 = vpop.f32.mrf.mxu0
        %v2610 = vadd.f32 %v1158, %v2609
        %v2611 = vpop.f32.mrf.mxu0
        %v2612 = vadd.f32 %v1163, %v2611
        %2613 = vdwg.mxu0
        %2614 = vmatpush.bf16.msra.mxu0 %v476
        %2615 = vmatpush.bf16.msra.mxu0 %v475
        %2616 = vmatpush.bf16.msra.mxu0 %v474
        %2617 = vmatpush.bf16.msra.mxu0 %v473
        %2618 = vmatpush.bf16.msra.mxu0 %v472
        %2619 = vmatpush.bf16.msra.mxu0 %v471
        %2620 = vmatpush.bf16.msra.mxu0 %v470
        %2621 = vmatpush.bf16.msra.mxu0 %v469
        %2622 = vmatmul.bf16.gmra.mxu0 %v1934
        %v2623 = vpop.f32.mrf.mxu0
        %v2624 = vadd.f32 %v2455, %v2623
        %v2625 = vpop.f32.mrf.mxu0
        %v2626 = vadd.f32 %v2457, %v2625
        %2627 = vmatmul.bf16.gmra.mxu0 %v1942
        %v2628 = vpop.f32.mrf.mxu0
        %v2629 = vadd.f32 %v2460, %v2628
        %v2630 = vpop.f32.mrf.mxu0
        %v2631 = vadd.f32 %v2462, %v2630
        %2632 = vmatmul.bf16.gmra.mxu0 %v1950
        %v2633 = vpop.f32.mrf.mxu0
        %v2634 = vadd.f32 %v2465, %v2633
        %v2635 = vpop.f32.mrf.mxu0
        %v2636 = vadd.f32 %v2467, %v2635
        %2637 = vmatmul.bf16.gmra.mxu0 %v1958
        %v2638 = vpop.f32.mrf.mxu0
        %v2639 = vadd.f32 %v2470, %v2638
        %v2640 = vpop.f32.mrf.mxu0
        %v2641 = vadd.f32 %v2472, %v2640
        %2642 = vmatmul.bf16.gmra.mxu0 %v1966
        %v2643 = vpop.f32.mrf.mxu0
        %v2644 = vadd.f32 %v2475, %v2643
        %v2645 = vpop.f32.mrf.mxu0
        %v2646 = vadd.f32 %v2477, %v2645
        %2647 = vmatmul.bf16.gmra.mxu0 %v1974
        %v2648 = vpop.f32.mrf.mxu0
        %v2649 = vadd.f32 %v2480, %v2648
        %v2650 = vpop.f32.mrf.mxu0
        %v2651 = vadd.f32 %v2482, %v2650
        %2652 = vmatmul.bf16.gmra.mxu0 %v1982
        %v2653 = vpop.f32.mrf.mxu0
        %v2654 = vadd.f32 %v2485, %v2653
        %v2655 = vpop.f32.mrf.mxu0
        %v2656 = vadd.f32 %v2487, %v2655
        %2657 = vmatmul.bf16.gmra.mxu0 %v1990
        %v2658 = vpop.f32.mrf.mxu0
        %v2659 = vadd.f32 %v2490, %v2658
        %v2660 = vpop.f32.mrf.mxu0
        %v2661 = vadd.f32 %v2492, %v2660
        %2662 = vmatmul.bf16.gmra.mxu0 %v1998
        %v2663 = vpop.f32.mrf.mxu0
        %v2664 = vadd.f32 %v2495, %v2663
        %v2665 = vpop.f32.mrf.mxu0
        %v2666 = vadd.f32 %v2497, %v2665
        %2667 = vmatmul.bf16.gmra.mxu0 %v2006
        %v2668 = vpop.f32.mrf.mxu0
        %v2669 = vadd.f32 %v2500, %v2668
        %v2670 = vpop.f32.mrf.mxu0
        %v2671 = vadd.f32 %v2502, %v2670
        %2672 = vmatmul.bf16.gmra.mxu0 %v2014
        %v2673 = vpop.f32.mrf.mxu0
        %v2674 = vadd.f32 %v2505, %v2673
        %v2675 = vpop.f32.mrf.mxu0
        %v2676 = vadd.f32 %v2507, %v2675
        %2677 = vmatmul.bf16.gmra.mxu0 %v2022
        %v2678 = vpop.f32.mrf.mxu0
        %v2679 = vadd.f32 %v2510, %v2678
        %v2680 = vpop.f32.mrf.mxu0
        %v2681 = vadd.f32 %v2512, %v2680
        %2682 = vmatmul.bf16.gmra.mxu0 %v2030
        %v2683 = vpop.f32.mrf.mxu0
        %v2684 = vadd.f32 %v2515, %v2683
        %v2685 = vpop.f32.mrf.mxu0
        %v2686 = vadd.f32 %v2517, %v2685
        %2687 = vmatmul.bf16.gmra.mxu0 %v2038
        %v2688 = vpop.f32.mrf.mxu0
        %v2689 = vadd.f32 %v2520, %v2688
        %v2690 = vpop.f32.mrf.mxu0
        %v2691 = vadd.f32 %v2522, %v2690
        %2692 = vmatmul.bf16.gmra.mxu0 %v2046
        %v2693 = vpop.f32.mrf.mxu0
        %v2694 = vadd.f32 %v2525, %v2693
        %v2695 = vpop.f32.mrf.mxu0
        %v2696 = vadd.f32 %v2527, %v2695
        %2697 = vmatmul.bf16.gmra.mxu0 %v2054
        %v2698 = vpop.f32.mrf.mxu0
        %v2699 = vadd.f32 %v2530, %v2698
        %v2700 = vpop.f32.mrf.mxu0
        %v2701 = vadd.f32 %v2532, %v2700
        %2702 = vmatmul.bf16.gmra.mxu0 %v2062
        %v2703 = vpop.f32.mrf.mxu0
        %v2704 = vadd.f32 %v2535, %v2703
        %v2705 = vpop.f32.mrf.mxu0
        %v2706 = vadd.f32 %v2537, %v2705
        %2707 = vmatmul.bf16.gmra.mxu0 %v2070
        %v2708 = vpop.f32.mrf.mxu0
        %v2709 = vadd.f32 %v2540, %v2708
        %v2710 = vpop.f32.mrf.mxu0
        %v2711 = vadd.f32 %v2542, %v2710
        %2712 = vmatmul.bf16.gmra.mxu0 %v2078
        %v2713 = vpop.f32.mrf.mxu0
        %v2714 = vadd.f32 %v2545, %v2713
        %v2715 = vpop.f32.mrf.mxu0
        %v2716 = vadd.f32 %v2547, %v2715
        %2717 = vmatmul.bf16.gmra.mxu0 %v2086
        %v2718 = vpop.f32.mrf.mxu0
        %v2719 = vadd.f32 %v2550, %v2718
        %v2720 = vpop.f32.mrf.mxu0
        %v2721 = vadd.f32 %v2552, %v2720
        %2722 = vmatmul.bf16.gmra.mxu0 %v2094
        %v2723 = vpop.f32.mrf.mxu0
        %v2724 = vadd.f32 %v2555, %v2723
        %v2725 = vpop.f32.mrf.mxu0
        %v2726 = vadd.f32 %v2557, %v2725
        %2727 = vmatmul.bf16.gmra.mxu0 %v2102
        %v2728 = vpop.f32.mrf.mxu0
        %v2729 = vadd.f32 %v2560, %v2728
        %v2730 = vpop.f32.mrf.mxu0
        %v2731 = vadd.f32 %v2562, %v2730
        %2732 = vmatmul.bf16.gmra.mxu0 %v2110
        %v2733 = vpop.f32.mrf.mxu0
        %v2734 = vadd.f32 %v2565, %v2733
        %v2735 = vpop.f32.mrf.mxu0
        %v2736 = vadd.f32 %v2567, %v2735
        %2737 = vmatmul.bf16.gmra.mxu0 %v2118
        %v2738 = vpop.f32.mrf.mxu0
        %v2739 = vadd.f32 %v2570, %v2738
        %v2740 = vpop.f32.mrf.mxu0
        %v2741 = vadd.f32 %v2572, %v2740
        %2742 = vmatmul.bf16.gmra.mxu0 %v2126
        %v2743 = vpop.f32.mrf.mxu0
        %v2744 = vadd.f32 %v2575, %v2743
        %v2745 = vpop.f32.mrf.mxu0
        %v2746 = vadd.f32 %v2577, %v2745
        %2747 = vmatmul.bf16.gmra.mxu0 %v2134
        %v2748 = vpop.f32.mrf.mxu0
        %v2749 = vadd.f32 %v2580, %v2748
        %v2750 = vpop.f32.mrf.mxu0
        %v2751 = vadd.f32 %v2582, %v2750
        %2752 = vmatmul.bf16.gmra.mxu0 %v2142
        %v2753 = vpop.f32.mrf.mxu0
        %v2754 = vadd.f32 %v2585, %v2753
        %v2755 = vpop.f32.mrf.mxu0
        %v2756 = vadd.f32 %v2587, %v2755
        %2757 = vmatmul.bf16.gmra.mxu0 %v2150
        %v2758 = vpop.f32.mrf.mxu0
        %v2759 = vadd.f32 %v2590, %v2758
        %v2760 = vpop.f32.mrf.mxu0
        %v2761 = vadd.f32 %v2592, %v2760
        %2762 = vmatmul.bf16.gmra.mxu0 %v2158
        %v2763 = vpop.f32.mrf.mxu0
        %v2764 = vadd.f32 %v2595, %v2763
        %v2765 = vpop.f32.mrf.mxu0
        %v2766 = vadd.f32 %v2597, %v2765
        %2767 = vmatmul.bf16.gmra.mxu0 %v2166
        %v2768 = vpop.f32.mrf.mxu0
        %v2769 = vadd.f32 %v2600, %v2768
        %v2770 = vpop.f32.mrf.mxu0
        %v2771 = vadd.f32 %v2602, %v2770
        %2772 = vmatmul.bf16.gmra.mxu0 %v2174
        %v2773 = vpop.f32.mrf.mxu0
        %v2774 = vadd.f32 %v2605, %v2773
        %v2775 = vpop.f32.mrf.mxu0
        %v2776 = vadd.f32 %v2607, %v2775
        %2777 = vmatmul.bf16.gmra.mxu0 %v2182
        %v2778 = vpop.f32.mrf.mxu0
        %v2779 = vadd.f32 %v2610, %v2778
        %v2780 = vpop.f32.mrf.mxu0
        %v2781 = vadd.f32 %v2612, %v2780
        %2782 = vdwg.mxu0
        %2783 = vmatpush.bf16.msra.mxu0 %v484
        %2784 = vmatpush.bf16.msra.mxu0 %v483
        %2785 = vmatpush.bf16.msra.mxu0 %v482
        %2786 = vmatpush.bf16.msra.mxu0 %v481
        %2787 = vmatpush.bf16.msra.mxu0 %v480
        %2788 = vmatpush.bf16.msra.mxu0 %v479
        %2789 = vmatpush.bf16.msra.mxu0 %v478
        %2790 = vmatpush.bf16.msra.mxu0 %v477
        %2791 = vmatmul.bf16.gmra.mxu0 %v1935
        %v2792 = vpop.f32.mrf.mxu0
        %v2793 = vadd.f32 %v2624, %v2792
        %v2794 = vpop.f32.mrf.mxu0
        %v2795 = vadd.f32 %v2626, %v2794
        %2796 = vmatmul.bf16.gmra.mxu0 %v1943
        %v2797 = vpop.f32.mrf.mxu0
        %v2798 = vadd.f32 %v2629, %v2797
        %v2799 = vpop.f32.mrf.mxu0
        %v2800 = vadd.f32 %v2631, %v2799
        %2801 = vmatmul.bf16.gmra.mxu0 %v1951
        %v2802 = vpop.f32.mrf.mxu0
        %v2803 = vadd.f32 %v2634, %v2802
        %v2804 = vpop.f32.mrf.mxu0
        %v2805 = vadd.f32 %v2636, %v2804
        %2806 = vmatmul.bf16.gmra.mxu0 %v1959
        %v2807 = vpop.f32.mrf.mxu0
        %v2808 = vadd.f32 %v2639, %v2807
        %v2809 = vpop.f32.mrf.mxu0
        %v2810 = vadd.f32 %v2641, %v2809
        %2811 = vmatmul.bf16.gmra.mxu0 %v1967
        %v2812 = vpop.f32.mrf.mxu0
        %v2813 = vadd.f32 %v2644, %v2812
        %v2814 = vpop.f32.mrf.mxu0
        %v2815 = vadd.f32 %v2646, %v2814
        %2816 = vmatmul.bf16.gmra.mxu0 %v1975
        %v2817 = vpop.f32.mrf.mxu0
        %v2818 = vadd.f32 %v2649, %v2817
        %v2819 = vpop.f32.mrf.mxu0
        %v2820 = vadd.f32 %v2651, %v2819
        %2821 = vmatmul.bf16.gmra.mxu0 %v1983
        %v2822 = vpop.f32.mrf.mxu0
        %v2823 = vadd.f32 %v2654, %v2822
        %v2824 = vpop.f32.mrf.mxu0
        %v2825 = vadd.f32 %v2656, %v2824
        %2826 = vmatmul.bf16.gmra.mxu0 %v1991
        %v2827 = vpop.f32.mrf.mxu0
        %v2828 = vadd.f32 %v2659, %v2827
        %v2829 = vpop.f32.mrf.mxu0
        %v2830 = vadd.f32 %v2661, %v2829
        %2831 = vmatmul.bf16.gmra.mxu0 %v1999
        %v2832 = vpop.f32.mrf.mxu0
        %v2833 = vadd.f32 %v2664, %v2832
        %v2834 = vpop.f32.mrf.mxu0
        %v2835 = vadd.f32 %v2666, %v2834
        %2836 = vmatmul.bf16.gmra.mxu0 %v2007
        %v2837 = vpop.f32.mrf.mxu0
        %v2838 = vadd.f32 %v2669, %v2837
        %v2839 = vpop.f32.mrf.mxu0
        %v2840 = vadd.f32 %v2671, %v2839
        %2841 = vmatmul.bf16.gmra.mxu0 %v2015
        %v2842 = vpop.f32.mrf.mxu0
        %v2843 = vadd.f32 %v2674, %v2842
        %v2844 = vpop.f32.mrf.mxu0
        %v2845 = vadd.f32 %v2676, %v2844
        %2846 = vmatmul.bf16.gmra.mxu0 %v2023
        %v2847 = vpop.f32.mrf.mxu0
        %v2848 = vadd.f32 %v2679, %v2847
        %v2849 = vpop.f32.mrf.mxu0
        %v2850 = vadd.f32 %v2681, %v2849
        %2851 = vmatmul.bf16.gmra.mxu0 %v2031
        %v2852 = vpop.f32.mrf.mxu0
        %v2853 = vadd.f32 %v2684, %v2852
        %v2854 = vpop.f32.mrf.mxu0
        %v2855 = vadd.f32 %v2686, %v2854
        %2856 = vmatmul.bf16.gmra.mxu0 %v2039
        %v2857 = vpop.f32.mrf.mxu0
        %v2858 = vadd.f32 %v2689, %v2857
        %v2859 = vpop.f32.mrf.mxu0
        %v2860 = vadd.f32 %v2691, %v2859
        %2861 = vmatmul.bf16.gmra.mxu0 %v2047
        %v2862 = vpop.f32.mrf.mxu0
        %v2863 = vadd.f32 %v2694, %v2862
        %v2864 = vpop.f32.mrf.mxu0
        %v2865 = vadd.f32 %v2696, %v2864
        %2866 = vmatmul.bf16.gmra.mxu0 %v2055
        %v2867 = vpop.f32.mrf.mxu0
        %v2868 = vadd.f32 %v2699, %v2867
        %v2869 = vpop.f32.mrf.mxu0
        %v2870 = vadd.f32 %v2701, %v2869
        %2871 = vmatmul.bf16.gmra.mxu0 %v2063
        %v2872 = vpop.f32.mrf.mxu0
        %v2873 = vadd.f32 %v2704, %v2872
        %v2874 = vpop.f32.mrf.mxu0
        %v2875 = vadd.f32 %v2706, %v2874
        %2876 = vmatmul.bf16.gmra.mxu0 %v2071
        %v2877 = vpop.f32.mrf.mxu0
        %v2878 = vadd.f32 %v2709, %v2877
        %v2879 = vpop.f32.mrf.mxu0
        %v2880 = vadd.f32 %v2711, %v2879
        %2881 = vmatmul.bf16.gmra.mxu0 %v2079
        %v2882 = vpop.f32.mrf.mxu0
        %v2883 = vadd.f32 %v2714, %v2882
        %v2884 = vpop.f32.mrf.mxu0
        %v2885 = vadd.f32 %v2716, %v2884
        %2886 = vmatmul.bf16.gmra.mxu0 %v2087
        %v2887 = vpop.f32.mrf.mxu0
        %v2888 = vadd.f32 %v2719, %v2887
        %v2889 = vpop.f32.mrf.mxu0
        %v2890 = vadd.f32 %v2721, %v2889
        %2891 = vmatmul.bf16.gmra.mxu0 %v2095
        %v2892 = vpop.f32.mrf.mxu0
        %v2893 = vadd.f32 %v2724, %v2892
        %v2894 = vpop.f32.mrf.mxu0
        %v2895 = vadd.f32 %v2726, %v2894
        %2896 = vmatmul.bf16.gmra.mxu0 %v2103
        %v2897 = vpop.f32.mrf.mxu0
        %v2898 = vadd.f32 %v2729, %v2897
        %v2899 = vpop.f32.mrf.mxu0
        %v2900 = vadd.f32 %v2731, %v2899
        %2901 = vmatmul.bf16.gmra.mxu0 %v2111
        %v2902 = vpop.f32.mrf.mxu0
        %v2903 = vadd.f32 %v2734, %v2902
        %v2904 = vpop.f32.mrf.mxu0
        %v2905 = vadd.f32 %v2736, %v2904
        %2906 = vmatmul.bf16.gmra.mxu0 %v2119
        %v2907 = vpop.f32.mrf.mxu0
        %v2908 = vadd.f32 %v2739, %v2907
        %v2909 = vpop.f32.mrf.mxu0
        %v2910 = vadd.f32 %v2741, %v2909
        %2911 = vmatmul.bf16.gmra.mxu0 %v2127
        %v2912 = vpop.f32.mrf.mxu0
        %v2913 = vadd.f32 %v2744, %v2912
        %v2914 = vpop.f32.mrf.mxu0
        %v2915 = vadd.f32 %v2746, %v2914
        %2916 = vmatmul.bf16.gmra.mxu0 %v2135
        %v2917 = vpop.f32.mrf.mxu0
        %v2918 = vadd.f32 %v2749, %v2917
        %v2919 = vpop.f32.mrf.mxu0
        %v2920 = vadd.f32 %v2751, %v2919
        %2921 = vmatmul.bf16.gmra.mxu0 %v2143
        %v2922 = vpop.f32.mrf.mxu0
        %v2923 = vadd.f32 %v2754, %v2922
        %v2924 = vpop.f32.mrf.mxu0
        %v2925 = vadd.f32 %v2756, %v2924
        %2926 = vmatmul.bf16.gmra.mxu0 %v2151
        %v2927 = vpop.f32.mrf.mxu0
        %v2928 = vadd.f32 %v2759, %v2927
        %v2929 = vpop.f32.mrf.mxu0
        %v2930 = vadd.f32 %v2761, %v2929
        %2931 = vmatmul.bf16.gmra.mxu0 %v2159
        %v2932 = vpop.f32.mrf.mxu0
        %v2933 = vadd.f32 %v2764, %v2932
        %v2934 = vpop.f32.mrf.mxu0
        %v2935 = vadd.f32 %v2766, %v2934
        %2936 = vmatmul.bf16.gmra.mxu0 %v2167
        %v2937 = vpop.f32.mrf.mxu0
        %v2938 = vadd.f32 %v2769, %v2937
        %v2939 = vpop.f32.mrf.mxu0
        %v2940 = vadd.f32 %v2771, %v2939
        %2941 = vmatmul.bf16.gmra.mxu0 %v2175
        %v2942 = vpop.f32.mrf.mxu0
        %v2943 = vadd.f32 %v2774, %v2942
        %v2944 = vpop.f32.mrf.mxu0
        %v2945 = vadd.f32 %v2776, %v2944
        %2946 = vmatmul.bf16.gmra.mxu0 %v2183
        %v2947 = vpop.f32.mrf.mxu0
        %v2948 = vadd.f32 %v2779, %v2947
        %v2949 = vpop.f32.mrf.mxu0
        %v2950 = vadd.f32 %v2781, %v2949
        %2951 = vdwg.mxu0
        %2952 = vmatpush.bf16.msra.mxu0 %v492
        %2953 = vmatpush.bf16.msra.mxu0 %v491
        %2954 = vmatpush.bf16.msra.mxu0 %v490
        %2955 = vmatpush.bf16.msra.mxu0 %v489
        %2956 = vmatpush.bf16.msra.mxu0 %v488
        %2957 = vmatpush.bf16.msra.mxu0 %v487
        %2958 = vmatpush.bf16.msra.mxu0 %v486
        %2959 = vmatpush.bf16.msra.mxu0 %v485
        %2960 = vmatmul.bf16.gmra.mxu0 %v1936
        %v2961 = vpop.f32.mrf.mxu0
        %v2962 = vadd.f32 %v2793, %v2961
        %v2963 = vpop.f32.mrf.mxu0
        %v2964 = vadd.f32 %v2795, %v2963
        %2965 = vmatmul.bf16.gmra.mxu0 %v1944
        %v2966 = vpop.f32.mrf.mxu0
        %v2967 = vadd.f32 %v2798, %v2966
        %v2968 = vpop.f32.mrf.mxu0
        %v2969 = vadd.f32 %v2800, %v2968
        %2970 = vmatmul.bf16.gmra.mxu0 %v1952
        %v2971 = vpop.f32.mrf.mxu0
        %v2972 = vadd.f32 %v2803, %v2971
        %v2973 = vpop.f32.mrf.mxu0
        %v2974 = vadd.f32 %v2805, %v2973
        %2975 = vmatmul.bf16.gmra.mxu0 %v1960
        %v2976 = vpop.f32.mrf.mxu0
        %v2977 = vadd.f32 %v2808, %v2976
        %v2978 = vpop.f32.mrf.mxu0
        %v2979 = vadd.f32 %v2810, %v2978
        %2980 = vmatmul.bf16.gmra.mxu0 %v1968
        %v2981 = vpop.f32.mrf.mxu0
        %v2982 = vadd.f32 %v2813, %v2981
        %v2983 = vpop.f32.mrf.mxu0
        %v2984 = vadd.f32 %v2815, %v2983
        %2985 = vmatmul.bf16.gmra.mxu0 %v1976
        %v2986 = vpop.f32.mrf.mxu0
        %v2987 = vadd.f32 %v2818, %v2986
        %v2988 = vpop.f32.mrf.mxu0
        %v2989 = vadd.f32 %v2820, %v2988
        %2990 = vmatmul.bf16.gmra.mxu0 %v1984
        %v2991 = vpop.f32.mrf.mxu0
        %v2992 = vadd.f32 %v2823, %v2991
        %v2993 = vpop.f32.mrf.mxu0
        %v2994 = vadd.f32 %v2825, %v2993
        %2995 = vmatmul.bf16.gmra.mxu0 %v1992
        %v2996 = vpop.f32.mrf.mxu0
        %v2997 = vadd.f32 %v2828, %v2996
        %v2998 = vpop.f32.mrf.mxu0
        %v2999 = vadd.f32 %v2830, %v2998
        %3000 = vmatmul.bf16.gmra.mxu0 %v2000
        %v3001 = vpop.f32.mrf.mxu0
        %v3002 = vadd.f32 %v2833, %v3001
        %v3003 = vpop.f32.mrf.mxu0
        %v3004 = vadd.f32 %v2835, %v3003
        %3005 = vmatmul.bf16.gmra.mxu0 %v2008
        %v3006 = vpop.f32.mrf.mxu0
        %v3007 = vadd.f32 %v2838, %v3006
        %v3008 = vpop.f32.mrf.mxu0
        %v3009 = vadd.f32 %v2840, %v3008
        %3010 = vmatmul.bf16.gmra.mxu0 %v2016
        %v3011 = vpop.f32.mrf.mxu0
        %v3012 = vadd.f32 %v2843, %v3011
        %v3013 = vpop.f32.mrf.mxu0
        %v3014 = vadd.f32 %v2845, %v3013
        %3015 = vmatmul.bf16.gmra.mxu0 %v2024
        %v3016 = vpop.f32.mrf.mxu0
        %v3017 = vadd.f32 %v2848, %v3016
        %v3018 = vpop.f32.mrf.mxu0
        %v3019 = vadd.f32 %v2850, %v3018
        %3020 = vmatmul.bf16.gmra.mxu0 %v2032
        %v3021 = vpop.f32.mrf.mxu0
        %v3022 = vadd.f32 %v2853, %v3021
        %v3023 = vpop.f32.mrf.mxu0
        %v3024 = vadd.f32 %v2855, %v3023
        %3025 = vmatmul.bf16.gmra.mxu0 %v2040
        %v3026 = vpop.f32.mrf.mxu0
        %v3027 = vadd.f32 %v2858, %v3026
        %v3028 = vpop.f32.mrf.mxu0
        %v3029 = vadd.f32 %v2860, %v3028
        %3030 = vmatmul.bf16.gmra.mxu0 %v2048
        %v3031 = vpop.f32.mrf.mxu0
        %v3032 = vadd.f32 %v2863, %v3031
        %v3033 = vpop.f32.mrf.mxu0
        %v3034 = vadd.f32 %v2865, %v3033
        %3035 = vmatmul.bf16.gmra.mxu0 %v2056
        %v3036 = vpop.f32.mrf.mxu0
        %v3037 = vadd.f32 %v2868, %v3036
        %v3038 = vpop.f32.mrf.mxu0
        %v3039 = vadd.f32 %v2870, %v3038
        %3040 = vmatmul.bf16.gmra.mxu0 %v2064
        %v3041 = vpop.f32.mrf.mxu0
        %v3042 = vadd.f32 %v2873, %v3041
        %v3043 = vpop.f32.mrf.mxu0
        %v3044 = vadd.f32 %v2875, %v3043
        %3045 = vmatmul.bf16.gmra.mxu0 %v2072
        %v3046 = vpop.f32.mrf.mxu0
        %v3047 = vadd.f32 %v2878, %v3046
        %v3048 = vpop.f32.mrf.mxu0
        %v3049 = vadd.f32 %v2880, %v3048
        %3050 = vmatmul.bf16.gmra.mxu0 %v2080
        %v3051 = vpop.f32.mrf.mxu0
        %v3052 = vadd.f32 %v2883, %v3051
        %v3053 = vpop.f32.mrf.mxu0
        %v3054 = vadd.f32 %v2885, %v3053
        %3055 = vmatmul.bf16.gmra.mxu0 %v2088
        %v3056 = vpop.f32.mrf.mxu0
        %v3057 = vadd.f32 %v2888, %v3056
        %v3058 = vpop.f32.mrf.mxu0
        %v3059 = vadd.f32 %v2890, %v3058
        %3060 = vmatmul.bf16.gmra.mxu0 %v2096
        %v3061 = vpop.f32.mrf.mxu0
        %v3062 = vadd.f32 %v2893, %v3061
        %v3063 = vpop.f32.mrf.mxu0
        %v3064 = vadd.f32 %v2895, %v3063
        %3065 = vmatmul.bf16.gmra.mxu0 %v2104
        %v3066 = vpop.f32.mrf.mxu0
        %v3067 = vadd.f32 %v2898, %v3066
        %v3068 = vpop.f32.mrf.mxu0
        %v3069 = vadd.f32 %v2900, %v3068
        %3070 = vmatmul.bf16.gmra.mxu0 %v2112
        %v3071 = vpop.f32.mrf.mxu0
        %v3072 = vadd.f32 %v2903, %v3071
        %v3073 = vpop.f32.mrf.mxu0
        %v3074 = vadd.f32 %v2905, %v3073
        %3075 = vmatmul.bf16.gmra.mxu0 %v2120
        %v3076 = vpop.f32.mrf.mxu0
        %v3077 = vadd.f32 %v2908, %v3076
        %v3078 = vpop.f32.mrf.mxu0
        %v3079 = vadd.f32 %v2910, %v3078
        %3080 = vmatmul.bf16.gmra.mxu0 %v2128
        %v3081 = vpop.f32.mrf.mxu0
        %v3082 = vadd.f32 %v2913, %v3081
        %v3083 = vpop.f32.mrf.mxu0
        %v3084 = vadd.f32 %v2915, %v3083
        %3085 = vmatmul.bf16.gmra.mxu0 %v2136
        %v3086 = vpop.f32.mrf.mxu0
        %v3087 = vadd.f32 %v2918, %v3086
        %v3088 = vpop.f32.mrf.mxu0
        %v3089 = vadd.f32 %v2920, %v3088
        %3090 = vmatmul.bf16.gmra.mxu0 %v2144
        %v3091 = vpop.f32.mrf.mxu0
        %v3092 = vadd.f32 %v2923, %v3091
        %v3093 = vpop.f32.mrf.mxu0
        %v3094 = vadd.f32 %v2925, %v3093
        %3095 = vmatmul.bf16.gmra.mxu0 %v2152
        %v3096 = vpop.f32.mrf.mxu0
        %v3097 = vadd.f32 %v2928, %v3096
        %v3098 = vpop.f32.mrf.mxu0
        %v3099 = vadd.f32 %v2930, %v3098
        %3100 = vmatmul.bf16.gmra.mxu0 %v2160
        %v3101 = vpop.f32.mrf.mxu0
        %v3102 = vadd.f32 %v2933, %v3101
        %v3103 = vpop.f32.mrf.mxu0
        %v3104 = vadd.f32 %v2935, %v3103
        %3105 = vmatmul.bf16.gmra.mxu0 %v2168
        %v3106 = vpop.f32.mrf.mxu0
        %v3107 = vadd.f32 %v2938, %v3106
        %v3108 = vpop.f32.mrf.mxu0
        %v3109 = vadd.f32 %v2940, %v3108
        %3110 = vmatmul.bf16.gmra.mxu0 %v2176
        %v3111 = vpop.f32.mrf.mxu0
        %v3112 = vadd.f32 %v2943, %v3111
        %v3113 = vpop.f32.mrf.mxu0
        %v3114 = vadd.f32 %v2945, %v3113
        %3115 = vmatmul.bf16.gmra.mxu0 %v2184
        %v3116 = vpop.f32.mrf.mxu0
        %v3117 = vadd.f32 %v2948, %v3116
        %v3118 = vpop.f32.mrf.mxu0
        %v3119 = vadd.f32 %v2950, %v3118
        %3120 = vdwg.mxu0
        %3121 = vmatpush.bf16.msra.mxu0 %v500
        %3122 = vmatpush.bf16.msra.mxu0 %v499
        %3123 = vmatpush.bf16.msra.mxu0 %v498
        %3124 = vmatpush.bf16.msra.mxu0 %v497
        %3125 = vmatpush.bf16.msra.mxu0 %v496
        %3126 = vmatpush.bf16.msra.mxu0 %v495
        %3127 = vmatpush.bf16.msra.mxu0 %v494
        %3128 = vmatpush.bf16.msra.mxu0 %v493
        %3129 = vmatmul.bf16.gmra.mxu0 %v1937
        %v3130 = vpop.f32.mrf.mxu0
        %v3131 = vadd.f32 %v2962, %v3130
        %v3132 = vpop.f32.mrf.mxu0
        %v3133 = vadd.f32 %v2964, %v3132
        %3134 = vmatmul.bf16.gmra.mxu0 %v1945
        %v3135 = vpop.f32.mrf.mxu0
        %v3136 = vadd.f32 %v2967, %v3135
        %v3137 = vpop.f32.mrf.mxu0
        %v3138 = vadd.f32 %v2969, %v3137
        %3139 = vmatmul.bf16.gmra.mxu0 %v1953
        %v3140 = vpop.f32.mrf.mxu0
        %v3141 = vadd.f32 %v2972, %v3140
        %v3142 = vpop.f32.mrf.mxu0
        %v3143 = vadd.f32 %v2974, %v3142
        %3144 = vmatmul.bf16.gmra.mxu0 %v1961
        %v3145 = vpop.f32.mrf.mxu0
        %v3146 = vadd.f32 %v2977, %v3145
        %v3147 = vpop.f32.mrf.mxu0
        %v3148 = vadd.f32 %v2979, %v3147
        %3149 = vmatmul.bf16.gmra.mxu0 %v1969
        %v3150 = vpop.f32.mrf.mxu0
        %v3151 = vadd.f32 %v2982, %v3150
        %v3152 = vpop.f32.mrf.mxu0
        %v3153 = vadd.f32 %v2984, %v3152
        %3154 = vmatmul.bf16.gmra.mxu0 %v1977
        %v3155 = vpop.f32.mrf.mxu0
        %v3156 = vadd.f32 %v2987, %v3155
        %v3157 = vpop.f32.mrf.mxu0
        %v3158 = vadd.f32 %v2989, %v3157
        %3159 = vmatmul.bf16.gmra.mxu0 %v1985
        %v3160 = vpop.f32.mrf.mxu0
        %v3161 = vadd.f32 %v2992, %v3160
        %v3162 = vpop.f32.mrf.mxu0
        %v3163 = vadd.f32 %v2994, %v3162
        %3164 = vmatmul.bf16.gmra.mxu0 %v1993
        %v3165 = vpop.f32.mrf.mxu0
        %v3166 = vadd.f32 %v2997, %v3165
        %v3167 = vpop.f32.mrf.mxu0
        %v3168 = vadd.f32 %v2999, %v3167
        %3169 = vmatmul.bf16.gmra.mxu0 %v2001
        %v3170 = vpop.f32.mrf.mxu0
        %v3171 = vadd.f32 %v3002, %v3170
        %v3172 = vpop.f32.mrf.mxu0
        %v3173 = vadd.f32 %v3004, %v3172
        %3174 = vmatmul.bf16.gmra.mxu0 %v2009
        %v3175 = vpop.f32.mrf.mxu0
        %v3176 = vadd.f32 %v3007, %v3175
        %v3177 = vpop.f32.mrf.mxu0
        %v3178 = vadd.f32 %v3009, %v3177
        %3179 = vmatmul.bf16.gmra.mxu0 %v2017
        %v3180 = vpop.f32.mrf.mxu0
        %v3181 = vadd.f32 %v3012, %v3180
        %v3182 = vpop.f32.mrf.mxu0
        %v3183 = vadd.f32 %v3014, %v3182
        %3184 = vmatmul.bf16.gmra.mxu0 %v2025
        %v3185 = vpop.f32.mrf.mxu0
        %v3186 = vadd.f32 %v3017, %v3185
        %v3187 = vpop.f32.mrf.mxu0
        %v3188 = vadd.f32 %v3019, %v3187
        %3189 = vmatmul.bf16.gmra.mxu0 %v2033
        %v3190 = vpop.f32.mrf.mxu0
        %v3191 = vadd.f32 %v3022, %v3190
        %v3192 = vpop.f32.mrf.mxu0
        %v3193 = vadd.f32 %v3024, %v3192
        %3194 = vmatmul.bf16.gmra.mxu0 %v2041
        %v3195 = vpop.f32.mrf.mxu0
        %v3196 = vadd.f32 %v3027, %v3195
        %v3197 = vpop.f32.mrf.mxu0
        %v3198 = vadd.f32 %v3029, %v3197
        %3199 = vmatmul.bf16.gmra.mxu0 %v2049
        %v3200 = vpop.f32.mrf.mxu0
        %v3201 = vadd.f32 %v3032, %v3200
        %v3202 = vpop.f32.mrf.mxu0
        %v3203 = vadd.f32 %v3034, %v3202
        %3204 = vmatmul.bf16.gmra.mxu0 %v2057
        %v3205 = vpop.f32.mrf.mxu0
        %v3206 = vadd.f32 %v3037, %v3205
        %v3207 = vpop.f32.mrf.mxu0
        %v3208 = vadd.f32 %v3039, %v3207
        %3209 = vmatmul.bf16.gmra.mxu0 %v2065
        %v3210 = vpop.f32.mrf.mxu0
        %v3211 = vadd.f32 %v3042, %v3210
        %v3212 = vpop.f32.mrf.mxu0
        %v3213 = vadd.f32 %v3044, %v3212
        %3214 = vmatmul.bf16.gmra.mxu0 %v2073
        %v3215 = vpop.f32.mrf.mxu0
        %v3216 = vadd.f32 %v3047, %v3215
        %v3217 = vpop.f32.mrf.mxu0
        %v3218 = vadd.f32 %v3049, %v3217
        %3219 = vmatmul.bf16.gmra.mxu0 %v2081
        %v3220 = vpop.f32.mrf.mxu0
        %v3221 = vadd.f32 %v3052, %v3220
        %v3222 = vpop.f32.mrf.mxu0
        %v3223 = vadd.f32 %v3054, %v3222
        %3224 = vmatmul.bf16.gmra.mxu0 %v2089
        %v3225 = vpop.f32.mrf.mxu0
        %v3226 = vadd.f32 %v3057, %v3225
        %v3227 = vpop.f32.mrf.mxu0
        %v3228 = vadd.f32 %v3059, %v3227
        %3229 = vmatmul.bf16.gmra.mxu0 %v2097
        %v3230 = vpop.f32.mrf.mxu0
        %v3231 = vadd.f32 %v3062, %v3230
        %v3232 = vpop.f32.mrf.mxu0
        %v3233 = vadd.f32 %v3064, %v3232
        %3234 = vmatmul.bf16.gmra.mxu0 %v2105
        %v3235 = vpop.f32.mrf.mxu0
        %v3236 = vadd.f32 %v3067, %v3235
        %v3237 = vpop.f32.mrf.mxu0
        %v3238 = vadd.f32 %v3069, %v3237
        %3239 = vmatmul.bf16.gmra.mxu0 %v2113
        %v3240 = vpop.f32.mrf.mxu0
        %v3241 = vadd.f32 %v3072, %v3240
        %v3242 = vpop.f32.mrf.mxu0
        %v3243 = vadd.f32 %v3074, %v3242
        %3244 = vmatmul.bf16.gmra.mxu0 %v2121
        %v3245 = vpop.f32.mrf.mxu0
        %v3246 = vadd.f32 %v3077, %v3245
        %v3247 = vpop.f32.mrf.mxu0
        %v3248 = vadd.f32 %v3079, %v3247
        %3249 = vmatmul.bf16.gmra.mxu0 %v2129
        %v3250 = vpop.f32.mrf.mxu0
        %v3251 = vadd.f32 %v3082, %v3250
        %v3252 = vpop.f32.mrf.mxu0
        %v3253 = vadd.f32 %v3084, %v3252
        %3254 = vmatmul.bf16.gmra.mxu0 %v2137
        %v3255 = vpop.f32.mrf.mxu0
        %v3256 = vadd.f32 %v3087, %v3255
        %v3257 = vpop.f32.mrf.mxu0
        %v3258 = vadd.f32 %v3089, %v3257
        %3259 = vmatmul.bf16.gmra.mxu0 %v2145
        %v3260 = vpop.f32.mrf.mxu0
        %v3261 = vadd.f32 %v3092, %v3260
        %v3262 = vpop.f32.mrf.mxu0
        %v3263 = vadd.f32 %v3094, %v3262
        %3264 = vmatmul.bf16.gmra.mxu0 %v2153
        %v3265 = vpop.f32.mrf.mxu0
        %v3266 = vadd.f32 %v3097, %v3265
        %v3267 = vpop.f32.mrf.mxu0
        %v3268 = vadd.f32 %v3099, %v3267
        %3269 = vmatmul.bf16.gmra.mxu0 %v2161
        %v3270 = vpop.f32.mrf.mxu0
        %v3271 = vadd.f32 %v3102, %v3270
        %v3272 = vpop.f32.mrf.mxu0
        %v3273 = vadd.f32 %v3104, %v3272
        %3274 = vmatmul.bf16.gmra.mxu0 %v2169
        %v3275 = vpop.f32.mrf.mxu0
        %v3276 = vadd.f32 %v3107, %v3275
        %v3277 = vpop.f32.mrf.mxu0
        %v3278 = vadd.f32 %v3109, %v3277
        %3279 = vmatmul.bf16.gmra.mxu0 %v2177
        %v3280 = vpop.f32.mrf.mxu0
        %v3281 = vadd.f32 %v3112, %v3280
        %v3282 = vpop.f32.mrf.mxu0
        %v3283 = vadd.f32 %v3114, %v3282
        %3284 = vmatmul.bf16.gmra.mxu0 %v2185
        %v3285 = vpop.f32.mrf.mxu0
        %v3286 = vadd.f32 %v3117, %v3285
        %v3287 = vpop.f32.mrf.mxu0
        %v3288 = vadd.f32 %v3119, %v3287
        %3289 = vdwg.mxu0
        %3290 = vmatpush.bf16.msra.mxu0 %v508
        %3291 = vmatpush.bf16.msra.mxu0 %v507
        %3292 = vmatpush.bf16.msra.mxu0 %v506
        %3293 = vmatpush.bf16.msra.mxu0 %v505
        %3294 = vmatpush.bf16.msra.mxu0 %v504
        %3295 = vmatpush.bf16.msra.mxu0 %v503
        %3296 = vmatpush.bf16.msra.mxu0 %v502
        %3297 = vmatpush.bf16.msra.mxu0 %v501
        %3298 = vmatmul.bf16.gmra.mxu0 %v1938
        %v3299 = vpop.f32.mrf.mxu0
        %v3300 = vadd.f32 %v3131, %v3299
        %v3301 = vpop.f32.mrf.mxu0
        %v3302 = vadd.f32 %v3133, %v3301
        %3303 = vmatmul.bf16.gmra.mxu0 %v1946
        %v3304 = vpop.f32.mrf.mxu0
        %v3305 = vadd.f32 %v3136, %v3304
        %v3306 = vpop.f32.mrf.mxu0
        %v3307 = vadd.f32 %v3138, %v3306
        %3308 = vmatmul.bf16.gmra.mxu0 %v1954
        %v3309 = vpop.f32.mrf.mxu0
        %v3310 = vadd.f32 %v3141, %v3309
        %v3311 = vpop.f32.mrf.mxu0
        %v3312 = vadd.f32 %v3143, %v3311
        %3313 = vmatmul.bf16.gmra.mxu0 %v1962
        %v3314 = vpop.f32.mrf.mxu0
        %v3315 = vadd.f32 %v3146, %v3314
        %v3316 = vpop.f32.mrf.mxu0
        %v3317 = vadd.f32 %v3148, %v3316
        %3318 = vmatmul.bf16.gmra.mxu0 %v1970
        %v3319 = vpop.f32.mrf.mxu0
        %v3320 = vadd.f32 %v3151, %v3319
        %v3321 = vpop.f32.mrf.mxu0
        %v3322 = vadd.f32 %v3153, %v3321
        %3323 = vmatmul.bf16.gmra.mxu0 %v1978
        %v3324 = vpop.f32.mrf.mxu0
        %v3325 = vadd.f32 %v3156, %v3324
        %v3326 = vpop.f32.mrf.mxu0
        %v3327 = vadd.f32 %v3158, %v3326
        %3328 = vmatmul.bf16.gmra.mxu0 %v1986
        %v3329 = vpop.f32.mrf.mxu0
        %v3330 = vadd.f32 %v3161, %v3329
        %v3331 = vpop.f32.mrf.mxu0
        %v3332 = vadd.f32 %v3163, %v3331
        %3333 = vmatmul.bf16.gmra.mxu0 %v1994
        %v3334 = vpop.f32.mrf.mxu0
        %v3335 = vadd.f32 %v3166, %v3334
        %v3336 = vpop.f32.mrf.mxu0
        %v3337 = vadd.f32 %v3168, %v3336
        %3338 = vmatmul.bf16.gmra.mxu0 %v2002
        %v3339 = vpop.f32.mrf.mxu0
        %v3340 = vadd.f32 %v3171, %v3339
        %v3341 = vpop.f32.mrf.mxu0
        %v3342 = vadd.f32 %v3173, %v3341
        %3343 = vmatmul.bf16.gmra.mxu0 %v2010
        %v3344 = vpop.f32.mrf.mxu0
        %v3345 = vadd.f32 %v3176, %v3344
        %v3346 = vpop.f32.mrf.mxu0
        %v3347 = vadd.f32 %v3178, %v3346
        %3348 = vmatmul.bf16.gmra.mxu0 %v2018
        %v3349 = vpop.f32.mrf.mxu0
        %v3350 = vadd.f32 %v3181, %v3349
        %v3351 = vpop.f32.mrf.mxu0
        %v3352 = vadd.f32 %v3183, %v3351
        %3353 = vmatmul.bf16.gmra.mxu0 %v2026
        %v3354 = vpop.f32.mrf.mxu0
        %v3355 = vadd.f32 %v3186, %v3354
        %v3356 = vpop.f32.mrf.mxu0
        %v3357 = vadd.f32 %v3188, %v3356
        %3358 = vmatmul.bf16.gmra.mxu0 %v2034
        %v3359 = vpop.f32.mrf.mxu0
        %v3360 = vadd.f32 %v3191, %v3359
        %v3361 = vpop.f32.mrf.mxu0
        %v3362 = vadd.f32 %v3193, %v3361
        %3363 = vmatmul.bf16.gmra.mxu0 %v2042
        %v3364 = vpop.f32.mrf.mxu0
        %v3365 = vadd.f32 %v3196, %v3364
        %v3366 = vpop.f32.mrf.mxu0
        %v3367 = vadd.f32 %v3198, %v3366
        %3368 = vmatmul.bf16.gmra.mxu0 %v2050
        %v3369 = vpop.f32.mrf.mxu0
        %v3370 = vadd.f32 %v3201, %v3369
        %v3371 = vpop.f32.mrf.mxu0
        %v3372 = vadd.f32 %v3203, %v3371
        %3373 = vmatmul.bf16.gmra.mxu0 %v2058
        %v3374 = vpop.f32.mrf.mxu0
        %v3375 = vadd.f32 %v3206, %v3374
        %v3376 = vpop.f32.mrf.mxu0
        %v3377 = vadd.f32 %v3208, %v3376
        %3378 = vmatmul.bf16.gmra.mxu0 %v2066
        %v3379 = vpop.f32.mrf.mxu0
        %v3380 = vadd.f32 %v3211, %v3379
        %v3381 = vpop.f32.mrf.mxu0
        %v3382 = vadd.f32 %v3213, %v3381
        %3383 = vmatmul.bf16.gmra.mxu0 %v2074
        %v3384 = vpop.f32.mrf.mxu0
        %v3385 = vadd.f32 %v3216, %v3384
        %v3386 = vpop.f32.mrf.mxu0
        %v3387 = vadd.f32 %v3218, %v3386
        %3388 = vmatmul.bf16.gmra.mxu0 %v2082
        %v3389 = vpop.f32.mrf.mxu0
        %v3390 = vadd.f32 %v3221, %v3389
        %v3391 = vpop.f32.mrf.mxu0
        %v3392 = vadd.f32 %v3223, %v3391
        %3393 = vmatmul.bf16.gmra.mxu0 %v2090
        %v3394 = vpop.f32.mrf.mxu0
        %v3395 = vadd.f32 %v3226, %v3394
        %v3396 = vpop.f32.mrf.mxu0
        %v3397 = vadd.f32 %v3228, %v3396
        %3398 = vmatmul.bf16.gmra.mxu0 %v2098
        %v3399 = vpop.f32.mrf.mxu0
        %v3400 = vadd.f32 %v3231, %v3399
        %v3401 = vpop.f32.mrf.mxu0
        %v3402 = vadd.f32 %v3233, %v3401
        %3403 = vmatmul.bf16.gmra.mxu0 %v2106
        %v3404 = vpop.f32.mrf.mxu0
        %v3405 = vadd.f32 %v3236, %v3404
        %v3406 = vpop.f32.mrf.mxu0
        %v3407 = vadd.f32 %v3238, %v3406
        %3408 = vmatmul.bf16.gmra.mxu0 %v2114
        %v3409 = vpop.f32.mrf.mxu0
        %v3410 = vadd.f32 %v3241, %v3409
        %v3411 = vpop.f32.mrf.mxu0
        %v3412 = vadd.f32 %v3243, %v3411
        %3413 = vmatmul.bf16.gmra.mxu0 %v2122
        %v3414 = vpop.f32.mrf.mxu0
        %v3415 = vadd.f32 %v3246, %v3414
        %v3416 = vpop.f32.mrf.mxu0
        %v3417 = vadd.f32 %v3248, %v3416
        %3418 = vmatmul.bf16.gmra.mxu0 %v2130
        %v3419 = vpop.f32.mrf.mxu0
        %v3420 = vadd.f32 %v3251, %v3419
        %v3421 = vpop.f32.mrf.mxu0
        %v3422 = vadd.f32 %v3253, %v3421
        %3423 = vmatmul.bf16.gmra.mxu0 %v2138
        %v3424 = vpop.f32.mrf.mxu0
        %v3425 = vadd.f32 %v3256, %v3424
        %v3426 = vpop.f32.mrf.mxu0
        %v3427 = vadd.f32 %v3258, %v3426
        %3428 = vmatmul.bf16.gmra.mxu0 %v2146
        %v3429 = vpop.f32.mrf.mxu0
        %v3430 = vadd.f32 %v3261, %v3429
        %v3431 = vpop.f32.mrf.mxu0
        %v3432 = vadd.f32 %v3263, %v3431
        %3433 = vmatmul.bf16.gmra.mxu0 %v2154
        %v3434 = vpop.f32.mrf.mxu0
        %v3435 = vadd.f32 %v3266, %v3434
        %v3436 = vpop.f32.mrf.mxu0
        %v3437 = vadd.f32 %v3268, %v3436
        %3438 = vmatmul.bf16.gmra.mxu0 %v2162
        %v3439 = vpop.f32.mrf.mxu0
        %v3440 = vadd.f32 %v3271, %v3439
        %v3441 = vpop.f32.mrf.mxu0
        %v3442 = vadd.f32 %v3273, %v3441
        %3443 = vmatmul.bf16.gmra.mxu0 %v2170
        %v3444 = vpop.f32.mrf.mxu0
        %v3445 = vadd.f32 %v3276, %v3444
        %v3446 = vpop.f32.mrf.mxu0
        %v3447 = vadd.f32 %v3278, %v3446
        %3448 = vmatmul.bf16.gmra.mxu0 %v2178
        %v3449 = vpop.f32.mrf.mxu0
        %v3450 = vadd.f32 %v3281, %v3449
        %v3451 = vpop.f32.mrf.mxu0
        %v3452 = vadd.f32 %v3283, %v3451
        %3453 = vmatmul.bf16.gmra.mxu0 %v2186
        %v3454 = vpop.f32.mrf.mxu0
        %v3455 = vadd.f32 %v3286, %v3454
        %v3456 = vpop.f32.mrf.mxu0
        %v3457 = vadd.f32 %v3288, %v3456
        %3458 = vdwg.mxu0
        %3459 = vmatpush.bf16.msra.mxu0 %v516
        %3460 = vmatpush.bf16.msra.mxu0 %v515
        %3461 = vmatpush.bf16.msra.mxu0 %v514
        %3462 = vmatpush.bf16.msra.mxu0 %v513
        %3463 = vmatpush.bf16.msra.mxu0 %v512
        %3464 = vmatpush.bf16.msra.mxu0 %v511
        %3465 = vmatpush.bf16.msra.mxu0 %v510
        %3466 = vmatpush.bf16.msra.mxu0 %v509
        %3467 = vmatmul.bf16.gmra.mxu0 %v1939
        %v3468 = vpop.f32.mrf.mxu0
        %v3469 = vadd.f32 %v3300, %v3468
        %v3470 = vpop.f32.mrf.mxu0
        %v3471 = vadd.f32 %v3302, %v3470
        %3472 = vmatmul.bf16.gmra.mxu0 %v1947
        %v3473 = vpop.f32.mrf.mxu0
        %v3474 = vadd.f32 %v3305, %v3473
        %v3475 = vpop.f32.mrf.mxu0
        %v3476 = vadd.f32 %v3307, %v3475
        %3477 = vmatmul.bf16.gmra.mxu0 %v1955
        %v3478 = vpop.f32.mrf.mxu0
        %v3479 = vadd.f32 %v3310, %v3478
        %v3480 = vpop.f32.mrf.mxu0
        %v3481 = vadd.f32 %v3312, %v3480
        %3482 = vmatmul.bf16.gmra.mxu0 %v1963
        %v3483 = vpop.f32.mrf.mxu0
        %v3484 = vadd.f32 %v3315, %v3483
        %v3485 = vpop.f32.mrf.mxu0
        %v3486 = vadd.f32 %v3317, %v3485
        %3487 = vmatmul.bf16.gmra.mxu0 %v1971
        %v3488 = vpop.f32.mrf.mxu0
        %v3489 = vadd.f32 %v3320, %v3488
        %v3490 = vpop.f32.mrf.mxu0
        %v3491 = vadd.f32 %v3322, %v3490
        %3492 = vmatmul.bf16.gmra.mxu0 %v1979
        %v3493 = vpop.f32.mrf.mxu0
        %v3494 = vadd.f32 %v3325, %v3493
        %v3495 = vpop.f32.mrf.mxu0
        %v3496 = vadd.f32 %v3327, %v3495
        %3497 = vmatmul.bf16.gmra.mxu0 %v1987
        %v3498 = vpop.f32.mrf.mxu0
        %v3499 = vadd.f32 %v3330, %v3498
        %v3500 = vpop.f32.mrf.mxu0
        %v3501 = vadd.f32 %v3332, %v3500
        %3502 = vmatmul.bf16.gmra.mxu0 %v1995
        %v3503 = vpop.f32.mrf.mxu0
        %v3504 = vadd.f32 %v3335, %v3503
        %v3505 = vpop.f32.mrf.mxu0
        %v3506 = vadd.f32 %v3337, %v3505
        %3507 = vmatmul.bf16.gmra.mxu0 %v2003
        %v3508 = vpop.f32.mrf.mxu0
        %v3509 = vadd.f32 %v3340, %v3508
        %v3510 = vpop.f32.mrf.mxu0
        %v3511 = vadd.f32 %v3342, %v3510
        %3512 = vmatmul.bf16.gmra.mxu0 %v2011
        %v3513 = vpop.f32.mrf.mxu0
        %v3514 = vadd.f32 %v3345, %v3513
        %v3515 = vpop.f32.mrf.mxu0
        %v3516 = vadd.f32 %v3347, %v3515
        %3517 = vmatmul.bf16.gmra.mxu0 %v2019
        %v3518 = vpop.f32.mrf.mxu0
        %v3519 = vadd.f32 %v3350, %v3518
        %v3520 = vpop.f32.mrf.mxu0
        %v3521 = vadd.f32 %v3352, %v3520
        %3522 = vmatmul.bf16.gmra.mxu0 %v2027
        %v3523 = vpop.f32.mrf.mxu0
        %v3524 = vadd.f32 %v3355, %v3523
        %v3525 = vpop.f32.mrf.mxu0
        %v3526 = vadd.f32 %v3357, %v3525
        %3527 = vmatmul.bf16.gmra.mxu0 %v2035
        %v3528 = vpop.f32.mrf.mxu0
        %v3529 = vadd.f32 %v3360, %v3528
        %v3530 = vpop.f32.mrf.mxu0
        %v3531 = vadd.f32 %v3362, %v3530
        %3532 = vmatmul.bf16.gmra.mxu0 %v2043
        %v3533 = vpop.f32.mrf.mxu0
        %v3534 = vadd.f32 %v3365, %v3533
        %v3535 = vpop.f32.mrf.mxu0
        %v3536 = vadd.f32 %v3367, %v3535
        %3537 = vmatmul.bf16.gmra.mxu0 %v2051
        %v3538 = vpop.f32.mrf.mxu0
        %v3539 = vadd.f32 %v3370, %v3538
        %v3540 = vpop.f32.mrf.mxu0
        %v3541 = vadd.f32 %v3372, %v3540
        %3542 = vmatmul.bf16.gmra.mxu0 %v2059
        %v3543 = vpop.f32.mrf.mxu0
        %v3544 = vadd.f32 %v3375, %v3543
        %v3545 = vpop.f32.mrf.mxu0
        %v3546 = vadd.f32 %v3377, %v3545
        %3547 = vmatmul.bf16.gmra.mxu0 %v2067
        %v3548 = vpop.f32.mrf.mxu0
        %v3549 = vadd.f32 %v3380, %v3548
        %v3550 = vpop.f32.mrf.mxu0
        %v3551 = vadd.f32 %v3382, %v3550
        %3552 = vmatmul.bf16.gmra.mxu0 %v2075
        %v3553 = vpop.f32.mrf.mxu0
        %v3554 = vadd.f32 %v3385, %v3553
        %v3555 = vpop.f32.mrf.mxu0
        %v3556 = vadd.f32 %v3387, %v3555
        %3557 = vmatmul.bf16.gmra.mxu0 %v2083
        %v3558 = vpop.f32.mrf.mxu0
        %v3559 = vadd.f32 %v3390, %v3558
        %v3560 = vpop.f32.mrf.mxu0
        %v3561 = vadd.f32 %v3392, %v3560
        %3562 = vmatmul.bf16.gmra.mxu0 %v2091
        %v3563 = vpop.f32.mrf.mxu0
        %v3564 = vadd.f32 %v3395, %v3563
        %v3565 = vpop.f32.mrf.mxu0
        %v3566 = vadd.f32 %v3397, %v3565
        %3567 = vmatmul.bf16.gmra.mxu0 %v2099
        %v3568 = vpop.f32.mrf.mxu0
        %v3569 = vadd.f32 %v3400, %v3568
        %v3570 = vpop.f32.mrf.mxu0
        %v3571 = vadd.f32 %v3402, %v3570
        %3572 = vmatmul.bf16.gmra.mxu0 %v2107
        %v3573 = vpop.f32.mrf.mxu0
        %v3574 = vadd.f32 %v3405, %v3573
        %v3575 = vpop.f32.mrf.mxu0
        %v3576 = vadd.f32 %v3407, %v3575
        %3577 = vmatmul.bf16.gmra.mxu0 %v2115
        %v3578 = vpop.f32.mrf.mxu0
        %v3579 = vadd.f32 %v3410, %v3578
        %v3580 = vpop.f32.mrf.mxu0
        %v3581 = vadd.f32 %v3412, %v3580
        %3582 = vmatmul.bf16.gmra.mxu0 %v2123
        %v3583 = vpop.f32.mrf.mxu0
        %v3584 = vadd.f32 %v3415, %v3583
        %v3585 = vpop.f32.mrf.mxu0
        %v3586 = vadd.f32 %v3417, %v3585
        %3587 = vmatmul.bf16.gmra.mxu0 %v2131
        %v3588 = vpop.f32.mrf.mxu0
        %v3589 = vadd.f32 %v3420, %v3588
        %v3590 = vpop.f32.mrf.mxu0
        %v3591 = vadd.f32 %v3422, %v3590
        %3592 = vmatmul.bf16.gmra.mxu0 %v2139
        %v3593 = vpop.f32.mrf.mxu0
        %v3594 = vadd.f32 %v3425, %v3593
        %v3595 = vpop.f32.mrf.mxu0
        %v3596 = vadd.f32 %v3427, %v3595
        %3597 = vmatmul.bf16.gmra.mxu0 %v2147
        %v3598 = vpop.f32.mrf.mxu0
        %v3599 = vadd.f32 %v3430, %v3598
        %v3600 = vpop.f32.mrf.mxu0
        %v3601 = vadd.f32 %v3432, %v3600
        %3602 = vmatmul.bf16.gmra.mxu0 %v2155
        %v3603 = vpop.f32.mrf.mxu0
        %v3604 = vadd.f32 %v3435, %v3603
        %v3605 = vpop.f32.mrf.mxu0
        %v3606 = vadd.f32 %v3437, %v3605
        %3607 = vmatmul.bf16.gmra.mxu0 %v2163
        %v3608 = vpop.f32.mrf.mxu0
        %v3609 = vadd.f32 %v3440, %v3608
        %v3610 = vpop.f32.mrf.mxu0
        %v3611 = vadd.f32 %v3442, %v3610
        %3612 = vmatmul.bf16.gmra.mxu0 %v2171
        %v3613 = vpop.f32.mrf.mxu0
        %v3614 = vadd.f32 %v3445, %v3613
        %v3615 = vpop.f32.mrf.mxu0
        %v3616 = vadd.f32 %v3447, %v3615
        %3617 = vmatmul.bf16.gmra.mxu0 %v2179
        %v3618 = vpop.f32.mrf.mxu0
        %v3619 = vadd.f32 %v3450, %v3618
        %v3620 = vpop.f32.mrf.mxu0
        %v3621 = vadd.f32 %v3452, %v3620
        %3622 = vmatmul.bf16.gmra.mxu0 %v2187
        %v3623 = vpop.f32.mrf.mxu0
        %v3624 = vadd.f32 %v3455, %v3623
        %v3625 = vpop.f32.mrf.mxu0
        %v3626 = vadd.f32 %v3457, %v3625
        %3627 = vdwg.mxu0
        %3628 = vmatpush.bf16.msra.mxu0 %v524
        %3629 = vmatpush.bf16.msra.mxu0 %v523
        %3630 = vmatpush.bf16.msra.mxu0 %v522
        %3631 = vmatpush.bf16.msra.mxu0 %v521
        %3632 = vmatpush.bf16.msra.mxu0 %v520
        %3633 = vmatpush.bf16.msra.mxu0 %v519
        %3634 = vmatpush.bf16.msra.mxu0 %v518
        %3635 = vmatpush.bf16.msra.mxu0 %v517
        %3636 = vmatmul.bf16.gmra.mxu0 %v1940
        %v3637 = vpop.f32.mrf.mxu0
        %v3638 = vadd.f32 %v3469, %v3637
        %v3639 = vpop.f32.mrf.mxu0
        %v3640 = vadd.f32 %v3471, %v3639
        %3641 = vmatmul.bf16.gmra.mxu0 %v1948
        %v3642 = vpop.f32.mrf.mxu0
        %v3643 = vadd.f32 %v3474, %v3642
        %v3644 = vpop.f32.mrf.mxu0
        %v3645 = vadd.f32 %v3476, %v3644
        %3646 = vmatmul.bf16.gmra.mxu0 %v1956
        %v3647 = vpop.f32.mrf.mxu0
        %v3648 = vadd.f32 %v3479, %v3647
        %v3649 = vpop.f32.mrf.mxu0
        %v3650 = vadd.f32 %v3481, %v3649
        %3651 = vmatmul.bf16.gmra.mxu0 %v1964
        %v3652 = vpop.f32.mrf.mxu0
        %v3653 = vadd.f32 %v3484, %v3652
        %v3654 = vpop.f32.mrf.mxu0
        %v3655 = vadd.f32 %v3486, %v3654
        %3656 = vmatmul.bf16.gmra.mxu0 %v1972
        %v3657 = vpop.f32.mrf.mxu0
        %v3658 = vadd.f32 %v3489, %v3657
        %v3659 = vpop.f32.mrf.mxu0
        %v3660 = vadd.f32 %v3491, %v3659
        %3661 = vmatmul.bf16.gmra.mxu0 %v1980
        %v3662 = vpop.f32.mrf.mxu0
        %v3663 = vadd.f32 %v3494, %v3662
        %v3664 = vpop.f32.mrf.mxu0
        %v3665 = vadd.f32 %v3496, %v3664
        %3666 = vmatmul.bf16.gmra.mxu0 %v1988
        %v3667 = vpop.f32.mrf.mxu0
        %v3668 = vadd.f32 %v3499, %v3667
        %v3669 = vpop.f32.mrf.mxu0
        %v3670 = vadd.f32 %v3501, %v3669
        %3671 = vmatmul.bf16.gmra.mxu0 %v1996
        %v3672 = vpop.f32.mrf.mxu0
        %v3673 = vadd.f32 %v3504, %v3672
        %v3674 = vpop.f32.mrf.mxu0
        %v3675 = vadd.f32 %v3506, %v3674
        %3676 = vmatmul.bf16.gmra.mxu0 %v2004
        %v3677 = vpop.f32.mrf.mxu0
        %v3678 = vadd.f32 %v3509, %v3677
        %v3679 = vpop.f32.mrf.mxu0
        %v3680 = vadd.f32 %v3511, %v3679
        %3681 = vmatmul.bf16.gmra.mxu0 %v2012
        %v3682 = vpop.f32.mrf.mxu0
        %v3683 = vadd.f32 %v3514, %v3682
        %v3684 = vpop.f32.mrf.mxu0
        %v3685 = vadd.f32 %v3516, %v3684
        %3686 = vmatmul.bf16.gmra.mxu0 %v2020
        %v3687 = vpop.f32.mrf.mxu0
        %v3688 = vadd.f32 %v3519, %v3687
        %v3689 = vpop.f32.mrf.mxu0
        %v3690 = vadd.f32 %v3521, %v3689
        %3691 = vmatmul.bf16.gmra.mxu0 %v2028
        %v3692 = vpop.f32.mrf.mxu0
        %v3693 = vadd.f32 %v3524, %v3692
        %v3694 = vpop.f32.mrf.mxu0
        %v3695 = vadd.f32 %v3526, %v3694
        %3696 = vmatmul.bf16.gmra.mxu0 %v2036
        %v3697 = vpop.f32.mrf.mxu0
        %v3698 = vadd.f32 %v3529, %v3697
        %v3699 = vpop.f32.mrf.mxu0
        %v3700 = vadd.f32 %v3531, %v3699
        %3701 = vmatmul.bf16.gmra.mxu0 %v2044
        %v3702 = vpop.f32.mrf.mxu0
        %v3703 = vadd.f32 %v3534, %v3702
        %v3704 = vpop.f32.mrf.mxu0
        %v3705 = vadd.f32 %v3536, %v3704
        %3706 = vmatmul.bf16.gmra.mxu0 %v2052
        %v3707 = vpop.f32.mrf.mxu0
        %v3708 = vadd.f32 %v3539, %v3707
        %v3709 = vpop.f32.mrf.mxu0
        %v3710 = vadd.f32 %v3541, %v3709
        %3711 = vmatmul.bf16.gmra.mxu0 %v2060
        %v3712 = vpop.f32.mrf.mxu0
        %v3713 = vadd.f32 %v3544, %v3712
        %v3714 = vpop.f32.mrf.mxu0
        %v3715 = vadd.f32 %v3546, %v3714
        %3716 = vmatmul.bf16.gmra.mxu0 %v2068
        %v3717 = vpop.f32.mrf.mxu0
        %v3718 = vadd.f32 %v3549, %v3717
        %v3719 = vpop.f32.mrf.mxu0
        %v3720 = vadd.f32 %v3551, %v3719
        %3721 = vmatmul.bf16.gmra.mxu0 %v2076
        %v3722 = vpop.f32.mrf.mxu0
        %v3723 = vadd.f32 %v3554, %v3722
        %v3724 = vpop.f32.mrf.mxu0
        %v3725 = vadd.f32 %v3556, %v3724
        %3726 = vmatmul.bf16.gmra.mxu0 %v2084
        %v3727 = vpop.f32.mrf.mxu0
        %v3728 = vadd.f32 %v3559, %v3727
        %v3729 = vpop.f32.mrf.mxu0
        %v3730 = vadd.f32 %v3561, %v3729
        %3731 = vmatmul.bf16.gmra.mxu0 %v2092
        %v3732 = vpop.f32.mrf.mxu0
        %v3733 = vadd.f32 %v3564, %v3732
        %v3734 = vpop.f32.mrf.mxu0
        %v3735 = vadd.f32 %v3566, %v3734
        %3736 = vmatmul.bf16.gmra.mxu0 %v2100
        %v3737 = vpop.f32.mrf.mxu0
        %v3738 = vadd.f32 %v3569, %v3737
        %v3739 = vpop.f32.mrf.mxu0
        %v3740 = vadd.f32 %v3571, %v3739
        %3741 = vmatmul.bf16.gmra.mxu0 %v2108
        %v3742 = vpop.f32.mrf.mxu0
        %v3743 = vadd.f32 %v3574, %v3742
        %v3744 = vpop.f32.mrf.mxu0
        %v3745 = vadd.f32 %v3576, %v3744
        %3746 = vmatmul.bf16.gmra.mxu0 %v2116
        %v3747 = vpop.f32.mrf.mxu0
        %v3748 = vadd.f32 %v3579, %v3747
        %v3749 = vpop.f32.mrf.mxu0
        %v3750 = vadd.f32 %v3581, %v3749
        %3751 = vmatmul.bf16.gmra.mxu0 %v2124
        %v3752 = vpop.f32.mrf.mxu0
        %v3753 = vadd.f32 %v3584, %v3752
        %v3754 = vpop.f32.mrf.mxu0
        %v3755 = vadd.f32 %v3586, %v3754
        %3756 = vmatmul.bf16.gmra.mxu0 %v2132
        %v3757 = vpop.f32.mrf.mxu0
        %v3758 = vadd.f32 %v3589, %v3757
        %v3759 = vpop.f32.mrf.mxu0
        %v3760 = vadd.f32 %v3591, %v3759
        %3761 = vmatmul.bf16.gmra.mxu0 %v2140
        %v3762 = vpop.f32.mrf.mxu0
        %v3763 = vadd.f32 %v3594, %v3762
        %v3764 = vpop.f32.mrf.mxu0
        %v3765 = vadd.f32 %v3596, %v3764
        %3766 = vmatmul.bf16.gmra.mxu0 %v2148
        %v3767 = vpop.f32.mrf.mxu0
        %v3768 = vadd.f32 %v3599, %v3767
        %v3769 = vpop.f32.mrf.mxu0
        %v3770 = vadd.f32 %v3601, %v3769
        %3771 = vmatmul.bf16.gmra.mxu0 %v2156
        %v3772 = vpop.f32.mrf.mxu0
        %v3773 = vadd.f32 %v3604, %v3772
        %v3774 = vpop.f32.mrf.mxu0
        %v3775 = vadd.f32 %v3606, %v3774
        %3776 = vmatmul.bf16.gmra.mxu0 %v2164
        %v3777 = vpop.f32.mrf.mxu0
        %v3778 = vadd.f32 %v3609, %v3777
        %v3779 = vpop.f32.mrf.mxu0
        %v3780 = vadd.f32 %v3611, %v3779
        %3781 = vmatmul.bf16.gmra.mxu0 %v2172
        %v3782 = vpop.f32.mrf.mxu0
        %v3783 = vadd.f32 %v3614, %v3782
        %v3784 = vpop.f32.mrf.mxu0
        %v3785 = vadd.f32 %v3616, %v3784
        %3786 = vmatmul.bf16.gmra.mxu0 %v2180
        %v3787 = vpop.f32.mrf.mxu0
        %v3788 = vadd.f32 %v3619, %v3787
        %v3789 = vpop.f32.mrf.mxu0
        %v3790 = vadd.f32 %v3621, %v3789
        %3791 = vmatmul.bf16.gmra.mxu0 %v2188
        %v3792 = vpop.f32.mrf.mxu0
        %v3793 = vadd.f32 %v3624, %v3792
        %v3794 = vpop.f32.mrf.mxu0
        %v3795 = vadd.f32 %v3626, %v3794
        %3796 = vdwg.mxu0
        %v3797 = vmax.f32 %v3638, 0.0
        %v3798 = vmax.f32 %v3640, 0.0
        %v3799 = vmax.f32 %v3643, 0.0
        %v3800 = vmax.f32 %v3645, 0.0
        %v3801 = vmax.f32 %v3648, 0.0
        %v3802 = vmax.f32 %v3650, 0.0
        %v3803 = vmax.f32 %v3653, 0.0
        %v3804 = vmax.f32 %v3655, 0.0
        %v3805 = vmax.f32 %v3658, 0.0
        %v3806 = vmax.f32 %v3660, 0.0
        %v3807 = vmax.f32 %v3663, 0.0
        %v3808 = vmax.f32 %v3665, 0.0
        %v3809 = vmax.f32 %v3668, 0.0
        %v3810 = vmax.f32 %v3670, 0.0
        %v3811 = vmax.f32 %v3673, 0.0
        %v3812 = vmax.f32 %v3675, 0.0
        %v3813 = vmax.f32 %v3678, 0.0
        %v3814 = vmax.f32 %v3680, 0.0
        %v3815 = vmax.f32 %v3683, 0.0
        %v3816 = vmax.f32 %v3685, 0.0
        %v3817 = vmax.f32 %v3688, 0.0
        %v3818 = vmax.f32 %v3690, 0.0
        %v3819 = vmax.f32 %v3693, 0.0
        %v3820 = vmax.f32 %v3695, 0.0
        %v3821 = vmax.f32 %v3698, 0.0
        %v3822 = vmax.f32 %v3700, 0.0
        %v3823 = vmax.f32 %v3703, 0.0
        %v3824 = vmax.f32 %v3705, 0.0
        %v3825 = vmax.f32 %v3708, 0.0
        %v3826 = vmax.f32 %v3710, 0.0
        %v3827 = vmax.f32 %v3713, 0.0
        %v3828 = vmax.f32 %v3715, 0.0
        %v3829 = vmax.f32 %v3718, 0.0
        %v3830 = vmax.f32 %v3720, 0.0
        %v3831 = vmax.f32 %v3723, 0.0
        %v3832 = vmax.f32 %v3725, 0.0
        %v3833 = vmax.f32 %v3728, 0.0
        %v3834 = vmax.f32 %v3730, 0.0
        %v3835 = vmax.f32 %v3733, 0.0
        %v3836 = vmax.f32 %v3735, 0.0
        %v3837 = vmax.f32 %v3738, 0.0
        %v3838 = vmax.f32 %v3740, 0.0
        %v3839 = vmax.f32 %v3743, 0.0
        %v3840 = vmax.f32 %v3745, 0.0
        %v3841 = vmax.f32 %v3748, 0.0
        %v3842 = vmax.f32 %v3750, 0.0
        %v3843 = vmax.f32 %v3753, 0.0
        %v3844 = vmax.f32 %v3755, 0.0
        %v3845 = vmax.f32 %v3758, 0.0
        %v3846 = vmax.f32 %v3760, 0.0
        %v3847 = vmax.f32 %v3763, 0.0
        %v3848 = vmax.f32 %v3765, 0.0
        %v3849 = vmax.f32 %v3768, 0.0
        %v3850 = vmax.f32 %v3770, 0.0
        %v3851 = vmax.f32 %v3773, 0.0
        %v3852 = vmax.f32 %v3775, 0.0
        %v3853 = vmax.f32 %v3778, 0.0
        %v3854 = vmax.f32 %v3780, 0.0
        %v3855 = vmax.f32 %v3783, 0.0
        %v3856 = vmax.f32 %v3785, 0.0
        %v3857 = vmax.f32 %v3788, 0.0
        %v3858 = vmax.f32 %v3790, 0.0
        %v3859 = vmax.f32 %v3793, 0.0
        %v3860 = vmax.f32 %v3795, 0.0
        %v3861 = vpack.c.bf16 %v3798, %v3797
        %v3862 = vpack.c.bf16 %v3800, %v3799
        %v3863 = vpack.c.bf16 %v3802, %v3801
        %v3864 = vpack.c.bf16 %v3804, %v3803
        %v3865 = vpack.c.bf16 %v3806, %v3805
        %v3866 = vpack.c.bf16 %v3808, %v3807
        %v3867 = vpack.c.bf16 %v3810, %v3809
        %v3868 = vpack.c.bf16 %v3812, %v3811
        %v3869 = vpack.c.bf16 %v3814, %v3813
        %v3870 = vpack.c.bf16 %v3816, %v3815
        %v3871 = vpack.c.bf16 %v3818, %v3817
        %v3872 = vpack.c.bf16 %v3820, %v3819
        %v3873 = vpack.c.bf16 %v3822, %v3821
        %v3874 = vpack.c.bf16 %v3824, %v3823
        %v3875 = vpack.c.bf16 %v3826, %v3825
        %v3876 = vpack.c.bf16 %v3828, %v3827
        %v3877 = vpack.c.bf16 %v3830, %v3829
        %v3878 = vpack.c.bf16 %v3832, %v3831
        %v3879 = vpack.c.bf16 %v3834, %v3833
        %v3880 = vpack.c.bf16 %v3836, %v3835
        %v3881 = vpack.c.bf16 %v3838, %v3837
        %v3882 = vpack.c.bf16 %v3840, %v3839
        %v3883 = vpack.c.bf16 %v3842, %v3841
        %v3884 = vpack.c.bf16 %v3844, %v3843
        %v3885 = vpack.c.bf16 %v3846, %v3845
        %v3886 = vpack.c.bf16 %v3848, %v3847
        %v3887 = vpack.c.bf16 %v3850, %v3849
        %v3888 = vpack.c.bf16 %v3852, %v3851
        %v3889 = vpack.c.bf16 %v3854, %v3853
        %v3890 = vpack.c.bf16 %v3856, %v3855
        %v3891 = vpack.c.bf16 %v3858, %v3857
        %v3892 = vpack.c.bf16 %v3860, %v3859
        %v3893 = vld [vmem:[%s3] sm:$0xff]
        %v3894 = vld [vmem:[%s3 + $0x8] sm:$0xff]
        %v3895 = vld [vmem:[%s3 + $0x10] sm:$0xff]
        %v3896 = vld [vmem:[%s3 + $0x18] sm:$0xff]
        %v3897 = vld [vmem:[%s3 + $0x20] sm:$0xff]
        %v3898 = vld [vmem:[%s3 + $0x28] sm:$0xff]
        %v3899 = vld [vmem:[%s3 + $0x30] sm:$0xff]
        %v3900 = vld [vmem:[%s3 + $0x38] sm:$0xff]
        %v3901 = vld [vmem:[%s3 + $0x40] sm:$0xff]
        %v3902 = vld [vmem:[%s3 + $0x48] sm:$0xff]
        %v3903 = vld [vmem:[%s3 + $0x50] sm:$0xff]
        %v3904 = vld [vmem:[%s3 + $0x58] sm:$0xff]
        %v3905 = vld [vmem:[%s3 + $0x60] sm:$0xff]
        %v3906 = vld [vmem:[%s3 + $0x68] sm:$0xff]
        %v3907 = vld [vmem:[%s3 + $0x70] sm:$0xff]
        %v3908 = vld [vmem:[%s3 + $0x78] sm:$0xff]
        %v3909 = vld [vmem:[%s3 + $0x80] sm:$0xff]
        %v3910 = vld [vmem:[%s3 + $0x88] sm:$0xff]
        %v3911 = vld [vmem:[%s3 + $0x90] sm:$0xff]
        %v3912 = vld [vmem:[%s3 + $0x98] sm:$0xff]
        %v3913 = vld [vmem:[%s3 + $0xa0] sm:$0xff]
        %v3914 = vld [vmem:[%s3 + $0xa8] sm:$0xff]
        %v3915 = vld [vmem:[%s3 + $0xb0] sm:$0xff]
        %v3916 = vld [vmem:[%s3 + $0xb8] sm:$0xff]
        %v3917 = vld [vmem:[%s3 + $0xc0] sm:$0xff]
        %v3918 = vld [vmem:[%s3 + $0xc8] sm:$0xff]
        %v3919 = vld [vmem:[%s3 + $0xd0] sm:$0xff]
        %v3920 = vld [vmem:[%s3 + $0xd8] sm:$0xff]
        %v3921 = vld [vmem:[%s3 + $0xe0] sm:$0xff]
        %v3922 = vld [vmem:[%s3 + $0xe8] sm:$0xff]
        %v3923 = vld [vmem:[%s3 + $0xf0] sm:$0xff]
        %v3924 = vld [vmem:[%s3 + $0xf8] sm:$0xff]
        %v3925 = vld [vmem:[%s3 + $0x100] sm:$0xff]
        %v3926 = vld [vmem:[%s3 + $0x108] sm:$0xff]
        %v3927 = vld [vmem:[%s3 + $0x110] sm:$0xff]
        %v3928 = vld [vmem:[%s3 + $0x118] sm:$0xff]
        %v3929 = vld [vmem:[%s3 + $0x120] sm:$0xff]
        %v3930 = vld [vmem:[%s3 + $0x128] sm:$0xff]
        %v3931 = vld [vmem:[%s3 + $0x130] sm:$0xff]
        %v3932 = vld [vmem:[%s3 + $0x138] sm:$0xff]
        %v3933 = vld [vmem:[%s3 + $0x140] sm:$0xff]
        %v3934 = vld [vmem:[%s3 + $0x148] sm:$0xff]
        %v3935 = vld [vmem:[%s3 + $0x150] sm:$0xff]
        %v3936 = vld [vmem:[%s3 + $0x158] sm:$0xff]
        %v3937 = vld [vmem:[%s3 + $0x160] sm:$0xff]
        %v3938 = vld [vmem:[%s3 + $0x168] sm:$0xff]
        %v3939 = vld [vmem:[%s3 + $0x170] sm:$0xff]
        %v3940 = vld [vmem:[%s3 + $0x178] sm:$0xff]
        %v3941 = vld [vmem:[%s3 + $0x180] sm:$0xff]
        %v3942 = vld [vmem:[%s3 + $0x188] sm:$0xff]
        %v3943 = vld [vmem:[%s3 + $0x190] sm:$0xff]
        %v3944 = vld [vmem:[%s3 + $0x198] sm:$0xff]
        %v3945 = vld [vmem:[%s3 + $0x1a0] sm:$0xff]
        %v3946 = vld [vmem:[%s3 + $0x1a8] sm:$0xff]
        %v3947 = vld [vmem:[%s3 + $0x1b0] sm:$0xff]
        %v3948 = vld [vmem:[%s3 + $0x1b8] sm:$0xff]
        %v3949 = vld [vmem:[%s3 + $0x1c0] sm:$0xff]
        %v3950 = vld [vmem:[%s3 + $0x1c8] sm:$0xff]
        %v3951 = vld [vmem:[%s3 + $0x1d0] sm:$0xff]
        %v3952 = vld [vmem:[%s3 + $0x1d8] sm:$0xff]
        %v3953 = vld [vmem:[%s3 + $0x1e0] sm:$0xff]
        %v3954 = vld [vmem:[%s3 + $0x1e8] sm:$0xff]
        %v3955 = vld [vmem:[%s3 + $0x1f0] sm:$0xff]
        %v3956 = vld [vmem:[%s3 + $0x1f8] sm:$0xff]
        %v3957 = vld [vmem:[%s4] sm:$0xff]
        %v3958 = vld [vmem:[%s4 + $0x8] sm:$0xff]
        %v3959 = vld [vmem:[%s4 + $0x10] sm:$0xff]
        %v3960 = vld [vmem:[%s4 + $0x18] sm:$0xff]
        %v3961 = vld [vmem:[%s4 + $0x20] sm:$0xff]
        %v3962 = vld [vmem:[%s4 + $0x28] sm:$0xff]
        %v3963 = vld [vmem:[%s4 + $0x30] sm:$0xff]
        %v3964 = vld [vmem:[%s4 + $0x38] sm:$0xff]
        %v3965 = vld [vmem:[%s4 + $0x40] sm:$0xff]
        %v3966 = vld [vmem:[%s4 + $0x48] sm:$0xff]
        %v3967 = vld [vmem:[%s4 + $0x50] sm:$0xff]
        %v3968 = vld [vmem:[%s4 + $0x58] sm:$0xff]
        %v3969 = vld [vmem:[%s4 + $0x60] sm:$0xff]
        %v3970 = vld [vmem:[%s4 + $0x68] sm:$0xff]
        %v3971 = vld [vmem:[%s4 + $0x70] sm:$0xff]
        %v3972 = vld [vmem:[%s4 + $0x78] sm:$0xff]
        %v3973 = vld [vmem:[%s4 + $0x80] sm:$0xff]
        %v3974 = vld [vmem:[%s4 + $0x88] sm:$0xff]
        %v3975 = vld [vmem:[%s4 + $0x90] sm:$0xff]
        %v3976 = vld [vmem:[%s4 + $0x98] sm:$0xff]
        %v3977 = vld [vmem:[%s4 + $0xa0] sm:$0xff]
        %v3978 = vld [vmem:[%s4 + $0xa8] sm:$0xff]
        %v3979 = vld [vmem:[%s4 + $0xb0] sm:$0xff]
        %v3980 = vld [vmem:[%s4 + $0xb8] sm:$0xff]
        %v3981 = vld [vmem:[%s4 + $0xc0] sm:$0xff]
        %v3982 = vld [vmem:[%s4 + $0xc8] sm:$0xff]
        %v3983 = vld [vmem:[%s4 + $0xd0] sm:$0xff]
        %v3984 = vld [vmem:[%s4 + $0xd8] sm:$0xff]
        %v3985 = vld [vmem:[%s4 + $0xe0] sm:$0xff]
        %v3986 = vld [vmem:[%s4 + $0xe8] sm:$0xff]
        %v3987 = vld [vmem:[%s4 + $0xf0] sm:$0xff]
        %v3988 = vld [vmem:[%s4 + $0xf8] sm:$0xff]
        %3990 = vset.pattern.permute.xlu0 0
        %3991 = vperm.xlu0 %3990, %v3957
        %v3992 = vpop.permute.xlu0 %3991
        %3995 = vset.pattern.permute.xlu0 0
        %3996 = vperm.xlu0 %3995, %v3958
        %v3997 = vpop.permute.xlu0 %3996
        %4000 = vset.pattern.permute.xlu0 0
        %4001 = vperm.xlu0 %4000, %v3959
        %v4002 = vpop.permute.xlu0 %4001
        %4005 = vset.pattern.permute.xlu0 0
        %4006 = vperm.xlu0 %4005, %v3960
        %v4007 = vpop.permute.xlu0 %4006
        %4010 = vset.pattern.permute.xlu0 0
        %4011 = vperm.xlu0 %4010, %v3961
        %v4012 = vpop.permute.xlu0 %4011
        %4015 = vset.pattern.permute.xlu0 0
        %4016 = vperm.xlu0 %4015, %v3962
        %v4017 = vpop.permute.xlu0 %4016
        %4020 = vset.pattern.permute.xlu0 0
        %4021 = vperm.xlu0 %4020, %v3963
        %v4022 = vpop.permute.xlu0 %4021
        %4025 = vset.pattern.permute.xlu0 0
        %4026 = vperm.xlu0 %4025, %v3964
        %v4027 = vpop.permute.xlu0 %4026
        %4030 = vset.pattern.permute.xlu0 0
        %4031 = vperm.xlu0 %4030, %v3965
        %v4032 = vpop.permute.xlu0 %4031
        %4035 = vset.pattern.permute.xlu0 0
        %4036 = vperm.xlu0 %4035, %v3966
        %v4037 = vpop.permute.xlu0 %4036
        %4040 = vset.pattern.permute.xlu0 0
        %4041 = vperm.xlu0 %4040, %v3967
        %v4042 = vpop.permute.xlu0 %4041
        %4045 = vset.pattern.permute.xlu0 0
        %4046 = vperm.xlu0 %4045, %v3968
        %v4047 = vpop.permute.xlu0 %4046
        %4050 = vset.pattern.permute.xlu0 0
        %4051 = vperm.xlu0 %4050, %v3969
        %v4052 = vpop.permute.xlu0 %4051
        %4055 = vset.pattern.permute.xlu0 0
        %4056 = vperm.xlu0 %4055, %v3970
        %v4057 = vpop.permute.xlu0 %4056
        %4060 = vset.pattern.permute.xlu0 0
        %4061 = vperm.xlu0 %4060, %v3971
        %v4062 = vpop.permute.xlu0 %4061
        %4065 = vset.pattern.permute.xlu0 0
        %4066 = vperm.xlu0 %4065, %v3972
        %v4067 = vpop.permute.xlu0 %4066
        %4070 = vset.pattern.permute.xlu0 0
        %4071 = vperm.xlu0 %4070, %v3973
        %v4072 = vpop.permute.xlu0 %4071
        %4075 = vset.pattern.permute.xlu0 0
        %4076 = vperm.xlu0 %4075, %v3974
        %v4077 = vpop.permute.xlu0 %4076
        %4080 = vset.pattern.permute.xlu0 0
        %4081 = vperm.xlu0 %4080, %v3975
        %v4082 = vpop.permute.xlu0 %4081
        %4085 = vset.pattern.permute.xlu0 0
        %4086 = vperm.xlu0 %4085, %v3976
        %v4087 = vpop.permute.xlu0 %4086
        %4090 = vset.pattern.permute.xlu0 0
        %4091 = vperm.xlu0 %4090, %v3977
        %v4092 = vpop.permute.xlu0 %4091
        %4095 = vset.pattern.permute.xlu0 0
        %4096 = vperm.xlu0 %4095, %v3978
        %v4097 = vpop.permute.xlu0 %4096
        %4100 = vset.pattern.permute.xlu0 0
        %4101 = vperm.xlu0 %4100, %v3979
        %v4102 = vpop.permute.xlu0 %4101
        %4105 = vset.pattern.permute.xlu0 0
        %4106 = vperm.xlu0 %4105, %v3980
        %v4107 = vpop.permute.xlu0 %4106
        %4110 = vset.pattern.permute.xlu0 0
        %4111 = vperm.xlu0 %4110, %v3981
        %v4112 = vpop.permute.xlu0 %4111
        %4115 = vset.pattern.permute.xlu0 0
        %4116 = vperm.xlu0 %4115, %v3982
        %v4117 = vpop.permute.xlu0 %4116
        %4120 = vset.pattern.permute.xlu0 0
        %4121 = vperm.xlu0 %4120, %v3983
        %v4122 = vpop.permute.xlu0 %4121
        %4125 = vset.pattern.permute.xlu0 0
        %4126 = vperm.xlu0 %4125, %v3984
        %v4127 = vpop.permute.xlu0 %4126
        %4130 = vset.pattern.permute.xlu0 0
        %4131 = vperm.xlu0 %4130, %v3985
        %v4132 = vpop.permute.xlu0 %4131
        %4135 = vset.pattern.permute.xlu0 0
        %4136 = vperm.xlu0 %4135, %v3986
        %v4137 = vpop.permute.xlu0 %4136
        %4140 = vset.pattern.permute.xlu0 0
        %4141 = vperm.xlu0 %4140, %v3987
        %v4142 = vpop.permute.xlu0 %4141
        %4145 = vset.pattern.permute.xlu0 0
        %4146 = vperm.xlu0 %4145, %v3988
        %v4147 = vpop.permute.xlu0 %4146
        %v4213 = vunpack.c.l.b16 %v3893
        %v4214 = vunpack.c.h.b16 %v3893
        %v4215 = vunpack.c.l.b16 %v3894
        %v4216 = vunpack.c.h.b16 %v3894
        %v4217 = vunpack.c.l.b16 %v3895
        %v4218 = vunpack.c.h.b16 %v3895
        %v4219 = vunpack.c.l.b16 %v3896
        %v4220 = vunpack.c.h.b16 %v3896
        %v4221 = vunpack.c.l.b16 %v3897
        %v4222 = vunpack.c.h.b16 %v3897
        %v4223 = vunpack.c.l.b16 %v3898
        %v4224 = vunpack.c.h.b16 %v3898
        %v4225 = vunpack.c.l.b16 %v3899
        %v4226 = vunpack.c.h.b16 %v3899
        %v4227 = vunpack.c.l.b16 %v3900
        %v4228 = vunpack.c.h.b16 %v3900
        %v4229 = vunpack.c.l.b16 %v3901
        %v4230 = vunpack.c.h.b16 %v3901
        %v4231 = vunpack.c.l.b16 %v3902
        %v4232 = vunpack.c.h.b16 %v3902
        %v4233 = vunpack.c.l.b16 %v3903
        %v4234 = vunpack.c.h.b16 %v3903
        %v4235 = vunpack.c.l.b16 %v3904
        %v4236 = vunpack.c.h.b16 %v3904
        %v4237 = vunpack.c.l.b16 %v3905
        %v4238 = vunpack.c.h.b16 %v3905
        %v4239 = vunpack.c.l.b16 %v3906
        %v4240 = vunpack.c.h.b16 %v3906
        %v4241 = vunpack.c.l.b16 %v3907
        %v4242 = vunpack.c.h.b16 %v3907
        %v4243 = vunpack.c.l.b16 %v3908
        %v4244 = vunpack.c.h.b16 %v3908
        %v4245 = vunpack.c.l.b16 %v3909
        %v4246 = vunpack.c.h.b16 %v3909
        %v4247 = vunpack.c.l.b16 %v3910
        %v4248 = vunpack.c.h.b16 %v3910
        %v4249 = vunpack.c.l.b16 %v3911
        %v4250 = vunpack.c.h.b16 %v3911
        %v4251 = vunpack.c.l.b16 %v3912
        %v4252 = vunpack.c.h.b16 %v3912
        %v4253 = vunpack.c.l.b16 %v3913
        %v4254 = vunpack.c.h.b16 %v3913
        %v4255 = vunpack.c.l.b16 %v3914
        %v4256 = vunpack.c.h.b16 %v3914
        %v4257 = vunpack.c.l.b16 %v3915
        %v4258 = vunpack.c.h.b16 %v3915
        %v4259 = vunpack.c.l.b16 %v3916
        %v4260 = vunpack.c.h.b16 %v3916
        %v4261 = vunpack.c.l.b16 %v3917
        %v4262 = vunpack.c.h.b16 %v3917
        %v4263 = vunpack.c.l.b16 %v3918
        %v4264 = vunpack.c.h.b16 %v3918
        %v4265 = vunpack.c.l.b16 %v3919
        %v4266 = vunpack.c.h.b16 %v3919
        %v4267 = vunpack.c.l.b16 %v3920
        %v4268 = vunpack.c.h.b16 %v3920
        %v4269 = vunpack.c.l.b16 %v3921
        %v4270 = vunpack.c.h.b16 %v3921
        %v4271 = vunpack.c.l.b16 %v3922
        %v4272 = vunpack.c.h.b16 %v3922
        %v4273 = vunpack.c.l.b16 %v3923
        %v4274 = vunpack.c.h.b16 %v3923
        %v4275 = vunpack.c.l.b16 %v3924
        %v4276 = vunpack.c.h.b16 %v3924
        %v4277 = vunpack.c.l.b16 %v3925
        %v4278 = vunpack.c.h.b16 %v3925
        %v4279 = vunpack.c.l.b16 %v3926
        %v4280 = vunpack.c.h.b16 %v3926
        %v4281 = vunpack.c.l.b16 %v3927
        %v4282 = vunpack.c.h.b16 %v3927
        %v4283 = vunpack.c.l.b16 %v3928
        %v4284 = vunpack.c.h.b16 %v3928
        %v4285 = vunpack.c.l.b16 %v3929
        %v4286 = vunpack.c.h.b16 %v3929
        %v4287 = vunpack.c.l.b16 %v3930
        %v4288 = vunpack.c.h.b16 %v3930
        %v4289 = vunpack.c.l.b16 %v3931
        %v4290 = vunpack.c.h.b16 %v3931
        %v4291 = vunpack.c.l.b16 %v3932
        %v4292 = vunpack.c.h.b16 %v3932
        %v4293 = vunpack.c.l.b16 %v3933
        %v4294 = vunpack.c.h.b16 %v3933
        %v4295 = vunpack.c.l.b16 %v3934
        %v4296 = vunpack.c.h.b16 %v3934
        %v4297 = vunpack.c.l.b16 %v3935
        %v4298 = vunpack.c.h.b16 %v3935
        %v4299 = vunpack.c.l.b16 %v3936
        %v4300 = vunpack.c.h.b16 %v3936
        %v4301 = vunpack.c.l.b16 %v3937
        %v4302 = vunpack.c.h.b16 %v3937
        %v4303 = vunpack.c.l.b16 %v3938
        %v4304 = vunpack.c.h.b16 %v3938
        %v4305 = vunpack.c.l.b16 %v3939
        %v4306 = vunpack.c.h.b16 %v3939
        %v4307 = vunpack.c.l.b16 %v3940
        %v4308 = vunpack.c.h.b16 %v3940
        %v4309 = vunpack.c.l.b16 %v3941
        %v4310 = vunpack.c.h.b16 %v3941
        %v4311 = vunpack.c.l.b16 %v3942
        %v4312 = vunpack.c.h.b16 %v3942
        %v4313 = vunpack.c.l.b16 %v3943
        %v4314 = vunpack.c.h.b16 %v3943
        %v4315 = vunpack.c.l.b16 %v3944
        %v4316 = vunpack.c.h.b16 %v3944
        %v4317 = vunpack.c.l.b16 %v3945
        %v4318 = vunpack.c.h.b16 %v3945
        %v4319 = vunpack.c.l.b16 %v3946
        %v4320 = vunpack.c.h.b16 %v3946
        %v4321 = vunpack.c.l.b16 %v3947
        %v4322 = vunpack.c.h.b16 %v3947
        %v4323 = vunpack.c.l.b16 %v3948
        %v4324 = vunpack.c.h.b16 %v3948
        %v4325 = vunpack.c.l.b16 %v3949
        %v4326 = vunpack.c.h.b16 %v3949
        %v4327 = vunpack.c.l.b16 %v3950
        %v4328 = vunpack.c.h.b16 %v3950
        %v4329 = vunpack.c.l.b16 %v3951
        %v4330 = vunpack.c.h.b16 %v3951
        %v4331 = vunpack.c.l.b16 %v3952
        %v4332 = vunpack.c.h.b16 %v3952
        %v4333 = vunpack.c.l.b16 %v3953
        %v4334 = vunpack.c.h.b16 %v3953
        %v4335 = vunpack.c.l.b16 %v3954
        %v4336 = vunpack.c.h.b16 %v3954
        %v4337 = vunpack.c.l.b16 %v3955
        %v4338 = vunpack.c.h.b16 %v3955
        %v4339 = vunpack.c.l.b16 %v3956
        %v4340 = vunpack.c.h.b16 %v3956
        %v4341 = vpack.c.b16 %v4217, %v4213
        %v4342 = vpack.c.b16 %v4218, %v4214
        %v4343 = vpack.c.b16 %v4219, %v4215
        %v4344 = vpack.c.b16 %v4220, %v4216
        %v4345 = vpack.c.b16 %v4225, %v4221
        %v4346 = vpack.c.b16 %v4226, %v4222
        %v4347 = vpack.c.b16 %v4227, %v4223
        %v4348 = vpack.c.b16 %v4228, %v4224
        %v4349 = vpack.c.b16 %v4233, %v4229
        %v4350 = vpack.c.b16 %v4234, %v4230
        %v4351 = vpack.c.b16 %v4235, %v4231
        %v4352 = vpack.c.b16 %v4236, %v4232
        %v4353 = vpack.c.b16 %v4241, %v4237
        %v4354 = vpack.c.b16 %v4242, %v4238
        %v4355 = vpack.c.b16 %v4243, %v4239
        %v4356 = vpack.c.b16 %v4244, %v4240
        %v4357 = vpack.c.b16 %v4249, %v4245
        %v4358 = vpack.c.b16 %v4250, %v4246
        %v4359 = vpack.c.b16 %v4251, %v4247
        %v4360 = vpack.c.b16 %v4252, %v4248
        %v4361 = vpack.c.b16 %v4257, %v4253
        %v4362 = vpack.c.b16 %v4258, %v4254
        %v4363 = vpack.c.b16 %v4259, %v4255
        %v4364 = vpack.c.b16 %v4260, %v4256
        %v4365 = vpack.c.b16 %v4265, %v4261
        %v4366 = vpack.c.b16 %v4266, %v4262
        %v4367 = vpack.c.b16 %v4267, %v4263
        %v4368 = vpack.c.b16 %v4268, %v4264
        %v4369 = vpack.c.b16 %v4273, %v4269
        %v4370 = vpack.c.b16 %v4274, %v4270
        %v4371 = vpack.c.b16 %v4275, %v4271
        %v4372 = vpack.c.b16 %v4276, %v4272
        %v4373 = vpack.c.b16 %v4281, %v4277
        %v4374 = vpack.c.b16 %v4282, %v4278
        %v4375 = vpack.c.b16 %v4283, %v4279
        %v4376 = vpack.c.b16 %v4284, %v4280
        %v4377 = vpack.c.b16 %v4289, %v4285
        %v4378 = vpack.c.b16 %v4290, %v4286
        %v4379 = vpack.c.b16 %v4291, %v4287
        %v4380 = vpack.c.b16 %v4292, %v4288
        %v4381 = vpack.c.b16 %v4297, %v4293
        %v4382 = vpack.c.b16 %v4298, %v4294
        %v4383 = vpack.c.b16 %v4299, %v4295
        %v4384 = vpack.c.b16 %v4300, %v4296
        %v4385 = vpack.c.b16 %v4305, %v4301
        %v4386 = vpack.c.b16 %v4306, %v4302
        %v4387 = vpack.c.b16 %v4307, %v4303
        %v4388 = vpack.c.b16 %v4308, %v4304
        %v4389 = vpack.c.b16 %v4313, %v4309
        %v4390 = vpack.c.b16 %v4314, %v4310
        %v4391 = vpack.c.b16 %v4315, %v4311
        %v4392 = vpack.c.b16 %v4316, %v4312
        %v4393 = vpack.c.b16 %v4321, %v4317
        %v4394 = vpack.c.b16 %v4322, %v4318
        %v4395 = vpack.c.b16 %v4323, %v4319
        %v4396 = vpack.c.b16 %v4324, %v4320
        %v4397 = vpack.c.b16 %v4329, %v4325
        %v4398 = vpack.c.b16 %v4330, %v4326
        %v4399 = vpack.c.b16 %v4331, %v4327
        %v4400 = vpack.c.b16 %v4332, %v4328
        %v4401 = vpack.c.b16 %v4337, %v4333
        %v4402 = vpack.c.b16 %v4338, %v4334
        %v4403 = vpack.c.b16 %v4339, %v4335
        %v4404 = vpack.c.b16 %v4340, %v4336
        %4469 = vmatpush.bf16.msra.mxu0 %v3868
        %4470 = vmatpush.bf16.msra.mxu0 %v3867
        %4471 = vmatpush.bf16.msra.mxu0 %v3866
        %4472 = vmatpush.bf16.msra.mxu0 %v3865
        %4473 = vmatpush.bf16.msra.mxu0 %v3864
        %4474 = vmatpush.bf16.msra.mxu0 %v3863
        %4475 = vmatpush.bf16.msra.mxu0 %v3862
        %4476 = vmatpush.bf16.msra.mxu0 %v3861
        %4477 = vmatmul.bf16.gmra.mxu0 %v4341
        %v4478 = vpop.f32.mrf.mxu0
        %v4479 = vadd.f32 %v3992, %v4478
        %v4480 = vpop.f32.mrf.mxu0
        %v4481 = vadd.f32 %v3997, %v4480
        %4482 = vmatmul.bf16.gmra.mxu0 %v4345
        %v4483 = vpop.f32.mrf.mxu0
        %v4484 = vadd.f32 %v4002, %v4483
        %v4485 = vpop.f32.mrf.mxu0
        %v4486 = vadd.f32 %v4007, %v4485
        %4487 = vmatmul.bf16.gmra.mxu0 %v4349
        %v4488 = vpop.f32.mrf.mxu0
        %v4489 = vadd.f32 %v4012, %v4488
        %v4490 = vpop.f32.mrf.mxu0
        %v4491 = vadd.f32 %v4017, %v4490
        %4492 = vmatmul.bf16.gmra.mxu0 %v4353
        %v4493 = vpop.f32.mrf.mxu0
        %v4494 = vadd.f32 %v4022, %v4493
        %v4495 = vpop.f32.mrf.mxu0
        %v4496 = vadd.f32 %v4027, %v4495
        %4497 = vmatmul.bf16.gmra.mxu0 %v4357
        %v4498 = vpop.f32.mrf.mxu0
        %v4499 = vadd.f32 %v4032, %v4498
        %v4500 = vpop.f32.mrf.mxu0
        %v4501 = vadd.f32 %v4037, %v4500
        %4502 = vmatmul.bf16.gmra.mxu0 %v4361
        %v4503 = vpop.f32.mrf.mxu0
        %v4504 = vadd.f32 %v4042, %v4503
        %v4505 = vpop.f32.mrf.mxu0
        %v4506 = vadd.f32 %v4047, %v4505
        %4507 = vmatmul.bf16.gmra.mxu0 %v4365
        %v4508 = vpop.f32.mrf.mxu0
        %v4509 = vadd.f32 %v4052, %v4508
        %v4510 = vpop.f32.mrf.mxu0
        %v4511 = vadd.f32 %v4057, %v4510
        %4512 = vmatmul.bf16.gmra.mxu0 %v4369
        %v4513 = vpop.f32.mrf.mxu0
        %v4514 = vadd.f32 %v4062, %v4513
        %v4515 = vpop.f32.mrf.mxu0
        %v4516 = vadd.f32 %v4067, %v4515
        %4517 = vmatmul.bf16.gmra.mxu0 %v4373
        %v4518 = vpop.f32.mrf.mxu0
        %v4519 = vadd.f32 %v4072, %v4518
        %v4520 = vpop.f32.mrf.mxu0
        %v4521 = vadd.f32 %v4077, %v4520
        %4522 = vmatmul.bf16.gmra.mxu0 %v4377
        %v4523 = vpop.f32.mrf.mxu0
        %v4524 = vadd.f32 %v4082, %v4523
        %v4525 = vpop.f32.mrf.mxu0
        %v4526 = vadd.f32 %v4087, %v4525
        %4527 = vmatmul.bf16.gmra.mxu0 %v4381
        %v4528 = vpop.f32.mrf.mxu0
        %v4529 = vadd.f32 %v4092, %v4528
        %v4530 = vpop.f32.mrf.mxu0
        %v4531 = vadd.f32 %v4097, %v4530
        %4532 = vmatmul.bf16.gmra.mxu0 %v4385
        %v4533 = vpop.f32.mrf.mxu0
        %v4534 = vadd.f32 %v4102, %v4533
        %v4535 = vpop.f32.mrf.mxu0
        %v4536 = vadd.f32 %v4107, %v4535
        %4537 = vmatmul.bf16.gmra.mxu0 %v4389
        %v4538 = vpop.f32.mrf.mxu0
        %v4539 = vadd.f32 %v4112, %v4538
        %v4540 = vpop.f32.mrf.mxu0
        %v4541 = vadd.f32 %v4117, %v4540
        %4542 = vmatmul.bf16.gmra.mxu0 %v4393
        %v4543 = vpop.f32.mrf.mxu0
        %v4544 = vadd.f32 %v4122, %v4543
        %v4545 = vpop.f32.mrf.mxu0
        %v4546 = vadd.f32 %v4127, %v4545
        %4547 = vmatmul.bf16.gmra.mxu0 %v4397
        %v4548 = vpop.f32.mrf.mxu0
        %v4549 = vadd.f32 %v4132, %v4548
        %v4550 = vpop.f32.mrf.mxu0
        %v4551 = vadd.f32 %v4137, %v4550
        %4552 = vmatmul.bf16.gmra.mxu0 %v4401
        %v4553 = vpop.f32.mrf.mxu0
        %v4554 = vadd.f32 %v4142, %v4553
        %v4555 = vpop.f32.mrf.mxu0
        %v4556 = vadd.f32 %v4147, %v4555
        %4557 = vdwg.mxu0
        %4558 = vmatpush.bf16.msra.mxu0 %v3876
        %4559 = vmatpush.bf16.msra.mxu0 %v3875
        %4560 = vmatpush.bf16.msra.mxu0 %v3874
        %4561 = vmatpush.bf16.msra.mxu0 %v3873
        %4562 = vmatpush.bf16.msra.mxu0 %v3872
        %4563 = vmatpush.bf16.msra.mxu0 %v3871
        %4564 = vmatpush.bf16.msra.mxu0 %v3870
        %4565 = vmatpush.bf16.msra.mxu0 %v3869
        %4566 = vmatmul.bf16.gmra.mxu0 %v4342
        %v4567 = vpop.f32.mrf.mxu0
        %v4568 = vadd.f32 %v4479, %v4567
        %v4569 = vpop.f32.mrf.mxu0
        %v4570 = vadd.f32 %v4481, %v4569
        %4571 = vmatmul.bf16.gmra.mxu0 %v4346
        %v4572 = vpop.f32.mrf.mxu0
        %v4573 = vadd.f32 %v4484, %v4572
        %v4574 = vpop.f32.mrf.mxu0
        %v4575 = vadd.f32 %v4486, %v4574
        %4576 = vmatmul.bf16.gmra.mxu0 %v4350
        %v4577 = vpop.f32.mrf.mxu0
        %v4578 = vadd.f32 %v4489, %v4577
        %v4579 = vpop.f32.mrf.mxu0
        %v4580 = vadd.f32 %v4491, %v4579
        %4581 = vmatmul.bf16.gmra.mxu0 %v4354
        %v4582 = vpop.f32.mrf.mxu0
        %v4583 = vadd.f32 %v4494, %v4582
        %v4584 = vpop.f32.mrf.mxu0
        %v4585 = vadd.f32 %v4496, %v4584
        %4586 = vmatmul.bf16.gmra.mxu0 %v4358
        %v4587 = vpop.f32.mrf.mxu0
        %v4588 = vadd.f32 %v4499, %v4587
        %v4589 = vpop.f32.mrf.mxu0
        %v4590 = vadd.f32 %v4501, %v4589
        %4591 = vmatmul.bf16.gmra.mxu0 %v4362
        %v4592 = vpop.f32.mrf.mxu0
        %v4593 = vadd.f32 %v4504, %v4592
        %v4594 = vpop.f32.mrf.mxu0
        %v4595 = vadd.f32 %v4506, %v4594
        %4596 = vmatmul.bf16.gmra.mxu0 %v4366
        %v4597 = vpop.f32.mrf.mxu0
        %v4598 = vadd.f32 %v4509, %v4597
        %v4599 = vpop.f32.mrf.mxu0
        %v4600 = vadd.f32 %v4511, %v4599
        %4601 = vmatmul.bf16.gmra.mxu0 %v4370
        %v4602 = vpop.f32.mrf.mxu0
        %v4603 = vadd.f32 %v4514, %v4602
        %v4604 = vpop.f32.mrf.mxu0
        %v4605 = vadd.f32 %v4516, %v4604
        %4606 = vmatmul.bf16.gmra.mxu0 %v4374
        %v4607 = vpop.f32.mrf.mxu0
        %v4608 = vadd.f32 %v4519, %v4607
        %v4609 = vpop.f32.mrf.mxu0
        %v4610 = vadd.f32 %v4521, %v4609
        %4611 = vmatmul.bf16.gmra.mxu0 %v4378
        %v4612 = vpop.f32.mrf.mxu0
        %v4613 = vadd.f32 %v4524, %v4612
        %v4614 = vpop.f32.mrf.mxu0
        %v4615 = vadd.f32 %v4526, %v4614
        %4616 = vmatmul.bf16.gmra.mxu0 %v4382
        %v4617 = vpop.f32.mrf.mxu0
        %v4618 = vadd.f32 %v4529, %v4617
        %v4619 = vpop.f32.mrf.mxu0
        %v4620 = vadd.f32 %v4531, %v4619
        %4621 = vmatmul.bf16.gmra.mxu0 %v4386
        %v4622 = vpop.f32.mrf.mxu0
        %v4623 = vadd.f32 %v4534, %v4622
        %v4624 = vpop.f32.mrf.mxu0
        %v4625 = vadd.f32 %v4536, %v4624
        %4626 = vmatmul.bf16.gmra.mxu0 %v4390
        %v4627 = vpop.f32.mrf.mxu0
        %v4628 = vadd.f32 %v4539, %v4627
        %v4629 = vpop.f32.mrf.mxu0
        %v4630 = vadd.f32 %v4541, %v4629
        %4631 = vmatmul.bf16.gmra.mxu0 %v4394
        %v4632 = vpop.f32.mrf.mxu0
        %v4633 = vadd.f32 %v4544, %v4632
        %v4634 = vpop.f32.mrf.mxu0
        %v4635 = vadd.f32 %v4546, %v4634
        %4636 = vmatmul.bf16.gmra.mxu0 %v4398
        %v4637 = vpop.f32.mrf.mxu0
        %v4638 = vadd.f32 %v4549, %v4637
        %v4639 = vpop.f32.mrf.mxu0
        %v4640 = vadd.f32 %v4551, %v4639
        %4641 = vmatmul.bf16.gmra.mxu0 %v4402
        %v4642 = vpop.f32.mrf.mxu0
        %v4643 = vadd.f32 %v4554, %v4642
        %v4644 = vpop.f32.mrf.mxu0
        %v4645 = vadd.f32 %v4556, %v4644
        %4646 = vdwg.mxu0
        %4647 = vmatpush.bf16.msra.mxu0 %v3884
        %4648 = vmatpush.bf16.msra.mxu0 %v3883
        %4649 = vmatpush.bf16.msra.mxu0 %v3882
        %4650 = vmatpush.bf16.msra.mxu0 %v3881
        %4651 = vmatpush.bf16.msra.mxu0 %v3880
        %4652 = vmatpush.bf16.msra.mxu0 %v3879
        %4653 = vmatpush.bf16.msra.mxu0 %v3878
        %4654 = vmatpush.bf16.msra.mxu0 %v3877
        %4655 = vmatmul.bf16.gmra.mxu0 %v4343
        %v4656 = vpop.f32.mrf.mxu0
        %v4657 = vadd.f32 %v4568, %v4656
        %v4658 = vpop.f32.mrf.mxu0
        %v4659 = vadd.f32 %v4570, %v4658
        %4660 = vmatmul.bf16.gmra.mxu0 %v4347
        %v4661 = vpop.f32.mrf.mxu0
        %v4662 = vadd.f32 %v4573, %v4661
        %v4663 = vpop.f32.mrf.mxu0
        %v4664 = vadd.f32 %v4575, %v4663
        %4665 = vmatmul.bf16.gmra.mxu0 %v4351
        %v4666 = vpop.f32.mrf.mxu0
        %v4667 = vadd.f32 %v4578, %v4666
        %v4668 = vpop.f32.mrf.mxu0
        %v4669 = vadd.f32 %v4580, %v4668
        %4670 = vmatmul.bf16.gmra.mxu0 %v4355
        %v4671 = vpop.f32.mrf.mxu0
        %v4672 = vadd.f32 %v4583, %v4671
        %v4673 = vpop.f32.mrf.mxu0
        %v4674 = vadd.f32 %v4585, %v4673
        %4675 = vmatmul.bf16.gmra.mxu0 %v4359
        %v4676 = vpop.f32.mrf.mxu0
        %v4677 = vadd.f32 %v4588, %v4676
        %v4678 = vpop.f32.mrf.mxu0
        %v4679 = vadd.f32 %v4590, %v4678
        %4680 = vmatmul.bf16.gmra.mxu0 %v4363
        %v4681 = vpop.f32.mrf.mxu0
        %v4682 = vadd.f32 %v4593, %v4681
        %v4683 = vpop.f32.mrf.mxu0
        %v4684 = vadd.f32 %v4595, %v4683
        %4685 = vmatmul.bf16.gmra.mxu0 %v4367
        %v4686 = vpop.f32.mrf.mxu0
        %v4687 = vadd.f32 %v4598, %v4686
        %v4688 = vpop.f32.mrf.mxu0
        %v4689 = vadd.f32 %v4600, %v4688
        %4690 = vmatmul.bf16.gmra.mxu0 %v4371
        %v4691 = vpop.f32.mrf.mxu0
        %v4692 = vadd.f32 %v4603, %v4691
        %v4693 = vpop.f32.mrf.mxu0
        %v4694 = vadd.f32 %v4605, %v4693
        %4695 = vmatmul.bf16.gmra.mxu0 %v4375
        %v4696 = vpop.f32.mrf.mxu0
        %v4697 = vadd.f32 %v4608, %v4696
        %v4698 = vpop.f32.mrf.mxu0
        %v4699 = vadd.f32 %v4610, %v4698
        %4700 = vmatmul.bf16.gmra.mxu0 %v4379
        %v4701 = vpop.f32.mrf.mxu0
        %v4702 = vadd.f32 %v4613, %v4701
        %v4703 = vpop.f32.mrf.mxu0
        %v4704 = vadd.f32 %v4615, %v4703
        %4705 = vmatmul.bf16.gmra.mxu0 %v4383
        %v4706 = vpop.f32.mrf.mxu0
        %v4707 = vadd.f32 %v4618, %v4706
        %v4708 = vpop.f32.mrf.mxu0
        %v4709 = vadd.f32 %v4620, %v4708
        %4710 = vmatmul.bf16.gmra.mxu0 %v4387
        %v4711 = vpop.f32.mrf.mxu0
        %v4712 = vadd.f32 %v4623, %v4711
        %v4713 = vpop.f32.mrf.mxu0
        %v4714 = vadd.f32 %v4625, %v4713
        %4715 = vmatmul.bf16.gmra.mxu0 %v4391
        %v4716 = vpop.f32.mrf.mxu0
        %v4717 = vadd.f32 %v4628, %v4716
        %v4718 = vpop.f32.mrf.mxu0
        %v4719 = vadd.f32 %v4630, %v4718
        %4720 = vmatmul.bf16.gmra.mxu0 %v4395
        %v4721 = vpop.f32.mrf.mxu0
        %v4722 = vadd.f32 %v4633, %v4721
        %v4723 = vpop.f32.mrf.mxu0
        %v4724 = vadd.f32 %v4635, %v4723
        %4725 = vmatmul.bf16.gmra.mxu0 %v4399
        %v4726 = vpop.f32.mrf.mxu0
        %v4727 = vadd.f32 %v4638, %v4726
        %v4728 = vpop.f32.mrf.mxu0
        %v4729 = vadd.f32 %v4640, %v4728
        %4730 = vmatmul.bf16.gmra.mxu0 %v4403
        %v4731 = vpop.f32.mrf.mxu0
        %v4732 = vadd.f32 %v4643, %v4731
        %v4733 = vpop.f32.mrf.mxu0
        %v4734 = vadd.f32 %v4645, %v4733
        %4735 = vdwg.mxu0
        %4736 = vmatpush.bf16.msra.mxu0 %v3892
        %4737 = vmatpush.bf16.msra.mxu0 %v3891
        %4738 = vmatpush.bf16.msra.mxu0 %v3890
        %4739 = vmatpush.bf16.msra.mxu0 %v3889
        %4740 = vmatpush.bf16.msra.mxu0 %v3888
        %4741 = vmatpush.bf16.msra.mxu0 %v3887
        %4742 = vmatpush.bf16.msra.mxu0 %v3886
        %4743 = vmatpush.bf16.msra.mxu0 %v3885
        %4744 = vmatmul.bf16.gmra.mxu0 %v4344
        %v4745 = vpop.f32.mrf.mxu0
        %v4746 = vadd.f32 %v4657, %v4745
        %v4747 = vpop.f32.mrf.mxu0
        %v4748 = vadd.f32 %v4659, %v4747
        %4749 = vmatmul.bf16.gmra.mxu0 %v4348
        %v4750 = vpop.f32.mrf.mxu0
        %v4751 = vadd.f32 %v4662, %v4750
        %v4752 = vpop.f32.mrf.mxu0
        %v4753 = vadd.f32 %v4664, %v4752
        %4754 = vmatmul.bf16.gmra.mxu0 %v4352
        %v4755 = vpop.f32.mrf.mxu0
        %v4756 = vadd.f32 %v4667, %v4755
        %v4757 = vpop.f32.mrf.mxu0
        %v4758 = vadd.f32 %v4669, %v4757
        %4759 = vmatmul.bf16.gmra.mxu0 %v4356
        %v4760 = vpop.f32.mrf.mxu0
        %v4761 = vadd.f32 %v4672, %v4760
        %v4762 = vpop.f32.mrf.mxu0
        %v4763 = vadd.f32 %v4674, %v4762
        %4764 = vmatmul.bf16.gmra.mxu0 %v4360
        %v4765 = vpop.f32.mrf.mxu0
        %v4766 = vadd.f32 %v4677, %v4765
        %v4767 = vpop.f32.mrf.mxu0
        %v4768 = vadd.f32 %v4679, %v4767
        %4769 = vmatmul.bf16.gmra.mxu0 %v4364
        %v4770 = vpop.f32.mrf.mxu0
        %v4771 = vadd.f32 %v4682, %v4770
        %v4772 = vpop.f32.mrf.mxu0
        %v4773 = vadd.f32 %v4684, %v4772
        %4774 = vmatmul.bf16.gmra.mxu0 %v4368
        %v4775 = vpop.f32.mrf.mxu0
        %v4776 = vadd.f32 %v4687, %v4775
        %v4777 = vpop.f32.mrf.mxu0
        %v4778 = vadd.f32 %v4689, %v4777
        %4779 = vmatmul.bf16.gmra.mxu0 %v4372
        %v4780 = vpop.f32.mrf.mxu0
        %v4781 = vadd.f32 %v4692, %v4780
        %v4782 = vpop.f32.mrf.mxu0
        %v4783 = vadd.f32 %v4694, %v4782
        %4784 = vmatmul.bf16.gmra.mxu0 %v4376
        %v4785 = vpop.f32.mrf.mxu0
        %v4786 = vadd.f32 %v4697, %v4785
        %v4787 = vpop.f32.mrf.mxu0
        %v4788 = vadd.f32 %v4699, %v4787
        %4789 = vmatmul.bf16.gmra.mxu0 %v4380
        %v4790 = vpop.f32.mrf.mxu0
        %v4791 = vadd.f32 %v4702, %v4790
        %v4792 = vpop.f32.mrf.mxu0
        %v4793 = vadd.f32 %v4704, %v4792
        %4794 = vmatmul.bf16.gmra.mxu0 %v4384
        %v4795 = vpop.f32.mrf.mxu0
        %v4796 = vadd.f32 %v4707, %v4795
        %v4797 = vpop.f32.mrf.mxu0
        %v4798 = vadd.f32 %v4709, %v4797
        %4799 = vmatmul.bf16.gmra.mxu0 %v4388
        %v4800 = vpop.f32.mrf.mxu0
        %v4801 = vadd.f32 %v4712, %v4800
        %v4802 = vpop.f32.mrf.mxu0
        %v4803 = vadd.f32 %v4714, %v4802
        %4804 = vmatmul.bf16.gmra.mxu0 %v4392
        %v4805 = vpop.f32.mrf.mxu0
        %v4806 = vadd.f32 %v4717, %v4805
        %v4807 = vpop.f32.mrf.mxu0
        %v4808 = vadd.f32 %v4719, %v4807
        %4809 = vmatmul.bf16.gmra.mxu0 %v4396
        %v4810 = vpop.f32.mrf.mxu0
        %v4811 = vadd.f32 %v4722, %v4810
        %v4812 = vpop.f32.mrf.mxu0
        %v4813 = vadd.f32 %v4724, %v4812
        %4814 = vmatmul.bf16.gmra.mxu0 %v4400
        %v4815 = vpop.f32.mrf.mxu0
        %v4816 = vadd.f32 %v4727, %v4815
        %v4817 = vpop.f32.mrf.mxu0
        %v4818 = vadd.f32 %v4729, %v4817
        %4819 = vmatmul.bf16.gmra.mxu0 %v4404
        %v4820 = vpop.f32.mrf.mxu0
        %v4821 = vadd.f32 %v4732, %v4820
        %v4822 = vpop.f32.mrf.mxu0
        %v4823 = vadd.f32 %v4734, %v4822
        %4824 = vdwg.mxu0
        %v4825 = vmax.f32 %v4746, 0.0
        %v4826 = vmax.f32 %v4748, 0.0
        %v4827 = vmax.f32 %v4751, 0.0
        %v4828 = vmax.f32 %v4753, 0.0
        %v4829 = vmax.f32 %v4756, 0.0
        %v4830 = vmax.f32 %v4758, 0.0
        %v4831 = vmax.f32 %v4761, 0.0
        %v4832 = vmax.f32 %v4763, 0.0
        %v4833 = vmax.f32 %v4766, 0.0
        %v4834 = vmax.f32 %v4768, 0.0
        %v4835 = vmax.f32 %v4771, 0.0
        %v4836 = vmax.f32 %v4773, 0.0
        %v4837 = vmax.f32 %v4776, 0.0
        %v4838 = vmax.f32 %v4778, 0.0
        %v4839 = vmax.f32 %v4781, 0.0
        %v4840 = vmax.f32 %v4783, 0.0
        %v4841 = vmax.f32 %v4786, 0.0
        %v4842 = vmax.f32 %v4788, 0.0
        %v4843 = vmax.f32 %v4791, 0.0
        %v4844 = vmax.f32 %v4793, 0.0
        %v4845 = vmax.f32 %v4796, 0.0
        %v4846 = vmax.f32 %v4798, 0.0
        %v4847 = vmax.f32 %v4801, 0.0
        %v4848 = vmax.f32 %v4803, 0.0
        %v4849 = vmax.f32 %v4806, 0.0
        %v4850 = vmax.f32 %v4808, 0.0
        %v4851 = vmax.f32 %v4811, 0.0
        %v4852 = vmax.f32 %v4813, 0.0
        %v4853 = vmax.f32 %v4816, 0.0
        %v4854 = vmax.f32 %v4818, 0.0
        %v4855 = vmax.f32 %v4821, 0.0
        %v4856 = vmax.f32 %v4823, 0.0
        %v4857 = vpack.c.bf16 %v4826, %v4825
        %v4858 = vpack.c.bf16 %v4828, %v4827
        %v4859 = vpack.c.bf16 %v4830, %v4829
        %v4860 = vpack.c.bf16 %v4832, %v4831
        %v4861 = vpack.c.bf16 %v4834, %v4833
        %v4862 = vpack.c.bf16 %v4836, %v4835
        %v4863 = vpack.c.bf16 %v4838, %v4837
        %v4864 = vpack.c.bf16 %v4840, %v4839
        %v4865 = vpack.c.bf16 %v4842, %v4841
        %v4866 = vpack.c.bf16 %v4844, %v4843
        %v4867 = vpack.c.bf16 %v4846, %v4845
        %v4868 = vpack.c.bf16 %v4848, %v4847
        %v4869 = vpack.c.bf16 %v4850, %v4849
        %v4870 = vpack.c.bf16 %v4852, %v4851
        %v4871 = vpack.c.bf16 %v4854, %v4853
        %v4872 = vpack.c.bf16 %v4856, %v4855
        %v4873 = vld [vmem:[%s5] sm:$0xff]
        %v4874 = vld [vmem:[%s5 + $0x8] sm:$0xff]
        %v4875 = vld [vmem:[%s5 + $0x10] sm:$0xff]
        %v4876 = vld [vmem:[%s5 + $0x18] sm:$0xff]
        %v4877 = vld [vmem:[%s6] sm:$0xff]
        %v4878 = vld [vmem:[%s6 + $0x8] sm:$0xff]
        %v4879 = vld [vmem:[%s6 + $0x10] sm:$0xff]
        %v4880 = vld [vmem:[%s6 + $0x18] sm:$0xff]
        %4882 = vset.pattern.permute.xlu0 0
        %4883 = vperm.xlu0 %4882, %v4877
        %v4884 = vpop.permute.xlu0 %4883
        %4887 = vset.pattern.permute.xlu0 0
        %4888 = vperm.xlu0 %4887, %v4878
        %v4889 = vpop.permute.xlu0 %4888
        %4892 = vset.pattern.permute.xlu0 0
        %4893 = vperm.xlu0 %4892, %v4879
        %v4894 = vpop.permute.xlu0 %4893
        %4897 = vset.pattern.permute.xlu0 0
        %4898 = vperm.xlu0 %4897, %v4880
        %v4899 = vpop.permute.xlu0 %4898
        %v4905 = vunpack.c.l.b16 %v4873
        %v4906 = vunpack.c.h.b16 %v4873
        %v4907 = vunpack.c.l.b16 %v4874
        %v4908 = vunpack.c.h.b16 %v4874
        %v4909 = vunpack.c.l.b16 %v4875
        %v4910 = vunpack.c.h.b16 %v4875
        %v4911 = vunpack.c.l.b16 %v4876
        %v4912 = vunpack.c.h.b16 %v4876
        %v4913 = vpack.c.b16 %v4907, %v4905
        %v4914 = vpack.c.b16 %v4908, %v4906
        %v4915 = vpack.c.b16 %v4911, %v4909
        %v4916 = vpack.c.b16 %v4912, %v4910
        %4921 = vmatpush.bf16.msra.mxu0 %v4864
        %4922 = vmatpush.bf16.msra.mxu0 %v4863
        %4923 = vmatpush.bf16.msra.mxu0 %v4862
        %4924 = vmatpush.bf16.msra.mxu0 %v4861
        %4925 = vmatpush.bf16.msra.mxu0 %v4860
        %4926 = vmatpush.bf16.msra.mxu0 %v4859
        %4927 = vmatpush.bf16.msra.mxu0 %v4858
        %4928 = vmatpush.bf16.msra.mxu0 %v4857
        %4929 = vmatmul.bf16.gmra.mxu0 %v4913
        %v4930 = vpop.f32.mrf.mxu0
        %v4931 = vadd.f32 %v4884, %v4930
        %v4932 = vpop.f32.mrf.mxu0
        %v4933 = vadd.f32 %v4889, %v4932
        %4934 = vmatmul.bf16.gmra.mxu0 %v4915
        %v4935 = vpop.f32.mrf.mxu0
        %v4936 = vadd.f32 %v4894, %v4935
        %v4937 = vpop.f32.mrf.mxu0
        %v4938 = vadd.f32 %v4899, %v4937
        %4939 = vdwg.mxu0
        %4940 = vmatpush.bf16.msra.mxu0 %v4872
        %4941 = vmatpush.bf16.msra.mxu0 %v4871
        %4942 = vmatpush.bf16.msra.mxu0 %v4870
        %4943 = vmatpush.bf16.msra.mxu0 %v4869
        %4944 = vmatpush.bf16.msra.mxu0 %v4868
        %4945 = vmatpush.bf16.msra.mxu0 %v4867
        %4946 = vmatpush.bf16.msra.mxu0 %v4866
        %4947 = vmatpush.bf16.msra.mxu0 %v4865
        %4948 = vmatmul.bf16.gmra.mxu0 %v4914
        %v4949 = vpop.f32.mrf.mxu0
        %v4950 = vadd.f32 %v4931, %v4949
        %v4951 = vpop.f32.mrf.mxu0
        %v4952 = vadd.f32 %v4933, %v4951
        %4953 = vmatmul.bf16.gmra.mxu0 %v4916
        %v4954 = vpop.f32.mrf.mxu0
        %v4955 = vadd.f32 %v4936, %v4954
        %v4956 = vpop.f32.mrf.mxu0
        %v4957 = vadd.f32 %v4938, %v4956
        %4958 = vdwg.mxu0
        %v4959 = vmax.f32 %v4950, 0.0
        %v4960 = vmax.f32 %v4952, 0.0
        %v4961 = vmax.f32 %v4955, 0.0
        %v4962 = vmax.f32 %v4957, 0.0
        %4963 = vst [vmem:[%s332] sm:$0xff] %v4959
        %4964 = vst [vmem:[%s332 + $0x8] sm:$0xff] %v4960
        %4965 = vst [vmem:[%s332 + $0x10] sm:$0xff] %v4961
        %4966 = vst [vmem:[%s332 + $0x18] sm:$0xff] %v4962
        %s4967 = sand.u32 %s201, 1
        %s4968 = scalar_lea.sflag [#allocation4], %s4967
        %s4969 = sand.u32 %s201, 1
        %s4970 = smul.addr %s4969, 32
        %s4971 = scalar_lea.vmem [#allocation7], %s4970
        // Predicated region
        $region57: #{tpu_custom_call.1} parent=47 // pred_check
          %p4972 = pneg %p211
        $region58: #{tpu_custom_call.1} parent=47 // pred_check_branch
          %4974 = sbr.rel (%p4972) target = $region60
        $region59: #{tpu_custom_call.1} parent=47 // pred_region
          %4976 = vsyncadd %s4968, 0
          %s4977 = smul.addr %s29, 4
          %s4978 = sadd.s32 %s30, %s4977
          %s4979 = smul.addr %s4978, 8
          %s4980 = scalar_lea.hbm %s7, %s4979
          %s4981 = sshll.u32 %s4971, 4
          %s4982 = int_to_ptr.vmem [resolvable:$true] %s4981
          %s4983 = sshll.u32 %s4980, 4
          %s4984 = int_to_ptr.hbm [resolvable:$true] %s4983
          %4989 = dma.vmem_to_hbm [thread:$0]  %s4982, 512, %s4984, %s4968, 128, 128, 8
        $region60: #{tpu_custom_call.1} parent=47 // pred_fallthru
          _
      $region48: #{tpu_custom_call.1} parent=5 // pred_fallthru
        _
      %p4990 = scmp.le.s32.totalorder 2, %s20
      // Predicated region
      $region61: #{tpu_custom_call.1} parent=5 // pred_check
        %p4991 = pneg %p4990
      $region62: #{tpu_custom_call.1} parent=5 // pred_check_branch
        %4993 = sbr.rel (%p4991) target = $region64
      $region63: #{tpu_custom_call.1} parent=5 // pred_region
        %s4994 = ssub.s32 %s20, 2
        // Predicated region
        $region65: #{tpu_custom_call.1} parent=63 // pred_check
          %p4995 = pneg %p217
        $region66: #{tpu_custom_call.1} parent=63 // pred_check_branch
          %4997 = sbr.rel (%p4995) target = $region68
        $region67: #{tpu_custom_call.1} parent=63 // pred_region
          %s4998 = sand.u32 %s202, 1
          %s4999 = scalar_lea.sflag [#allocation4], %s4998
          %s5000 = sand.u32 %s202, 1
          %s5001 = smul.addr %s5000, 32
          %s5002 = scalar_lea.vmem [#allocation7], %s5001
          %5004 = dma.done %s4999, 512
        $region68: #{tpu_custom_call.1} parent=63 // pred_fallthru
          _
      $region64: #{tpu_custom_call.1} parent=5 // pred_fallthru
        _
    $region6: #{tpu_custom_call.1} parent=1 // loop_footer
      %s24 = sadd.s32 1, %s20
    $region7: #{tpu_custom_call.1} parent=1 // loop_footer_branch
      %19 = sbr.rel target = $region3
    $region8: #{tpu_custom_call.1} parent=1 // loop_exit
      _
    %5005 = vsyncpa [#allocation3], 1
    %s5006 = scalar_lea.sflag [#allocation3], 1
    %5007 = vsyncpa %s5006, 1
    %5008 = vsyncpa [#allocation6], 1
    %5009 = vsyncpa [#allocation4], 1
    %s5010 = scalar_lea.sflag [#allocation4], 1
    %5011 = vsyncpa %s5010, 1

</llo_original>
